<compile_context>
chip_gen: v7x
topology: tpu7x:2x2x1
jax: 0.10.0
libtpu: 0.0.40
codegen_flags: <defaults>
</compile_context>

<pallas_src>
import jax
import jax.numpy as jnp
import numpy as np
from jax.experimental import pallas as pl
from jax.experimental.pallas import tpu as pltpu

# ----------------------------- model config ---------------------------------
FEATURE_DIM = 128
HIDDEN = 1024          # fixed by PPONetwork (__init__ hard-codes 1024)
NET_ARCH = 128         # net_arch = [128] for both pi and vf branches
ACTION_DIM = 8
BATCH = 8
OUT_PAD = 128          # lane-dense fused head output width (cols 0:8 logits, 8 value)


# ------------------------------ Pallas kernel --------------------------------
def _ppo_kernel(x_ref, w1_ref, b1_ref,
                wa_ref, wb_ref,
                sa_ref, ba_ref, sb_ref, bb_ref,
                wh1_ref, bh1_ref, wh2_ref, bh2_ref,
                out_ref, h_ref):
    relu = lambda z: jnp.maximum(z, 0.0)
    i = pl.program_id(0)

    def lin(h_f32, w_ref, b_ref):
        # bf16 weights / bf16 activations into MXU, f32 accumulation, f32 bias.
        return jnp.dot(h_f32.astype(jnp.bfloat16), w_ref[...],
                       preferred_element_type=jnp.float32) + b_ref[...]

    def lin_q8(h_f32, w_ref, scale, bias):
        # int8 weight -> bf16 on the VPU (exact: |q| <= 127), MXU bf16xbf16->f32,
        # per-output-channel scale + bias folded into the f32 epilogue.
        acc = jnp.dot(h_f32.astype(jnp.bfloat16),
                      w_ref[...].astype(jnp.bfloat16),
                      preferred_element_type=jnp.float32)
        return acc * scale + bias

    # Grid step 0: input projection (tiny bf16 weights, VMEM-resident).
    @pl.when(i == 0)
    def _():
        h_ref[...] = relu(lin(x_ref[...], w1_ref, b1_ref))

    # One residual block per grid step (int8 weights streamed / double-buffered;
    # per-block scales/biases are resident, selected by dynamic sublane slice).
    h = h_ref[...]
    sa = sa_ref[pl.ds(i, 1), :]
    ba = ba_ref[pl.ds(i, 1), :]
    sb = sb_ref[pl.ds(i, 1), :]
    bb = bb_ref[pl.ds(i, 1), :]
    t = relu(lin_q8(h, wa_ref, sa, ba))
    h = relu(lin_q8(t, wb_ref, sb, bb) + h)
    h_ref[...] = h

    # Last grid step: fused policy/value heads, single lane-dense output.
    # NOTE: out_ref has a constant index_map, so the block stays VMEM-resident
    # across the grid and is written back exactly once after the last step.
    @pl.when(i == pl.num_programs(0) - 1)
    def _():
        p = relu(lin(h, wh1_ref, bh1_ref))          # (B, 256): [pi_hidden | vf_hidden]
        out_ref[...] = lin(p, wh2_ref, bh2_ref)     # (B, 128): cols 0:8 logits, col 8 value


def ppo_forward(x, params):
    """Returns (logits [B, ACTION_DIM], value [B, 1])."""
    (w1, b1, wa, wb, sa, ba, sb, bb, wh1, bh1, wh2, bh2) = params
    B = x.shape[0]
    Bp = max(8, ((B + 7) // 8) * 8)       # batch on sublanes
    if Bp != B:
        x = jnp.pad(x, ((0, Bp - B), (0, 0)))
    n_blocks = wa.shape[0]                # 2 residual blocks

    def resident(arr):
        return pl.BlockSpec(arr.shape, lambda i, _n=arr.ndim: (0,) * _n)

    def streamed(arr):
        return pl.BlockSpec((None,) + arr.shape[1:],
                            lambda i, _n=arr.ndim: (i,) + (0,) * (_n - 1))

    flops = 2 * Bp * (FEATURE_DIM * HIDDEN + 4 * HIDDEN * HIDDEN
                      + HIDDEN * 2 * NET_ARCH + 2 * NET_ARCH * OUT_PAD)
    bytes_accessed = (sum(int(np.prod(p.shape)) * p.dtype.itemsize for p in params)
                      + x.size * x.dtype.itemsize + Bp * OUT_PAD * 4)

    out = pl.pallas_call(
        _ppo_kernel,
        grid=(n_blocks,),
        in_specs=[resident(x), resident(w1), resident(b1),
                  streamed(wa), streamed(wb),
                  resident(sa), resident(ba), resident(sb), resident(bb),
                  resident(wh1), resident(bh1), resident(wh2), resident(bh2)],
        out_specs=pl.BlockSpec((Bp, OUT_PAD), lambda i: (0, 0)),
        out_shape=jax.ShapeDtypeStruct((Bp, OUT_PAD), jnp.float32),
        scratch_shapes=[pltpu.VMEM((Bp, HIDDEN), jnp.float32)],
        compiler_params=pltpu.CompilerParams(
            dimension_semantics=("arbitrary",),
            vmem_limit_bytes=32 << 20),
        cost_estimate=pl.CostEstimate(flops=flops, transcendentals=0,
                                      bytes_accessed=bytes_accessed),
    )(x, w1, b1, wa, wb, sa, ba, sb, bb, wh1, bh1, wh2, bh2)

    return out[:B, :ACTION_DIM], out[:B, ACTION_DIM:ACTION_DIM + 1]


# --------------------------- deterministic init -------------------------------
def _orthogonal(key, out_dim, in_dim, gain):
    """Orthogonal init matching torch.nn.init.orthogonal_ semantics (shape (out,in))."""
    rows, cols = out_dim, in_dim
    a = jax.random.normal(key, (max(rows, cols), min(rows, cols)), dtype=jnp.float32)
    q, r = jnp.linalg.qr(a)
    q = q * jnp.sign(jnp.diagonal(r))
    if rows < cols:
        q = q.T
    return (gain * q[:rows, :cols]).astype(jnp.float32)


def make_weights(key):
    """Per-layer f32 weights in (in, out) layout, module init semantics."""
    keys = jax.random.split(key, 9)
    sqrt2 = float(np.sqrt(2.0))

    def linear(k, in_dim, out_dim, gain):
        w = _orthogonal(k, out_dim, in_dim, gain).T      # (in, out) f32
        b = jnp.zeros((1, out_dim), jnp.float32)
        return w, b

    layers = {}
    layers["s1"] = linear(keys[0], FEATURE_DIM, HIDDEN, sqrt2)   # shared_linear
    layers["s2"] = linear(keys[1], HIDDEN, HIDDEN, sqrt2)        # shared_linear2
    layers["s3"] = linear(keys[2], HIDDEN, HIDDEN, sqrt2)        # shared_linear3
    layers["s4"] = linear(keys[3], HIDDEN, HIDDEN, sqrt2)        # shared_linear4
    layers["s5"] = linear(keys[4], HIDDEN, HIDDEN, sqrt2)        # shared_linear5
    layers["pi1"] = linear(keys[5], HIDDEN, NET_ARCH, 0.01)      # policy hidden
    layers["pi2"] = linear(keys[6], NET_ARCH, ACTION_DIM, 0.01)  # policy logits
    layers["vf1"] = linear(keys[7], HIDDEN, NET_ARCH, 1.0)       # value hidden
    layers["vf2"] = linear(keys[8], NET_ARCH, 1, 1.0)            # value out
    return layers


def _quantize_col(w_f32):
    """Symmetric per-output-channel int8 weight-only quantization of (in, out) w."""
    amax = jnp.max(jnp.abs(w_f32), axis=0, keepdims=True)        # (1, out)
    scale = jnp.where(amax > 0.0, amax / 127.0, 1.0).astype(jnp.float32)
    q = jnp.clip(jnp.round(w_f32 / scale), -127.0, 127.0).astype(jnp.int8)
    return q, scale


def pack_params(layers):
    """Pack per-layer f32 weights into the kernel's stacked / fused / quantized layout."""
    w1 = layers["s1"][0].astype(jnp.bfloat16)                    # (128, 1024) bf16
    b1 = layers["s1"][1]                                         # (1, 1024) f32

    # Trunk: int8 weights + per-output-channel f32 scales, stacked per residual block.
    qa2, sca2 = _quantize_col(layers["s2"][0])
    qa4, sca4 = _quantize_col(layers["s4"][0])
    qb3, scb3 = _quantize_col(layers["s3"][0])
    qb5, scb5 = _quantize_col(layers["s5"][0])
    wa = jnp.stack([qa2, qa4])                                   # (2, 1024, 1024) int8
    wb = jnp.stack([qb3, qb5])                                   # (2, 1024, 1024) int8
    sa = jnp.stack([sca2[0], sca4[0]])                           # (2, 1024) f32
    sb = jnp.stack([scb3[0], scb5[0]])                           # (2, 1024) f32
    ba = jnp.stack([layers["s2"][1][0], layers["s4"][1][0]])     # (2, 1024) f32
    bb = jnp.stack([layers["s3"][1][0], layers["s5"][1][0]])     # (2, 1024) f32

    # Fused head hidden layer: [policy | value] -> (1024, 256) bf16
    wh1 = jnp.concatenate([layers["pi1"][0], layers["vf1"][0]], axis=1).astype(jnp.bfloat16)
    bh1 = jnp.concatenate([layers["pi1"][1], layers["vf1"][1]], axis=1)

    # Fused block-structured output layer -> (256, 128) bf16:
    #   cols 0:ACTION_DIM <- policy logits (from hidden lanes 0:128)
    #   col  ACTION_DIM   <- value          (from hidden lanes 128:256)
    wh2 = jnp.zeros((2 * NET_ARCH, OUT_PAD), jnp.float32)
    wh2 = wh2.at[:NET_ARCH, :ACTION_DIM].set(layers["pi2"][0])
    wh2 = wh2.at[NET_ARCH:, ACTION_DIM].set(layers["vf2"][0][:, 0])
    wh2 = wh2.astype(jnp.bfloat16)
    bh2 = jnp.zeros((1, OUT_PAD), jnp.float32)
    bh2 = bh2.at[0, :ACTION_DIM].set(layers["pi2"][1][0])
    bh2 = bh2.at[0, ACTION_DIM].set(layers["vf2"][1][0, 0])

    return (w1, b1, wa, wb, sa, ba, sb, bb, wh1, bh1, wh2, bh2)


# ------------------------------- reference -----------------------------------
def ppo_forward_ref(x, layers):
    """Unfused reference mirroring PPONetwork.forward with matched numerics
    (bf16 activations/weights, int8 weight-only quantized trunk, f32 accumulation)."""
    relu = lambda z: jnp.maximum(z, 0.0)

    def lin_bf16(h, layer):
        w, b = layer
        return jnp.dot(h.astype(jnp.bfloat16), w.astype(jnp.bfloat16),
                       preferred_element_type=jnp.float32) + b

    def lin_q8(h, layer):
        w, b = layer
        q, s = _quantize_col(w)
        acc = jnp.dot(h.astype(jnp.bfloat16), q.astype(jnp.bfloat16),
                      preferred_element_type=jnp.float32)
        return acc * s + b

    h1 = relu(lin_bf16(x, layers["s1"]))
    h2 = relu(lin_q8(relu(lin_q8(h1, layers["s2"])), layers["s3"]) + h1)
    h3 = relu(lin_q8(relu(lin_q8(h2, layers["s4"])), layers["s5"]) + h2)
    logits = lin_bf16(relu(lin_bf16(h3, layers["pi1"])), layers["pi2"])
    v = lin_bf16(relu(lin_bf16(h3, layers["vf1"])), layers["vf2"])
    return logits, v


# --------------------------------- main ---------------------------------------
if __name__ == "__main__":
    key = jax.random.PRNGKey(0)
    k_x, k_p = jax.random.split(key)

    x = jax.random.normal(k_x, (BATCH, FEATURE_DIM), dtype=jnp.float32)
    layers = make_weights(k_p)
    params = pack_params(layers)

    # TODO(synk): MaskableCategoricalDistribution (step/neglogp/entropy) is not
    # part of forward() and is left to the host-side JAX wrapper.
    logits, v = jax.block_until_ready(ppo_forward(x, params))
    logits_ref, v_ref = ppo_forward_ref(x, layers)

    assert logits.shape == (BATCH, ACTION_DIM)
    assert v.shape == (BATCH, 1)
    assert jnp.allclose(logits, logits_ref, atol=1e-3, rtol=1e-3), \
        float(jnp.max(jnp.abs(logits - logits_ref)))
    assert jnp.allclose(v, v_ref, atol=1e-3, rtol=1e-3), \
        float(jnp.max(jnp.abs(v - v_ref)))

    print("KERNEL_OK")
</pallas_src>

<mosaic_0001>
module attributes {stable_mosaic.version = 11 : i64} {
  func.func @_ppo_kernel(%arg0: i32, %arg1: memref<8x128xf32, #tpu.memory_space<vmem>>, %arg2: memref<128x1024xbf16, #tpu.memory_space<vmem>>, %arg3: memref<1x1024xf32, #tpu.memory_space<vmem>>, %arg4: memref<1x1024x1024xi8, #tpu.memory_space<vmem>>, %arg5: memref<1x1024x1024xi8, #tpu.memory_space<vmem>>, %arg6: memref<2x1024xf32, #tpu.memory_space<vmem>>, %arg7: memref<2x1024xf32, #tpu.memory_space<vmem>>, %arg8: memref<2x1024xf32, #tpu.memory_space<vmem>>, %arg9: memref<2x1024xf32, #tpu.memory_space<vmem>>, %arg10: memref<1024x256xbf16, #tpu.memory_space<vmem>>, %arg11: memref<1x256xf32, #tpu.memory_space<vmem>>, %arg12: memref<256x128xbf16, #tpu.memory_space<vmem>>, %arg13: memref<1x128xf32, #tpu.memory_space<vmem>>, %arg14: memref<8x128xf32, #tpu.memory_space<vmem>>, %arg15: memref<8x1024xf32, #tpu.memory_space<vmem>>) attributes {dimension_semantics = [#tpu.dimension_semantics<arbitrary>], iteration_bounds = array<i64: 2>, scalar_prefetch = 0 : i64, scratch_operands = 1 : i64, tpu.core_type = #tpu.core_type<tc>, window_params = [{pipeline_mode = #tpu.pipeline_mode<synchronous>, transform_indices = @transform_0, window_bounds = array<i64: 8, 128>}, {pipeline_mode = #tpu.pipeline_mode<synchronous>, transform_indices = @transform_1, window_bounds = array<i64: 128, 1024>}, {pipeline_mode = #tpu.pipeline_mode<synchronous>, transform_indices = @transform_2, window_bounds = array<i64: 1, 1024>}, {transform_indices = @transform_3, window_bounds = array<i64: 1, 1024, 1024>}, {transform_indices = @transform_4, window_bounds = array<i64: 1, 1024, 1024>}, {pipeline_mode = #tpu.pipeline_mode<synchronous>, transform_indices = @transform_5, window_bounds = array<i64: 2, 1024>}, {pipeline_mode = #tpu.pipeline_mode<synchronous>, transform_indices = @transform_6, window_bounds = array<i64: 2, 1024>}, {pipeline_mode = #tpu.pipeline_mode<synchronous>, transform_indices = @transform_7, window_bounds = array<i64: 2, 1024>}, {pipeline_mode = #tpu.pipeline_mode<synchronous>, transform_indices = @transform_8, window_bounds = array<i64: 2, 1024>}, {pipeline_mode = #tpu.pipeline_mode<synchronous>, transform_indices = @transform_9, window_bounds = array<i64: 1024, 256>}, {pipeline_mode = #tpu.pipeline_mode<synchronous>, transform_indices = @transform_10, window_bounds = array<i64: 1, 256>}, {pipeline_mode = #tpu.pipeline_mode<synchronous>, transform_indices = @transform_11, window_bounds = array<i64: 256, 128>}, {pipeline_mode = #tpu.pipeline_mode<synchronous>, transform_indices = @transform_12, window_bounds = array<i64: 1, 128>}, {pipeline_mode = #tpu.pipeline_mode<synchronous>, transform_indices = @transform_13, window_bounds = array<i64: 8, 128>}]} {
    %c0_i32 = arith.constant 0 : i32
    %0 = arith.cmpi eq, %arg0, %c0_i32 : i32
    %1 = arith.extui %0 : i1 to i32
    %c0_i32_0 = arith.constant 0 : i32
    %2 = arith.cmpi ne, %1, %c0_i32_0 : i32
    scf.if %2 {
      %c0_18 = arith.constant 0 : index
      %c0_19 = arith.constant 0 : index
      %39 = vector.load %arg1[%c0_18, %c0_19] : memref<8x128xf32, #tpu.memory_space<vmem>>, vector<8x128xf32>
      %40 = arith.truncf %39 : vector<8x128xf32> to vector<8x128xbf16>
      %c0_20 = arith.constant 0 : index
      %c0_21 = arith.constant 0 : index
      %41 = vector.load %arg2[%c0_20, %c0_21] : memref<128x1024xbf16, #tpu.memory_space<vmem>>, vector<128x1024xbf16>
      %cst_22 = arith.constant dense<0.000000e+00> : vector<8x1024xf32>
      %42 = tpu.matmul %40, %41, %cst_22 {dimension_numbers = #tpu.dot_dimension_numbers<[1], [0], [0], [1], [0, 0, 1, 1], [], []>} : vector<8x128xbf16>, vector<128x1024xbf16>, vector<8x1024xf32> -> vector<8x1024xf32>
      %c0_23 = arith.constant 0 : index
      %c0_24 = arith.constant 0 : index
      %43 = vector.load %arg3[%c0_23, %c0_24] : memref<1x1024xf32, #tpu.memory_space<vmem>>, vector<1x1024xf32>
      %44 = vector.broadcast %43 : vector<1x1024xf32> to vector<8x1024xf32>
      %45 = arith.addf %42, %44 : vector<8x1024xf32>
      %cst_25 = arith.constant 0.000000e+00 : f32
      %46 = vector.broadcast %cst_25 : f32 to vector<8x1024xf32>
      %47 = arith.maximumf %45, %46 : vector<8x1024xf32>
      %c0_26 = arith.constant 0 : index
      %c0_27 = arith.constant 0 : index
      %48 = vector.load %arg15[%c0_26, %c0_27] : memref<8x1024xf32, #tpu.memory_space<vmem>>, vector<8x1024xf32>
      tpu.vector_store %arg15[%c0_26, %c0_27], %47 {strides = array<i32>} : memref<8x1024xf32, #tpu.memory_space<vmem>>, vector<8x1024xf32>,
    } else {
    }
    %c0 = arith.constant 0 : index
    %c0_1 = arith.constant 0 : index
    %3 = vector.load %arg15[%c0, %c0_1] : memref<8x1024xf32, #tpu.memory_space<vmem>>, vector<8x1024xf32>
    %4 = arith.index_cast %arg0 : i32 to index
    %c0_2 = arith.constant 0 : index
    %5 = vector.load %arg6[%4, %c0_2] : memref<2x1024xf32, #tpu.memory_space<vmem>>, vector<1x1024xf32>
    %6 = arith.index_cast %arg0 : i32 to index
    %c0_3 = arith.constant 0 : index
    %7 = vector.load %arg7[%6, %c0_3] : memref<2x1024xf32, #tpu.memory_space<vmem>>, vector<1x1024xf32>
    %8 = arith.index_cast %arg0 : i32 to index
    %c0_4 = arith.constant 0 : index
    %9 = vector.load %arg8[%8, %c0_4] : memref<2x1024xf32, #tpu.memory_space<vmem>>, vector<1x1024xf32>
    %10 = arith.index_cast %arg0 : i32 to index
    %c0_5 = arith.constant 0 : index
    %11 = vector.load %arg9[%10, %c0_5] : memref<2x1024xf32, #tpu.memory_space<vmem>>, vector<1x1024xf32>
    %12 = arith.truncf %3 : vector<8x1024xf32> to vector<8x1024xbf16>
    %c0_6 = arith.constant 0 : index
    %c0_7 = arith.constant 0 : index
    %c0_8 = arith.constant 0 : index
    %13 = vector.load %arg4[%c0_6, %c0_7, %c0_8] : memref<1x1024x1024xi8, #tpu.memory_space<vmem>>, vector<1x1024x1024xi8>
    %14 = vector.shape_cast %13 : vector<1x1024x1024xi8> to vector<1024x1024xi8>
    %15 = arith.sitofp %14 : vector<1024x1024xi8> to vector<1024x1024xbf16>
    %cst = arith.constant dense<0.000000e+00> : vector<8x1024xf32>
    %16 = tpu.matmul %12, %15, %cst {dimension_numbers = #tpu.dot_dimension_numbers<[1], [0], [0], [1], [0, 0, 1, 1], [], []>} : vector<8x1024xbf16>, vector<1024x1024xbf16>, vector<8x1024xf32> -> vector<8x1024xf32>
    %17 = vector.broadcast %5 : vector<1x1024xf32> to vector<8x1024xf32>
    %18 = arith.mulf %16, %17 : vector<8x1024xf32>
    %19 = vector.broadcast %7 : vector<1x1024xf32> to vector<8x1024xf32>
    %20 = arith.addf %18, %19 : vector<8x1024xf32>
    %cst_9 = arith.constant 0.000000e+00 : f32
    %21 = vector.broadcast %cst_9 : f32 to vector<8x1024xf32>
    %22 = arith.maximumf %20, %21 : vector<8x1024xf32>
    %23 = arith.truncf %22 : vector<8x1024xf32> to vector<8x1024xbf16>
    %c0_10 = arith.constant 0 : index
    %c0_11 = arith.constant 0 : index
    %c0_12 = arith.constant 0 : index
    %24 = vector.load %arg5[%c0_10, %c0_11, %c0_12] : memref<1x1024x1024xi8, #tpu.memory_space<vmem>>, vector<1x1024x1024xi8>
    %25 = vector.shape_cast %24 : vector<1x1024x1024xi8> to vector<1024x1024xi8>
    %26 = arith.sitofp %25 : vector<1024x1024xi8> to vector<1024x1024xbf16>
    %cst_13 = arith.constant dense<0.000000e+00> : vector<8x1024xf32>
    %27 = tpu.matmul %23, %26, %cst_13 {dimension_numbers = #tpu.dot_dimension_numbers<[1], [0], [0], [1], [0, 0, 1, 1], [], []>} : vector<8x1024xbf16>, vector<1024x1024xbf16>, vector<8x1024xf32> -> vector<8x1024xf32>
    %28 = vector.broadcast %9 : vector<1x1024xf32> to vector<8x1024xf32>
    %29 = arith.mulf %27, %28 : vector<8x1024xf32>
    %30 = vector.broadcast %11 : vector<1x1024xf32> to vector<8x1024xf32>
    %31 = arith.addf %29, %30 : vector<8x1024xf32>
    %32 = arith.addf %31, %3 : vector<8x1024xf32>
    %cst_14 = arith.constant 0.000000e+00 : f32
    %33 = vector.broadcast %cst_14 : f32 to vector<8x1024xf32>
    %34 = arith.maximumf %32, %33 : vector<8x1024xf32>
    %c0_15 = arith.constant 0 : index
    %c0_16 = arith.constant 0 : index
    %35 = vector.load %arg15[%c0_15, %c0_16] : memref<8x1024xf32, #tpu.memory_space<vmem>>, vector<8x1024xf32>
    tpu.vector_store %arg15[%c0_15, %c0_16], %34 {strides = array<i32>} : memref<8x1024xf32, #tpu.memory_space<vmem>>, vector<8x1024xf32>,
    %c1_i32 = arith.constant 1 : i32
    %36 = arith.cmpi eq, %arg0, %c1_i32 : i32
    %37 = arith.extui %36 : i1 to i32
    %c0_i32_17 = arith.constant 0 : i32
    %38 = arith.cmpi ne, %37, %c0_i32_17 : i32
    scf.if %38 {
      %39 = arith.truncf %34 : vector<8x1024xf32> to vector<8x1024xbf16>
      %c0_18 = arith.constant 0 : index
      %c0_19 = arith.constant 0 : index
      %40 = vector.load %arg10[%c0_18, %c0_19] : memref<1024x256xbf16, #tpu.memory_space<vmem>>, vector<1024x256xbf16>
      %cst_20 = arith.constant dense<0.000000e+00> : vector<8x256xf32>
      %41 = tpu.matmul %39, %40, %cst_20 {dimension_numbers = #tpu.dot_dimension_numbers<[1], [0], [0], [1], [0, 0, 1, 1], [], []>} : vector<8x1024xbf16>, vector<1024x256xbf16>, vector<8x256xf32> -> vector<8x256xf32>
      %c0_21 = arith.constant 0 : index
      %c0_22 = arith.constant 0 : index
      %42 = vector.load %arg11[%c0_21, %c0_22] : memref<1x256xf32, #tpu.memory_space<vmem>>, vector<1x256xf32>
      %43 = vector.broadcast %42 : vector<1x256xf32> to vector<8x256xf32>
      %44 = arith.addf %41, %43 : vector<8x256xf32>
      %cst_23 = arith.constant 0.000000e+00 : f32
      %45 = vector.broadcast %cst_23 : f32 to vector<8x256xf32>
      %46 = arith.maximumf %44, %45 : vector<8x256xf32>
      %47 = arith.truncf %46 : vector<8x256xf32> to vector<8x256xbf16>
      %c0_24 = arith.constant 0 : index
      %c0_25 = arith.constant 0 : index
      %48 = vector.load %arg12[%c0_24, %c0_25] : memref<256x128xbf16, #tpu.memory_space<vmem>>, vector<256x128xbf16>
      %cst_26 = arith.constant dense<0.000000e+00> : vector<8x128xf32>
      %49 = tpu.matmul %47, %48, %cst_26 {dimension_numbers = #tpu.dot_dimension_numbers<[1], [0], [0], [1], [0, 0, 1, 1], [], []>} : vector<8x256xbf16>, vector<256x128xbf16>, vector<8x128xf32> -> vector<8x128xf32>
      %c0_27 = arith.constant 0 : index
      %c0_28 = arith.constant 0 : index
      %50 = vector.load %arg13[%c0_27, %c0_28] : memref<1x128xf32, #tpu.memory_space<vmem>>, vector<1x128xf32>
      %51 = vector.broadcast %50 : vector<1x128xf32> to vector<8x128xf32>
      %52 = arith.addf %49, %51 : vector<8x128xf32>
      %c0_29 = arith.constant 0 : index
      %c0_30 = arith.constant 0 : index
      %53 = vector.load %arg14[%c0_29, %c0_30] : memref<8x128xf32, #tpu.memory_space<vmem>>, vector<8x128xf32>
      tpu.vector_store %arg14[%c0_29, %c0_30], %52 {strides = array<i32>} : memref<8x128xf32, #tpu.memory_space<vmem>>, vector<8x128xf32>,
    } else {
    }
    return
  }
  func.func @transform_0(%arg0: i32) -> (i32, i32) {
    %c0_i32 = arith.constant 0 : i32
    %c0_i32_0 = arith.constant 0 : i32
    %c0_i32_1 = arith.constant 0 : i32
    return %c0_i32, %c0_i32_0 : i32, i32
  }
  func.func @transform_1(%arg0: i32) -> (i32, i32) {
    %c0_i32 = arith.constant 0 : i32
    %c0_i32_0 = arith.constant 0 : i32
    %c0_i32_1 = arith.constant 0 : i32
    return %c0_i32, %c0_i32_0 : i32, i32
  }
  func.func @transform_2(%arg0: i32) -> (i32, i32) {
    %c0_i32 = arith.constant 0 : i32
    %c0_i32_0 = arith.constant 0 : i32
    %c0_i32_1 = arith.constant 0 : i32
    return %c0_i32, %c0_i32_0 : i32, i32
  }
  func.func @transform_3(%arg0: i32) -> (i32, i32, i32) {
    %c0_i32 = arith.constant 0 : i32
    %c0_i32_0 = arith.constant 0 : i32
    %c0_i32_1 = arith.constant 0 : i32
    return %arg0, %c0_i32, %c0_i32_0 : i32, i32, i32
  }
  func.func @transform_4(%arg0: i32) -> (i32, i32, i32) {
    %c0_i32 = arith.constant 0 : i32
    %c0_i32_0 = arith.constant 0 : i32
    %c0_i32_1 = arith.constant 0 : i32
    return %arg0, %c0_i32, %c0_i32_0 : i32, i32, i32
  }
  func.func @transform_5(%arg0: i32) -> (i32, i32) {
    %c0_i32 = arith.constant 0 : i32
    %c0_i32_0 = arith.constant 0 : i32
    %c0_i32_1 = arith.constant 0 : i32
    return %c0_i32, %c0_i32_0 : i32, i32
  }
  func.func @transform_6(%arg0: i32) -> (i32, i32) {
    %c0_i32 = arith.constant 0 : i32
    %c0_i32_0 = arith.constant 0 : i32
    %c0_i32_1 = arith.constant 0 : i32
    return %c0_i32, %c0_i32_0 : i32, i32
  }
  func.func @transform_7(%arg0: i32) -> (i32, i32) {
    %c0_i32 = arith.constant 0 : i32
    %c0_i32_0 = arith.constant 0 : i32
    %c0_i32_1 = arith.constant 0 : i32
    return %c0_i32, %c0_i32_0 : i32, i32
  }
  func.func @transform_8(%arg0: i32) -> (i32, i32) {
    %c0_i32 = arith.constant 0 : i32
    %c0_i32_0 = arith.constant 0 : i32
    %c0_i32_1 = arith.constant 0 : i32
    return %c0_i32, %c0_i32_0 : i32, i32
  }
  func.func @transform_9(%arg0: i32) -> (i32, i32) {
    %c0_i32 = arith.constant 0 : i32
    %c0_i32_0 = arith.constant 0 : i32
    %c0_i32_1 = arith.constant 0 : i32
    return %c0_i32, %c0_i32_0 : i32, i32
  }
  func.func @transform_10(%arg0: i32) -> (i32, i32) {
    %c0_i32 = arith.constant 0 : i32
    %c0_i32_0 = arith.constant 0 : i32
    %c0_i32_1 = arith.constant 0 : i32
    return %c0_i32, %c0_i32_0 : i32, i32
  }
  func.func @transform_11(%arg0: i32) -> (i32, i32) {
    %c0_i32 = arith.constant 0 : i32
    %c0_i32_0 = arith.constant 0 : i32
    %c0_i32_1 = arith.constant 0 : i32
    return %c0_i32, %c0_i32_0 : i32, i32
  }
  func.func @transform_12(%arg0: i32) -> (i32, i32) {
    %c0_i32 = arith.constant 0 : i32
    %c0_i32_0 = arith.constant 0 : i32
    %c0_i32_1 = arith.constant 0 : i32
    return %c0_i32, %c0_i32_0 : i32, i32
  }
  func.func @transform_13(%arg0: i32) -> (i32, i32) {
    %c0_i32 = arith.constant 0 : i32
    %c0_i32_0 = arith.constant 0 : i32
    %c0_i32_1 = arith.constant 0 : i32
    return %c0_i32, %c0_i32_0 : i32, i32
  }
}

</mosaic_0001>

<llo_original>
// kernel: tpu_custom_call.1
$region0: #{tpu_custom_call.1}
  #allocation0 [shape = 'u32[]', space=smem, size = 0x4, offset = 0x4, fixed_abs, tag = 'smem constant byte address 0x4 - core index']
  #allocation1 [shape = 'u32[144,128]{1,0:T(1,128)}', space=vmem, size = 0x12000, scoped, tag = 'internal scratch']
  #allocation2 [shape = 'f32[8,1024]{1,0:T(8,128)}', space=vmem, size = 0x8000, scoped, tag = 'scratch operand']
  %s0 = inlined_call_operand.hbm [shape: f32[8,128], index: 0, kind: input, shape index: {}]
  %s1 = inlined_call_operand.hbm [shape: bf16[128,1024], index: 1, kind: input, shape index: {}]
  %s2 = inlined_call_operand.hbm [shape: f32[1,1024], index: 2, kind: input, shape index: {}]
  %s3 = inlined_call_operand.hbm [shape: s8[2,1024,1024], index: 3, kind: input, shape index: {}]
  %s4 = inlined_call_operand.hbm [shape: s8[2,1024,1024], index: 4, kind: input, shape index: {}]
  %s5 = inlined_call_operand.hbm [shape: f32[2,1024], index: 5, kind: input, shape index: {}]
  %s6 = inlined_call_operand.hbm [shape: f32[2,1024], index: 6, kind: input, shape index: {}]
  %s7 = inlined_call_operand.hbm [shape: f32[2,1024], index: 7, kind: input, shape index: {}]
  %s8 = inlined_call_operand.hbm [shape: f32[2,1024], index: 8, kind: input, shape index: {}]
  %s9 = inlined_call_operand.hbm [shape: bf16[1024,256], index: 9, kind: input, shape index: {}]
  %s10 = inlined_call_operand.hbm [shape: f32[1,256], index: 10, kind: input, shape index: {}]
  %s11 = inlined_call_operand.hbm [shape: bf16[256,128], index: 11, kind: input, shape index: {}]
  %s12 = inlined_call_operand.hbm [shape: f32[1,128], index: 12, kind: input, shape index: {}]
  %s13 = inlined_call_operand.hbm [shape: f32[8,128], index: 13, kind: output, shape index: {}]
  %s14 = sld [smem:[#allocation0]]
  $region145: #{tpu_custom_call.1} parent=0
    _
  %s16 = ssub.s32 1, %s14
  %s17 = scalar_select 0, %s16, %s14
  $region1: #{tpu_custom_call.1} parent=0
    #allocation3 [shape = 'u8[4096]{0}', space=vmem, size = 0x1000, scoped, tag = 'input window, operand 0, single buffered']
    #allocation4 [shape = 's32[2]{0}', space=sflag, size = 0x8, scoped, tag = 'scoped memory for tpu_custom_call.1']
    #allocation5 [shape = 's32[2]{0}', space=sflag, size = 0x8, scoped, tag = 'scoped memory for tpu_custom_call.1']
    #allocation6 [shape = 'u8[262144]{0}', space=vmem, size = 0x40000, scoped, tag = 'input window, operand 1, single buffered']
    #allocation7 [shape = 's32[1]{0}', space=sflag, size = 0x4, scoped, tag = 'scoped memory for tpu_custom_call.1']
    #allocation8 [shape = 'u8[4096]{0}', space=vmem, size = 0x1000, scoped, tag = 'input window, operand 2, single buffered']
    #allocation9 [shape = 'u8[2097152]{0}', space=vmem, size = 0x200000, scoped, tag = 'input window, operand 3']
    #allocation10 [shape = 's32[2]{0}', space=sflag, size = 0x8, scoped, tag = 'scoped memory for tpu_custom_call.1']
    #allocation11 [shape = 'u8[2097152]{0}', space=vmem, size = 0x200000, scoped, tag = 'input window, operand 4']
    #allocation12 [shape = 'u8[8192]{0}', space=vmem, size = 0x2000, scoped, tag = 'input window, operand 5, single buffered']
    #allocation13 [shape = 's32[1]{0}', space=sflag, size = 0x4, scoped, tag = 'scoped memory for tpu_custom_call.1']
    #allocation14 [shape = 'u8[8192]{0}', space=vmem, size = 0x2000, scoped, tag = 'input window, operand 6, single buffered']
    #allocation15 [shape = 'u8[8192]{0}', space=vmem, size = 0x2000, scoped, tag = 'input window, operand 7, single buffered']
    #allocation16 [shape = 's32[1]{0}', space=sflag, size = 0x4, scoped, tag = 'scoped memory for tpu_custom_call.1']
    #allocation17 [shape = 'u8[8192]{0}', space=vmem, size = 0x2000, scoped, tag = 'input window, operand 8, single buffered']
    #allocation18 [shape = 'u8[524288]{0}', space=vmem, size = 0x80000, scoped, tag = 'input window, operand 9, single buffered']
    #allocation19 [shape = 's32[1]{0}', space=sflag, size = 0x4, scoped, tag = 'scoped memory for tpu_custom_call.1']
    #allocation20 [shape = 'u8[1024]{0}', space=vmem, size = 0x400, scoped, tag = 'input window, operand 10, single buffered']
    #allocation21 [shape = 'u8[65536]{0}', space=vmem, size = 0x10000, scoped, tag = 'input window, operand 11, single buffered']
    #allocation22 [shape = 's32[1]{0}', space=sflag, size = 0x4, scoped, tag = 'scoped memory for tpu_custom_call.1']
    #allocation23 [shape = 'u8[512]{0}', space=vmem, size = 0x400, scoped, tag = 'input window, operand 12, single buffered']
    #allocation24 [shape = 'u8[4096]{0}', space=vmem, size = 0x1000, scoped, tag = 'output window, operand 0, single buffered']
    %18 = vsyncpa [#allocation4], 0
    %19 = vsyncpa [#allocation7], 0
    %20 = vsyncpa [#allocation10], 0
    %s21 = scalar_lea.sflag [#allocation10], 1
    %22 = vsyncpa %s21, 0
    %23 = vsyncpa [#allocation13], 0
    %24 = vsyncpa [#allocation16], 0
    %25 = vsyncpa [#allocation19], 0
    %26 = vsyncpa [#allocation22], 0
    %27 = vsyncpa [#allocation5], 0
    loop: start=0, step=1, limit=4
    $region2: #{tpu_custom_call.1} parent=1 // loop_pre_header
      _
    $region3: #{tpu_custom_call.1} parent=1 // loop_header
      %s29 = sphi 0, %s33
      %p30 = scmp.ge.s32.totalorder %s29, 4
      %s37 = sphi 0, %s37
      %s39 = sphi 0, %s37
      %s40 = sphi 0, %s39
      %s54 = sphi 0, %s40
      %s58 = sphi 0, %s58
      %s60 = sphi 0, %s58
      %s61 = sphi 0, %s60
      %s75 = sphi 0, %s61
      %s79 = sphi 0, %s79
      %s81 = sphi 0, %s79
      %s82 = sphi 0, %s81
      %s96 = sphi 0, %s82
      %s102 = sphi 0, %s104
      %s105 = sphi 0, %s102
      %s106 = sphi 0, %s105
      %s122 = sphi 0, %s106
      %s128 = sphi 0, %s130
      %s131 = sphi 0, %s128
      %s132 = sphi 0, %s131
      %s148 = sphi 0, %s132
      %s152 = sphi 0, %s152
      %s154 = sphi 0, %s152
      %s155 = sphi 0, %s154
      %s169 = sphi 0, %s155
      %s173 = sphi 0, %s173
      %s175 = sphi 0, %s173
      %s176 = sphi 0, %s175
      %s190 = sphi 0, %s176
      %s194 = sphi 0, %s194
      %s196 = sphi 0, %s194
      %s197 = sphi 0, %s196
      %s211 = sphi 0, %s197
      %s215 = sphi 0, %s215
      %s217 = sphi 0, %s215
      %s218 = sphi 0, %s217
      %s232 = sphi 0, %s218
      %s236 = sphi 0, %s236
      %s238 = sphi 0, %s236
      %s239 = sphi 0, %s238
      %s253 = sphi 0, %s239
      %s257 = sphi 0, %s257
      %s259 = sphi 0, %s257
      %s260 = sphi 0, %s259
      %s274 = sphi 0, %s260
      %s278 = sphi 0, %s278
      %s280 = sphi 0, %s278
      %s281 = sphi 0, %s280
      %s295 = sphi 0, %s281
      %s299 = sphi 0, %s299
      %s301 = sphi 0, %s299
      %s302 = sphi 0, %s301
      %s316 = sphi 0, %s302
      %s320 = sphi 0, %s320
      %s322 = sphi 0, %s320
      %s323 = sphi 0, %s322
      %s337 = sphi 0, %s323
    $region4: #{tpu_custom_call.1} parent=1 // loop_header_branch
      %32 = sbr.rel (%p30) target = $region8
    $region5: #{tpu_custom_call.1} parent=1 // loop_body
      %s34 = ssub.s32 %s29, 1
      %s35 = ssub.s32 %s29, 2
      %s36 = sadd.s32 %s29, 1
      %s38 = sadd.s32 %s37, 1
      %p41 = scmp.eq.s32.totalorder %s29, 1
      %p42 = scmp.ne.s32.totalorder %s37, %s39
      %p43 = scmp.eq.s32.totalorder %s29, 0
      %p44 = por %p42, %p43
      %p45 = scmp.ne.s32.totalorder %s37, %s39
      %p46 = scmp.eq.s32.totalorder %s34, 1
      %p47 = por %p45, %p46
      %p48 = scmp.ne.s32.totalorder %s39, %s40
      %p49 = scmp.eq.s32.totalorder %s34, 0
      %p50 = por %p48, %p49
      %p51 = scmp.ne.s32.totalorder %s39, %s40
      %p52 = scmp.eq.s32.totalorder %s35, 1
      %p53 = por %p51, %p52
      %p55 = scmp.ne.s32.totalorder %s40, %s54
      %p56 = scmp.eq.s32.totalorder %s35, 0
      %p57 = por %p55, %p56
      %s59 = sadd.s32 %s58, 1
      %p62 = scmp.eq.s32.totalorder %s29, 1
      %p63 = scmp.ne.s32.totalorder %s58, %s60
      %p64 = scmp.eq.s32.totalorder %s29, 0
      %p65 = por %p63, %p64
      %p66 = scmp.ne.s32.totalorder %s58, %s60
      %p67 = scmp.eq.s32.totalorder %s34, 1
      %p68 = por %p66, %p67
      %p69 = scmp.ne.s32.totalorder %s60, %s61
      %p70 = scmp.eq.s32.totalorder %s34, 0
      %p71 = por %p69, %p70
      %p72 = scmp.ne.s32.totalorder %s60, %s61
      %p73 = scmp.eq.s32.totalorder %s35, 1
      %p74 = por %p72, %p73
      %p76 = scmp.ne.s32.totalorder %s61, %s75
      %p77 = scmp.eq.s32.totalorder %s35, 0
      %p78 = por %p76, %p77
      %s80 = sadd.s32 %s79, 1
      %p83 = scmp.eq.s32.totalorder %s29, 1
      %p84 = scmp.ne.s32.totalorder %s79, %s81
      %p85 = scmp.eq.s32.totalorder %s29, 0
      %p86 = por %p84, %p85
      %p87 = scmp.ne.s32.totalorder %s79, %s81
      %p88 = scmp.eq.s32.totalorder %s34, 1
      %p89 = por %p87, %p88
      %p90 = scmp.ne.s32.totalorder %s81, %s82
      %p91 = scmp.eq.s32.totalorder %s34, 0
      %p92 = por %p90, %p91
      %p93 = scmp.ne.s32.totalorder %s81, %s82
      %p94 = scmp.eq.s32.totalorder %s35, 1
      %p95 = por %p93, %p94
      %p97 = scmp.ne.s32.totalorder %s82, %s96
      %p98 = scmp.eq.s32.totalorder %s35, 0
      %p99 = por %p97, %p98
      %s100 = ssub.s32 %s29, %s36
      %p101 = scmp.eq.s32.totalorder %s100, 0
      %s103 = sadd.s32 %s102, 1
      %s104 = scalar_select %p101, %s102, %s103
      %p107 = pneg %p101
      %p108 = scmp.eq.s32.totalorder %s29, 1
      %p109 = por %p107, %p108
      %p110 = scmp.ne.s32.totalorder %s102, %s105
      %p111 = scmp.eq.s32.totalorder %s29, 0
      %p112 = por %p110, %p111
      %p113 = scmp.ne.s32.totalorder %s102, %s105
      %p114 = scmp.eq.s32.totalorder %s34, 1
      %p115 = por %p113, %p114
      %p116 = scmp.ne.s32.totalorder %s105, %s106
      %p117 = scmp.eq.s32.totalorder %s34, 0
      %p118 = por %p116, %p117
      %p119 = scmp.ne.s32.totalorder %s105, %s106
      %p120 = scmp.eq.s32.totalorder %s35, 1
      %p121 = por %p119, %p120
      %p123 = scmp.ne.s32.totalorder %s106, %s122
      %p124 = scmp.eq.s32.totalorder %s35, 0
      %p125 = por %p123, %p124
      %s126 = ssub.s32 %s29, %s36
      %p127 = scmp.eq.s32.totalorder %s126, 0
      %s129 = sadd.s32 %s128, 1
      %s130 = scalar_select %p127, %s128, %s129
      %p133 = pneg %p127
      %p134 = scmp.eq.s32.totalorder %s29, 1
      %p135 = por %p133, %p134
      %p136 = scmp.ne.s32.totalorder %s128, %s131
      %p137 = scmp.eq.s32.totalorder %s29, 0
      %p138 = por %p136, %p137
      %p139 = scmp.ne.s32.totalorder %s128, %s131
      %p140 = scmp.eq.s32.totalorder %s34, 1
      %p141 = por %p139, %p140
      %p142 = scmp.ne.s32.totalorder %s131, %s132
      %p143 = scmp.eq.s32.totalorder %s34, 0
      %p144 = por %p142, %p143
      %p145 = scmp.ne.s32.totalorder %s131, %s132
      %p146 = scmp.eq.s32.totalorder %s35, 1
      %p147 = por %p145, %p146
      %p149 = scmp.ne.s32.totalorder %s132, %s148
      %p150 = scmp.eq.s32.totalorder %s35, 0
      %p151 = por %p149, %p150
      %s153 = sadd.s32 %s152, 1
      %p156 = scmp.eq.s32.totalorder %s29, 1
      %p157 = scmp.ne.s32.totalorder %s152, %s154
      %p158 = scmp.eq.s32.totalorder %s29, 0
      %p159 = por %p157, %p158
      %p160 = scmp.ne.s32.totalorder %s152, %s154
      %p161 = scmp.eq.s32.totalorder %s34, 1
      %p162 = por %p160, %p161
      %p163 = scmp.ne.s32.totalorder %s154, %s155
      %p164 = scmp.eq.s32.totalorder %s34, 0
      %p165 = por %p163, %p164
      %p166 = scmp.ne.s32.totalorder %s154, %s155
      %p167 = scmp.eq.s32.totalorder %s35, 1
      %p168 = por %p166, %p167
      %p170 = scmp.ne.s32.totalorder %s155, %s169
      %p171 = scmp.eq.s32.totalorder %s35, 0
      %p172 = por %p170, %p171
      %s174 = sadd.s32 %s173, 1
      %p177 = scmp.eq.s32.totalorder %s29, 1
      %p178 = scmp.ne.s32.totalorder %s173, %s175
      %p179 = scmp.eq.s32.totalorder %s29, 0
      %p180 = por %p178, %p179
      %p181 = scmp.ne.s32.totalorder %s173, %s175
      %p182 = scmp.eq.s32.totalorder %s34, 1
      %p183 = por %p181, %p182
      %p184 = scmp.ne.s32.totalorder %s175, %s176
      %p185 = scmp.eq.s32.totalorder %s34, 0
      %p186 = por %p184, %p185
      %p187 = scmp.ne.s32.totalorder %s175, %s176
      %p188 = scmp.eq.s32.totalorder %s35, 1
      %p189 = por %p187, %p188
      %p191 = scmp.ne.s32.totalorder %s176, %s190
      %p192 = scmp.eq.s32.totalorder %s35, 0
      %p193 = por %p191, %p192
      %s195 = sadd.s32 %s194, 1
      %p198 = scmp.eq.s32.totalorder %s29, 1
      %p199 = scmp.ne.s32.totalorder %s194, %s196
      %p200 = scmp.eq.s32.totalorder %s29, 0
      %p201 = por %p199, %p200
      %p202 = scmp.ne.s32.totalorder %s194, %s196
      %p203 = scmp.eq.s32.totalorder %s34, 1
      %p204 = por %p202, %p203
      %p205 = scmp.ne.s32.totalorder %s196, %s197
      %p206 = scmp.eq.s32.totalorder %s34, 0
      %p207 = por %p205, %p206
      %p208 = scmp.ne.s32.totalorder %s196, %s197
      %p209 = scmp.eq.s32.totalorder %s35, 1
      %p210 = por %p208, %p209
      %p212 = scmp.ne.s32.totalorder %s197, %s211
      %p213 = scmp.eq.s32.totalorder %s35, 0
      %p214 = por %p212, %p213
      %s216 = sadd.s32 %s215, 1
      %p219 = scmp.eq.s32.totalorder %s29, 1
      %p220 = scmp.ne.s32.totalorder %s215, %s217
      %p221 = scmp.eq.s32.totalorder %s29, 0
      %p222 = por %p220, %p221
      %p223 = scmp.ne.s32.totalorder %s215, %s217
      %p224 = scmp.eq.s32.totalorder %s34, 1
      %p225 = por %p223, %p224
      %p226 = scmp.ne.s32.totalorder %s217, %s218
      %p227 = scmp.eq.s32.totalorder %s34, 0
      %p228 = por %p226, %p227
      %p229 = scmp.ne.s32.totalorder %s217, %s218
      %p230 = scmp.eq.s32.totalorder %s35, 1
      %p231 = por %p229, %p230
      %p233 = scmp.ne.s32.totalorder %s218, %s232
      %p234 = scmp.eq.s32.totalorder %s35, 0
      %p235 = por %p233, %p234
      %s237 = sadd.s32 %s236, 1
      %p240 = scmp.eq.s32.totalorder %s29, 1
      %p241 = scmp.ne.s32.totalorder %s236, %s238
      %p242 = scmp.eq.s32.totalorder %s29, 0
      %p243 = por %p241, %p242
      %p244 = scmp.ne.s32.totalorder %s236, %s238
      %p245 = scmp.eq.s32.totalorder %s34, 1
      %p246 = por %p244, %p245
      %p247 = scmp.ne.s32.totalorder %s238, %s239
      %p248 = scmp.eq.s32.totalorder %s34, 0
      %p249 = por %p247, %p248
      %p250 = scmp.ne.s32.totalorder %s238, %s239
      %p251 = scmp.eq.s32.totalorder %s35, 1
      %p252 = por %p250, %p251
      %p254 = scmp.ne.s32.totalorder %s239, %s253
      %p255 = scmp.eq.s32.totalorder %s35, 0
      %p256 = por %p254, %p255
      %s258 = sadd.s32 %s257, 1
      %p261 = scmp.eq.s32.totalorder %s29, 1
      %p262 = scmp.ne.s32.totalorder %s257, %s259
      %p263 = scmp.eq.s32.totalorder %s29, 0
      %p264 = por %p262, %p263
      %p265 = scmp.ne.s32.totalorder %s257, %s259
      %p266 = scmp.eq.s32.totalorder %s34, 1
      %p267 = por %p265, %p266
      %p268 = scmp.ne.s32.totalorder %s259, %s260
      %p269 = scmp.eq.s32.totalorder %s34, 0
      %p270 = por %p268, %p269
      %p271 = scmp.ne.s32.totalorder %s259, %s260
      %p272 = scmp.eq.s32.totalorder %s35, 1
      %p273 = por %p271, %p272
      %p275 = scmp.ne.s32.totalorder %s260, %s274
      %p276 = scmp.eq.s32.totalorder %s35, 0
      %p277 = por %p275, %p276
      %s279 = sadd.s32 %s278, 1
      %p282 = scmp.eq.s32.totalorder %s29, 1
      %p283 = scmp.ne.s32.totalorder %s278, %s280
      %p284 = scmp.eq.s32.totalorder %s29, 0
      %p285 = por %p283, %p284
      %p286 = scmp.ne.s32.totalorder %s278, %s280
      %p287 = scmp.eq.s32.totalorder %s34, 1
      %p288 = por %p286, %p287
      %p289 = scmp.ne.s32.totalorder %s280, %s281
      %p290 = scmp.eq.s32.totalorder %s34, 0
      %p291 = por %p289, %p290
      %p292 = scmp.ne.s32.totalorder %s280, %s281
      %p293 = scmp.eq.s32.totalorder %s35, 1
      %p294 = por %p292, %p293
      %p296 = scmp.ne.s32.totalorder %s281, %s295
      %p297 = scmp.eq.s32.totalorder %s35, 0
      %p298 = por %p296, %p297
      %s300 = sadd.s32 %s299, 1
      %p303 = scmp.eq.s32.totalorder %s29, 1
      %p304 = scmp.ne.s32.totalorder %s299, %s301
      %p305 = scmp.eq.s32.totalorder %s29, 0
      %p306 = por %p304, %p305
      %p307 = scmp.ne.s32.totalorder %s299, %s301
      %p308 = scmp.eq.s32.totalorder %s34, 1
      %p309 = por %p307, %p308
      %p310 = scmp.ne.s32.totalorder %s301, %s302
      %p311 = scmp.eq.s32.totalorder %s34, 0
      %p312 = por %p310, %p311
      %p313 = scmp.ne.s32.totalorder %s301, %s302
      %p314 = scmp.eq.s32.totalorder %s35, 1
      %p315 = por %p313, %p314
      %p317 = scmp.ne.s32.totalorder %s302, %s316
      %p318 = scmp.eq.s32.totalorder %s35, 0
      %p319 = por %p317, %p318
      %s321 = sadd.s32 %s320, 1
      %p324 = scmp.eq.s32.totalorder %s29, 1
      %p325 = scmp.ne.s32.totalorder %s320, %s322
      %p326 = scmp.eq.s32.totalorder %s29, 0
      %p327 = por %p325, %p326
      %p328 = scmp.ne.s32.totalorder %s320, %s322
      %p329 = scmp.eq.s32.totalorder %s34, 1
      %p330 = por %p328, %p329
      %p331 = scmp.ne.s32.totalorder %s322, %s323
      %p332 = scmp.eq.s32.totalorder %s34, 0
      %p333 = por %p331, %p332
      %p334 = scmp.ne.s32.totalorder %s322, %s323
      %p335 = scmp.eq.s32.totalorder %s35, 1
      %p336 = por %p334, %p335
      %p338 = scmp.ne.s32.totalorder %s323, %s337
      %p339 = scmp.eq.s32.totalorder %s35, 0
      %p340 = por %p338, %p339
      %p341 = scmp.le.s32.totalorder 1, %s29
      %p342 = scmp.lt.s32.totalorder %s29, 3
      %p343 = pnand %p341, %p342
      %p344 = pneg %p343
      // Predicated region
      $region9: #{tpu_custom_call.1} parent=5 // pred_check
        _
      $region10: #{tpu_custom_call.1} parent=5 // pred_check_branch
        %346 = sbr.rel (%p343) target = $region12
      $region11: #{tpu_custom_call.1} parent=5 // pred_region
        %s347 = ssub.s32 %s29, 1
        // Predicated region
        $region13: #{tpu_custom_call.1} parent=11 // pred_check
          %p348 = pneg %p50
        $region14: #{tpu_custom_call.1} parent=11 // pred_check_branch
          %350 = sbr.rel (%p348) target = $region16
        $region15: #{tpu_custom_call.1} parent=11 // pred_region
          %s352 = ssub.s32 128, 128
          %353 = vsyncadd [#allocation4], %s352
          %s355 = sshll.u32 [#allocation3], 4
          %s356 = int_to_ptr.vmem [resolvable:$true] %s355
          %358 = dma.hbm_to_vmem [thread:$0]  %s0, 128, %s356, [#allocation4]
        $region16: #{tpu_custom_call.1} parent=11 // pred_fallthru
          _
        // Predicated region
        $region17: #{tpu_custom_call.1} parent=11 // pred_check
          %p359 = pneg %p71
        $region18: #{tpu_custom_call.1} parent=11 // pred_check_branch
          %361 = sbr.rel (%p359) target = $region20
        $region19: #{tpu_custom_call.1} parent=11 // pred_region
          %s363 = ssub.s32 8192, 8192
          %364 = vsyncadd [#allocation7], %s363
          %s365 = sshll.u32 [#allocation6], 4
          %s366 = int_to_ptr.vmem [resolvable:$true] %s365
          %371 = dma.hbm_to_vmem [thread:$0]  %s1, 8192, %s366, [#allocation7], 512, 512, 32
        $region20: #{tpu_custom_call.1} parent=11 // pred_fallthru
          _
        // Predicated region
        $region21: #{tpu_custom_call.1} parent=11 // pred_check
          %p372 = pneg %p92
        $region22: #{tpu_custom_call.1} parent=11 // pred_check_branch
          %374 = sbr.rel (%p372) target = $region24
        $region23: #{tpu_custom_call.1} parent=11 // pred_region
          %s376 = ssub.s32 128, 128
          %377 = vsyncadd [#allocation7], %s376
          %s379 = sshll.u32 [#allocation8], 4
          %s380 = int_to_ptr.vmem [resolvable:$true] %s379
          %382 = dma.hbm_to_vmem [thread:$0]  %s2, 128, %s380, [#allocation7]
        $region24: #{tpu_custom_call.1} parent=11 // pred_fallthru
          _
        // Predicated region
        $region25: #{tpu_custom_call.1} parent=11 // pred_check
          %p383 = pneg %p165
        $region26: #{tpu_custom_call.1} parent=11 // pred_check_branch
          %385 = sbr.rel (%p383) target = $region28
        $region27: #{tpu_custom_call.1} parent=11 // pred_region
          %s387 = ssub.s32 256, 256
          %388 = vsyncadd [#allocation13], %s387
          %s390 = sshll.u32 [#allocation12], 4
          %s391 = int_to_ptr.vmem [resolvable:$true] %s390
          %393 = dma.hbm_to_vmem [thread:$0]  %s5, 256, %s391, [#allocation13]
        $region28: #{tpu_custom_call.1} parent=11 // pred_fallthru
          _
        // Predicated region
        $region29: #{tpu_custom_call.1} parent=11 // pred_check
          %p394 = pneg %p186
        $region30: #{tpu_custom_call.1} parent=11 // pred_check_branch
          %396 = sbr.rel (%p394) target = $region32
        $region31: #{tpu_custom_call.1} parent=11 // pred_region
          %s398 = ssub.s32 256, 256
          %399 = vsyncadd [#allocation13], %s398
          %s401 = sshll.u32 [#allocation14], 4
          %s402 = int_to_ptr.vmem [resolvable:$true] %s401
          %404 = dma.hbm_to_vmem [thread:$0]  %s6, 256, %s402, [#allocation13]
        $region32: #{tpu_custom_call.1} parent=11 // pred_fallthru
          _
        // Predicated region
        $region33: #{tpu_custom_call.1} parent=11 // pred_check
          %p405 = pneg %p207
        $region34: #{tpu_custom_call.1} parent=11 // pred_check_branch
          %407 = sbr.rel (%p405) target = $region36
        $region35: #{tpu_custom_call.1} parent=11 // pred_region
          %s409 = ssub.s32 256, 256
          %410 = vsyncadd [#allocation16], %s409
          %s412 = sshll.u32 [#allocation15], 4
          %s413 = int_to_ptr.vmem [resolvable:$true] %s412
          %415 = dma.hbm_to_vmem [thread:$0]  %s7, 256, %s413, [#allocation16]
        $region36: #{tpu_custom_call.1} parent=11 // pred_fallthru
          _
        // Predicated region
        $region37: #{tpu_custom_call.1} parent=11 // pred_check
          %p416 = pneg %p228
        $region38: #{tpu_custom_call.1} parent=11 // pred_check_branch
          %418 = sbr.rel (%p416) target = $region40
        $region39: #{tpu_custom_call.1} parent=11 // pred_region
          %s420 = ssub.s32 256, 256
          %421 = vsyncadd [#allocation16], %s420
          %s423 = sshll.u32 [#allocation17], 4
          %s424 = int_to_ptr.vmem [resolvable:$true] %s423
          %426 = dma.hbm_to_vmem [thread:$0]  %s8, 256, %s424, [#allocation16]
        $region40: #{tpu_custom_call.1} parent=11 // pred_fallthru
          _
        // Predicated region
        $region41: #{tpu_custom_call.1} parent=11 // pred_check
          %p427 = pneg %p249
        $region42: #{tpu_custom_call.1} parent=11 // pred_check_branch
          %429 = sbr.rel (%p427) target = $region44
        $region43: #{tpu_custom_call.1} parent=11 // pred_region
          %s431 = ssub.s32 16384, 16384
          %432 = vsyncadd [#allocation19], %s431
          %s433 = sshll.u32 [#allocation18], 4
          %s434 = int_to_ptr.vmem [resolvable:$true] %s433
          %439 = dma.hbm_to_vmem [thread:$0]  %s9, 16384, %s434, [#allocation19], 128, 128, 8
        $region44: #{tpu_custom_call.1} parent=11 // pred_fallthru
          _
        // Predicated region
        $region45: #{tpu_custom_call.1} parent=11 // pred_check
          %p440 = pneg %p270
        $region46: #{tpu_custom_call.1} parent=11 // pred_check_branch
          %442 = sbr.rel (%p440) target = $region48
        $region47: #{tpu_custom_call.1} parent=11 // pred_region
          %s444 = ssub.s32 32, 32
          %445 = vsyncadd [#allocation19], %s444
          %s447 = sshll.u32 [#allocation20], 4
          %s448 = int_to_ptr.vmem [resolvable:$true] %s447
          %450 = dma.hbm_to_vmem [thread:$0]  %s10, 32, %s448, [#allocation19]
        $region48: #{tpu_custom_call.1} parent=11 // pred_fallthru
          _
        // Predicated region
        $region49: #{tpu_custom_call.1} parent=11 // pred_check
          %p451 = pneg %p291
        $region50: #{tpu_custom_call.1} parent=11 // pred_check_branch
          %453 = sbr.rel (%p451) target = $region52
        $region51: #{tpu_custom_call.1} parent=11 // pred_region
          %s455 = ssub.s32 2048, 2048
          %456 = vsyncadd [#allocation22], %s455
          %s457 = sshll.u32 [#allocation21], 4
          %s458 = int_to_ptr.vmem [resolvable:$true] %s457
          %463 = dma.hbm_to_vmem [thread:$0]  %s11, 2048, %s458, [#allocation22], 64, 64, 4
        $region52: #{tpu_custom_call.1} parent=11 // pred_fallthru
          _
        // Predicated region
        $region53: #{tpu_custom_call.1} parent=11 // pred_check
          %p464 = pneg %p312
        $region54: #{tpu_custom_call.1} parent=11 // pred_check_branch
          %466 = sbr.rel (%p464) target = $region56
        $region55: #{tpu_custom_call.1} parent=11 // pred_region
          %s468 = ssub.s32 16, 16
          %469 = vsyncadd [#allocation22], %s468
          %s471 = sshll.u32 [#allocation23], 4
          %s472 = int_to_ptr.vmem [resolvable:$true] %s471
          %474 = dma.hbm_to_vmem [thread:$0]  %s12, 16, %s472, [#allocation22]
        $region56: #{tpu_custom_call.1} parent=11 // pred_fallthru
          _
      $region12: #{tpu_custom_call.1} parent=5 // pred_fallthru
        _
      %p475 = scmp.lt.s32.totalorder %s29, 2
      // Predicated region
      $region57: #{tpu_custom_call.1} parent=5 // pred_check
        %p476 = pneg %p475
      $region58: #{tpu_custom_call.1} parent=5 // pred_check_branch
        %478 = sbr.rel (%p476) target = $region60
      $region59: #{tpu_custom_call.1} parent=5 // pred_region
        // Predicated region
        $region61: #{tpu_custom_call.1} parent=59 // pred_check
          %p479 = pneg %p112
        $region62: #{tpu_custom_call.1} parent=59 // pred_check_branch
          %481 = sbr.rel (%p479) target = $region64
        $region63: #{tpu_custom_call.1} parent=59 // pred_region
          %s482 = sand.u32 %s29, 1
          %s483 = scalar_lea.sflag [#allocation10], %s482
          %s484 = sand.u32 %s102, 1
          %s485 = smul.addr %s484, 2048
          %s486 = scalar_lea.vmem [#allocation9], %s485
          %s488 = ssub.s32 32768, 32768
          %489 = vsyncadd %s483, %s488
          %s490 = smul.addr %s29, 256
          %s491 = smul.addr %s490, 128
          %s492 = scalar_lea.hbm %s3, %s491
          %s493 = sshll.u32 %s486, 4
          %s494 = int_to_ptr.vmem [resolvable:$true] %s493
          %499 = dma.hbm_to_vmem [thread:$0]  %s492, 32768, %s494, %s483, 1024, 1024, 64
        $region64: #{tpu_custom_call.1} parent=59 // pred_fallthru
          _
        // Predicated region
        $region65: #{tpu_custom_call.1} parent=59 // pred_check
          %p500 = pneg %p138
        $region66: #{tpu_custom_call.1} parent=59 // pred_check_branch
          %502 = sbr.rel (%p500) target = $region68
        $region67: #{tpu_custom_call.1} parent=59 // pred_region
          %s503 = sand.u32 %s29, 1
          %s504 = scalar_lea.sflag [#allocation10], %s503
          %s505 = sand.u32 %s128, 1
          %s506 = smul.addr %s505, 2048
          %s507 = scalar_lea.vmem [#allocation11], %s506
          %s509 = ssub.s32 32768, 32768
          %510 = vsyncadd %s504, %s509
          %s511 = smul.addr %s29, 256
          %s512 = smul.addr %s511, 128
          %s513 = scalar_lea.hbm %s4, %s512
          %s514 = sshll.u32 %s507, 4
          %s515 = int_to_ptr.vmem [resolvable:$true] %s514
          %520 = dma.hbm_to_vmem [thread:$0]  %s513, 32768, %s515, %s504, 1024, 1024, 64
        $region68: #{tpu_custom_call.1} parent=59 // pred_fallthru
          _
      $region60: #{tpu_custom_call.1} parent=5 // pred_fallthru
        _
      %p521 = scmp.le.s32.totalorder 1, %s29
      %p522 = scmp.lt.s32.totalorder %s29, 3
      %p523 = pnand %p521, %p522
      %p524 = pneg %p523
      // Predicated region
      $region69: #{tpu_custom_call.1} parent=5 // pred_check
        _
      $region70: #{tpu_custom_call.1} parent=5 // pred_check_branch
        %526 = sbr.rel (%p523) target = $region72
      $region71: #{tpu_custom_call.1} parent=5 // pred_region
        %s527 = ssub.s32 %s29, 1
        // Predicated region
        $region73: #{tpu_custom_call.1} parent=71 // pred_check
          %p528 = pneg %p50
        $region74: #{tpu_custom_call.1} parent=71 // pred_check_branch
          %530 = sbr.rel (%p528) target = $region76
        $region75: #{tpu_custom_call.1} parent=71 // pred_region
          %531 = dma.done [#allocation4], 128
        $region76: #{tpu_custom_call.1} parent=71 // pred_fallthru
          _
        // Predicated region
        $region77: #{tpu_custom_call.1} parent=71 // pred_check
          %p532 = pneg %p71
        $region78: #{tpu_custom_call.1} parent=71 // pred_check_branch
          %534 = sbr.rel (%p532) target = $region80
        $region79: #{tpu_custom_call.1} parent=71 // pred_region
          %535 = dma.done [#allocation7], 8192
        $region80: #{tpu_custom_call.1} parent=71 // pred_fallthru
          _
        // Predicated region
        $region81: #{tpu_custom_call.1} parent=71 // pred_check
          %p536 = pneg %p92
        $region82: #{tpu_custom_call.1} parent=71 // pred_check_branch
          %538 = sbr.rel (%p536) target = $region84
        $region83: #{tpu_custom_call.1} parent=71 // pred_region
          %539 = dma.done [#allocation7], 128
        $region84: #{tpu_custom_call.1} parent=71 // pred_fallthru
          _
        %s540 = sand.u32 %s34, 1
        %s541 = scalar_lea.sflag [#allocation10], %s540
        %s542 = sand.u32 %s105, 1
        %s543 = smul.addr %s542, 2048
        %s544 = scalar_lea.vmem [#allocation9], %s543
        // Predicated region
        $region85: #{tpu_custom_call.1} parent=71 // pred_check
          %p545 = pneg %p118
        $region86: #{tpu_custom_call.1} parent=71 // pred_check_branch
          %547 = sbr.rel (%p545) target = $region88
        $region87: #{tpu_custom_call.1} parent=71 // pred_region
          %548 = dma.done %s541, 32768
        $region88: #{tpu_custom_call.1} parent=71 // pred_fallthru
          _
        %s549 = sand.u32 %s34, 1
        %s550 = scalar_lea.sflag [#allocation10], %s549
        %s551 = sand.u32 %s131, 1
        %s552 = smul.addr %s551, 2048
        %s553 = scalar_lea.vmem [#allocation11], %s552
        // Predicated region
        $region89: #{tpu_custom_call.1} parent=71 // pred_check
          %p554 = pneg %p144
        $region90: #{tpu_custom_call.1} parent=71 // pred_check_branch
          %556 = sbr.rel (%p554) target = $region92
        $region91: #{tpu_custom_call.1} parent=71 // pred_region
          %557 = dma.done %s550, 32768
        $region92: #{tpu_custom_call.1} parent=71 // pred_fallthru
          _
        // Predicated region
        $region93: #{tpu_custom_call.1} parent=71 // pred_check
          %p558 = pneg %p165
        $region94: #{tpu_custom_call.1} parent=71 // pred_check_branch
          %560 = sbr.rel (%p558) target = $region96
        $region95: #{tpu_custom_call.1} parent=71 // pred_region
          %561 = dma.done [#allocation13], 256
        $region96: #{tpu_custom_call.1} parent=71 // pred_fallthru
          _
        // Predicated region
        $region97: #{tpu_custom_call.1} parent=71 // pred_check
          %p562 = pneg %p186
        $region98: #{tpu_custom_call.1} parent=71 // pred_check_branch
          %564 = sbr.rel (%p562) target = $region100
        $region99: #{tpu_custom_call.1} parent=71 // pred_region
          %565 = dma.done [#allocation13], 256
        $region100: #{tpu_custom_call.1} parent=71 // pred_fallthru
          _
        // Predicated region
        $region101: #{tpu_custom_call.1} parent=71 // pred_check
          %p566 = pneg %p207
        $region102: #{tpu_custom_call.1} parent=71 // pred_check_branch
          %568 = sbr.rel (%p566) target = $region104
        $region103: #{tpu_custom_call.1} parent=71 // pred_region
          %569 = dma.done [#allocation16], 256
        $region104: #{tpu_custom_call.1} parent=71 // pred_fallthru
          _
        // Predicated region
        $region105: #{tpu_custom_call.1} parent=71 // pred_check
          %p570 = pneg %p228
        $region106: #{tpu_custom_call.1} parent=71 // pred_check_branch
          %572 = sbr.rel (%p570) target = $region108
        $region107: #{tpu_custom_call.1} parent=71 // pred_region
          %573 = dma.done [#allocation16], 256
        $region108: #{tpu_custom_call.1} parent=71 // pred_fallthru
          _
        // Predicated region
        $region109: #{tpu_custom_call.1} parent=71 // pred_check
          %p574 = pneg %p249
        $region110: #{tpu_custom_call.1} parent=71 // pred_check_branch
          %576 = sbr.rel (%p574) target = $region112
        $region111: #{tpu_custom_call.1} parent=71 // pred_region
          %577 = dma.done [#allocation19], 16384
        $region112: #{tpu_custom_call.1} parent=71 // pred_fallthru
          _
        // Predicated region
        $region113: #{tpu_custom_call.1} parent=71 // pred_check
          %p578 = pneg %p270
        $region114: #{tpu_custom_call.1} parent=71 // pred_check_branch
          %580 = sbr.rel (%p578) target = $region116
        $region115: #{tpu_custom_call.1} parent=71 // pred_region
          %581 = dma.done [#allocation19], 32
        $region116: #{tpu_custom_call.1} parent=71 // pred_fallthru
          _
        // Predicated region
        $region117: #{tpu_custom_call.1} parent=71 // pred_check
          %p582 = pneg %p291
        $region118: #{tpu_custom_call.1} parent=71 // pred_check_branch
          %584 = sbr.rel (%p582) target = $region120
        $region119: #{tpu_custom_call.1} parent=71 // pred_region
          %585 = dma.done [#allocation22], 2048
        $region120: #{tpu_custom_call.1} parent=71 // pred_fallthru
          _
        // Predicated region
        $region121: #{tpu_custom_call.1} parent=71 // pred_check
          %p586 = pneg %p312
        $region122: #{tpu_custom_call.1} parent=71 // pred_check_branch
          %588 = sbr.rel (%p586) target = $region124
        $region123: #{tpu_custom_call.1} parent=71 // pred_region
          %589 = dma.done [#allocation22], 16
        $region124: #{tpu_custom_call.1} parent=71 // pred_fallthru
          _
        %p590 = pneg %p50
        %p591 = pneg %p47
        %p592 = pneg %p71
        %p593 = pneg %p68
        %p594 = pneg %p92
        %p595 = pneg %p89
        %s596 = sand.u32 %s34, 1
        %s597 = scalar_lea.sflag [#allocation10], %s596
        %s598 = sand.u32 %s105, 1
        %s599 = smul.addr %s598, 2048
        %s600 = scalar_lea.vmem [#allocation9], %s599
        %p601 = pneg %p118
        %p602 = pneg %p115
        %s603 = sand.u32 %s34, 1
        %s604 = scalar_lea.sflag [#allocation10], %s603
        %s605 = sand.u32 %s131, 1
        %s606 = smul.addr %s605, 2048
        %s607 = scalar_lea.vmem [#allocation11], %s606
        %p608 = pneg %p144
        %p609 = pneg %p141
        %p610 = pneg %p165
        %p611 = pneg %p162
        %p612 = pneg %p186
        %p613 = pneg %p183
        %p614 = pneg %p207
        %p615 = pneg %p204
        %p616 = pneg %p228
        %p617 = pneg %p225
        %p618 = pneg %p249
        %p619 = pneg %p246
        %p620 = pneg %p270
        %p621 = pneg %p267
        %p622 = pneg %p291
        %p623 = pneg %p288
        %p624 = pneg %p312
        %p625 = pneg %p309
        %p626 = pneg %p333
        %p627 = pneg %p330
        %p629 = scmp.eq.s32.totalorder %s34, 0
        // Predicated region
        $region125: #{tpu_custom_call.1} parent=71 // pred_check
          %p630 = pneg %p629
        $region126: #{tpu_custom_call.1} parent=71 // pred_check_branch
          %632 = sbr.rel (%p630) target = $region128
        $region127: #{tpu_custom_call.1} parent=71 // pred_region
          %v633 = vld [vmem:[#allocation3] sm:$0xff]
          %v634 = vpack.c.bf16 %v633, %v633
          %v635 = vld [vmem:[#allocation6] sm:$0xff]
          %v636 = vld [vmem:[#allocation6 + $0x8] sm:$0xff]
          %v637 = vld [vmem:[#allocation6 + $0x10] sm:$0xff]
          %v638 = vld [vmem:[#allocation6 + $0x18] sm:$0xff]
          %v639 = vld [vmem:[#allocation6 + $0x20] sm:$0xff]
          %v640 = vld [vmem:[#allocation6 + $0x28] sm:$0xff]
          %v641 = vld [vmem:[#allocation6 + $0x30] sm:$0xff]
          %v642 = vld [vmem:[#allocation6 + $0x38] sm:$0xff]
          %v643 = vld [vmem:[#allocation6 + $0x40] sm:$0xff]
          %v644 = vld [vmem:[#allocation6 + $0x48] sm:$0xff]
          %v645 = vld [vmem:[#allocation6 + $0x50] sm:$0xff]
          %v646 = vld [vmem:[#allocation6 + $0x58] sm:$0xff]
          %v647 = vld [vmem:[#allocation6 + $0x60] sm:$0xff]
          %v648 = vld [vmem:[#allocation6 + $0x68] sm:$0xff]
          %v649 = vld [vmem:[#allocation6 + $0x70] sm:$0xff]
          %v650 = vld [vmem:[#allocation6 + $0x78] sm:$0xff]
          %v651 = vld [vmem:[#allocation6 + $0x80] sm:$0xff]
          %v652 = vld [vmem:[#allocation6 + $0x88] sm:$0xff]
          %v653 = vld [vmem:[#allocation6 + $0x90] sm:$0xff]
          %v654 = vld [vmem:[#allocation6 + $0x98] sm:$0xff]
          %v655 = vld [vmem:[#allocation6 + $0xa0] sm:$0xff]
          %v656 = vld [vmem:[#allocation6 + $0xa8] sm:$0xff]
          %v657 = vld [vmem:[#allocation6 + $0xb0] sm:$0xff]
          %v658 = vld [vmem:[#allocation6 + $0xb8] sm:$0xff]
          %v659 = vld [vmem:[#allocation6 + $0xc0] sm:$0xff]
          %v660 = vld [vmem:[#allocation6 + $0xc8] sm:$0xff]
          %v661 = vld [vmem:[#allocation6 + $0xd0] sm:$0xff]
          %v662 = vld [vmem:[#allocation6 + $0xd8] sm:$0xff]
          %v663 = vld [vmem:[#allocation6 + $0xe0] sm:$0xff]
          %v664 = vld [vmem:[#allocation6 + $0xe8] sm:$0xff]
          %v665 = vld [vmem:[#allocation6 + $0xf0] sm:$0xff]
          %v666 = vld [vmem:[#allocation6 + $0xf8] sm:$0xff]
          %v667 = vld [vmem:[#allocation6 + $0x100] sm:$0xff]
          %v668 = vld [vmem:[#allocation6 + $0x108] sm:$0xff]
          %v669 = vld [vmem:[#allocation6 + $0x110] sm:$0xff]
          %v670 = vld [vmem:[#allocation6 + $0x118] sm:$0xff]
          %v671 = vld [vmem:[#allocation6 + $0x120] sm:$0xff]
          %v672 = vld [vmem:[#allocation6 + $0x128] sm:$0xff]
          %v673 = vld [vmem:[#allocation6 + $0x130] sm:$0xff]
          %v674 = vld [vmem:[#allocation6 + $0x138] sm:$0xff]
          %v675 = vld [vmem:[#allocation6 + $0x140] sm:$0xff]
          %v676 = vld [vmem:[#allocation6 + $0x148] sm:$0xff]
          %v677 = vld [vmem:[#allocation6 + $0x150] sm:$0xff]
          %v678 = vld [vmem:[#allocation6 + $0x158] sm:$0xff]
          %v679 = vld [vmem:[#allocation6 + $0x160] sm:$0xff]
          %v680 = vld [vmem:[#allocation6 + $0x168] sm:$0xff]
          %v681 = vld [vmem:[#allocation6 + $0x170] sm:$0xff]
          %v682 = vld [vmem:[#allocation6 + $0x178] sm:$0xff]
          %v683 = vld [vmem:[#allocation6 + $0x180] sm:$0xff]
          %v684 = vld [vmem:[#allocation6 + $0x188] sm:$0xff]
          %v685 = vld [vmem:[#allocation6 + $0x190] sm:$0xff]
          %v686 = vld [vmem:[#allocation6 + $0x198] sm:$0xff]
          %v687 = vld [vmem:[#allocation6 + $0x1a0] sm:$0xff]
          %v688 = vld [vmem:[#allocation6 + $0x1a8] sm:$0xff]
          %v689 = vld [vmem:[#allocation6 + $0x1b0] sm:$0xff]
          %v690 = vld [vmem:[#allocation6 + $0x1b8] sm:$0xff]
          %v691 = vld [vmem:[#allocation6 + $0x1c0] sm:$0xff]
          %v692 = vld [vmem:[#allocation6 + $0x1c8] sm:$0xff]
          %v693 = vld [vmem:[#allocation6 + $0x1d0] sm:$0xff]
          %v694 = vld [vmem:[#allocation6 + $0x1d8] sm:$0xff]
          %v695 = vld [vmem:[#allocation6 + $0x1e0] sm:$0xff]
          %v696 = vld [vmem:[#allocation6 + $0x1e8] sm:$0xff]
          %v697 = vld [vmem:[#allocation6 + $0x1f0] sm:$0xff]
          %v698 = vld [vmem:[#allocation6 + $0x1f8] sm:$0xff]
          %v699 = vld [vmem:[#allocation8] sm:$0xff]
          %v701 = vlaneseq
          %v702 = vshrl.u32 %v701, 7
          %v703 = vsub.s32 0, %v702
          %v704 = vrot.slane %v699, %v703
          %v705 = vlaneseq
          %v706 = vshrl.u32 %v705, 7
          %v707 = vsub.s32 1, %v706
          %v708 = vrot.slane %v699, %v707
          %v709 = vlaneseq
          %v710 = vshrl.u32 %v709, 7
          %v711 = vsub.s32 2, %v710
          %v712 = vrot.slane %v699, %v711
          %v713 = vlaneseq
          %v714 = vshrl.u32 %v713, 7
          %v715 = vsub.s32 3, %v714
          %v716 = vrot.slane %v699, %v715
          %v717 = vlaneseq
          %v718 = vshrl.u32 %v717, 7
          %v719 = vsub.s32 4, %v718
          %v720 = vrot.slane %v699, %v719
          %v721 = vlaneseq
          %v722 = vshrl.u32 %v721, 7
          %v723 = vsub.s32 5, %v722
          %v724 = vrot.slane %v699, %v723
          %v725 = vlaneseq
          %v726 = vshrl.u32 %v725, 7
          %v727 = vsub.s32 6, %v726
          %v728 = vrot.slane %v699, %v727
          %v729 = vlaneseq
          %v730 = vshrl.u32 %v729, 7
          %v731 = vsub.s32 7, %v730
          %v732 = vrot.slane %v699, %v731
          %v805 = vunpack.c.l.b16 %v635
          %v806 = vunpack.c.h.b16 %v635
          %v807 = vunpack.c.l.b16 %v636
          %v808 = vunpack.c.h.b16 %v636
          %v809 = vunpack.c.l.b16 %v637
          %v810 = vunpack.c.h.b16 %v637
          %v811 = vunpack.c.l.b16 %v638
          %v812 = vunpack.c.h.b16 %v638
          %v813 = vunpack.c.l.b16 %v639
          %v814 = vunpack.c.h.b16 %v639
          %v815 = vunpack.c.l.b16 %v640
          %v816 = vunpack.c.h.b16 %v640
          %v817 = vunpack.c.l.b16 %v641
          %v818 = vunpack.c.h.b16 %v641
          %v819 = vunpack.c.l.b16 %v642
          %v820 = vunpack.c.h.b16 %v642
          %v821 = vunpack.c.l.b16 %v643
          %v822 = vunpack.c.h.b16 %v643
          %v823 = vunpack.c.l.b16 %v644
          %v824 = vunpack.c.h.b16 %v644
          %v825 = vunpack.c.l.b16 %v645
          %v826 = vunpack.c.h.b16 %v645
          %v827 = vunpack.c.l.b16 %v646
          %v828 = vunpack.c.h.b16 %v646
          %v829 = vunpack.c.l.b16 %v647
          %v830 = vunpack.c.h.b16 %v647
          %v831 = vunpack.c.l.b16 %v648
          %v832 = vunpack.c.h.b16 %v648
          %v833 = vunpack.c.l.b16 %v649
          %v834 = vunpack.c.h.b16 %v649
          %v835 = vunpack.c.l.b16 %v650
          %v836 = vunpack.c.h.b16 %v650
          %v837 = vunpack.c.l.b16 %v651
          %v838 = vunpack.c.h.b16 %v651
          %v839 = vunpack.c.l.b16 %v652
          %v840 = vunpack.c.h.b16 %v652
          %v841 = vunpack.c.l.b16 %v653
          %v842 = vunpack.c.h.b16 %v653
          %v843 = vunpack.c.l.b16 %v654
          %v844 = vunpack.c.h.b16 %v654
          %v845 = vunpack.c.l.b16 %v655
          %v846 = vunpack.c.h.b16 %v655
          %v847 = vunpack.c.l.b16 %v656
          %v848 = vunpack.c.h.b16 %v656
          %v849 = vunpack.c.l.b16 %v657
          %v850 = vunpack.c.h.b16 %v657
          %v851 = vunpack.c.l.b16 %v658
          %v852 = vunpack.c.h.b16 %v658
          %v853 = vunpack.c.l.b16 %v659
          %v854 = vunpack.c.h.b16 %v659
          %v855 = vunpack.c.l.b16 %v660
          %v856 = vunpack.c.h.b16 %v660
          %v857 = vunpack.c.l.b16 %v661
          %v858 = vunpack.c.h.b16 %v661
          %v859 = vunpack.c.l.b16 %v662
          %v860 = vunpack.c.h.b16 %v662
          %v861 = vunpack.c.l.b16 %v663
          %v862 = vunpack.c.h.b16 %v663
          %v863 = vunpack.c.l.b16 %v664
          %v864 = vunpack.c.h.b16 %v664
          %v865 = vunpack.c.l.b16 %v665
          %v866 = vunpack.c.h.b16 %v665
          %v867 = vunpack.c.l.b16 %v666
          %v868 = vunpack.c.h.b16 %v666
          %v869 = vunpack.c.l.b16 %v667
          %v870 = vunpack.c.h.b16 %v667
          %v871 = vunpack.c.l.b16 %v668
          %v872 = vunpack.c.h.b16 %v668
          %v873 = vunpack.c.l.b16 %v669
          %v874 = vunpack.c.h.b16 %v669
          %v875 = vunpack.c.l.b16 %v670
          %v876 = vunpack.c.h.b16 %v670
          %v877 = vunpack.c.l.b16 %v671
          %v878 = vunpack.c.h.b16 %v671
          %v879 = vunpack.c.l.b16 %v672
          %v880 = vunpack.c.h.b16 %v672
          %v881 = vunpack.c.l.b16 %v673
          %v882 = vunpack.c.h.b16 %v673
          %v883 = vunpack.c.l.b16 %v674
          %v884 = vunpack.c.h.b16 %v674
          %v885 = vunpack.c.l.b16 %v675
          %v886 = vunpack.c.h.b16 %v675
          %v887 = vunpack.c.l.b16 %v676
          %v888 = vunpack.c.h.b16 %v676
          %v889 = vunpack.c.l.b16 %v677
          %v890 = vunpack.c.h.b16 %v677
          %v891 = vunpack.c.l.b16 %v678
          %v892 = vunpack.c.h.b16 %v678
          %v893 = vunpack.c.l.b16 %v679
          %v894 = vunpack.c.h.b16 %v679
          %v895 = vunpack.c.l.b16 %v680
          %v896 = vunpack.c.h.b16 %v680
          %v897 = vunpack.c.l.b16 %v681
          %v898 = vunpack.c.h.b16 %v681
          %v899 = vunpack.c.l.b16 %v682
          %v900 = vunpack.c.h.b16 %v682
          %v901 = vunpack.c.l.b16 %v683
          %v902 = vunpack.c.h.b16 %v683
          %v903 = vunpack.c.l.b16 %v684
          %v904 = vunpack.c.h.b16 %v684
          %v905 = vunpack.c.l.b16 %v685
          %v906 = vunpack.c.h.b16 %v685
          %v907 = vunpack.c.l.b16 %v686
          %v908 = vunpack.c.h.b16 %v686
          %v909 = vunpack.c.l.b16 %v687
          %v910 = vunpack.c.h.b16 %v687
          %v911 = vunpack.c.l.b16 %v688
          %v912 = vunpack.c.h.b16 %v688
          %v913 = vunpack.c.l.b16 %v689
          %v914 = vunpack.c.h.b16 %v689
          %v915 = vunpack.c.l.b16 %v690
          %v916 = vunpack.c.h.b16 %v690
          %v917 = vunpack.c.l.b16 %v691
          %v918 = vunpack.c.h.b16 %v691
          %v919 = vunpack.c.l.b16 %v692
          %v920 = vunpack.c.h.b16 %v692
          %v921 = vunpack.c.l.b16 %v693
          %v922 = vunpack.c.h.b16 %v693
          %v923 = vunpack.c.l.b16 %v694
          %v924 = vunpack.c.h.b16 %v694
          %v925 = vunpack.c.l.b16 %v695
          %v926 = vunpack.c.h.b16 %v695
          %v927 = vunpack.c.l.b16 %v696
          %v928 = vunpack.c.h.b16 %v696
          %v929 = vunpack.c.l.b16 %v697
          %v930 = vunpack.c.h.b16 %v697
          %v931 = vunpack.c.l.b16 %v698
          %v932 = vunpack.c.h.b16 %v698
          %v933 = vpack.c.b16 %v813, %v805
          %v934 = vpack.c.b16 %v814, %v806
          %v935 = vpack.c.b16 %v815, %v807
          %v936 = vpack.c.b16 %v816, %v808
          %v937 = vpack.c.b16 %v817, %v809
          %v938 = vpack.c.b16 %v818, %v810
          %v939 = vpack.c.b16 %v819, %v811
          %v940 = vpack.c.b16 %v820, %v812
          %v941 = vpack.c.b16 %v829, %v821
          %v942 = vpack.c.b16 %v830, %v822
          %v943 = vpack.c.b16 %v831, %v823
          %v944 = vpack.c.b16 %v832, %v824
          %v945 = vpack.c.b16 %v833, %v825
          %v946 = vpack.c.b16 %v834, %v826
          %v947 = vpack.c.b16 %v835, %v827
          %v948 = vpack.c.b16 %v836, %v828
          %v949 = vpack.c.b16 %v845, %v837
          %v950 = vpack.c.b16 %v846, %v838
          %v951 = vpack.c.b16 %v847, %v839
          %v952 = vpack.c.b16 %v848, %v840
          %v953 = vpack.c.b16 %v849, %v841
          %v954 = vpack.c.b16 %v850, %v842
          %v955 = vpack.c.b16 %v851, %v843
          %v956 = vpack.c.b16 %v852, %v844
          %v957 = vpack.c.b16 %v861, %v853
          %v958 = vpack.c.b16 %v862, %v854
          %v959 = vpack.c.b16 %v863, %v855
          %v960 = vpack.c.b16 %v864, %v856
          %v961 = vpack.c.b16 %v865, %v857
          %v962 = vpack.c.b16 %v866, %v858
          %v963 = vpack.c.b16 %v867, %v859
          %v964 = vpack.c.b16 %v868, %v860
          %v965 = vpack.c.b16 %v877, %v869
          %v966 = vpack.c.b16 %v878, %v870
          %v967 = vpack.c.b16 %v879, %v871
          %v968 = vpack.c.b16 %v880, %v872
          %v969 = vpack.c.b16 %v881, %v873
          %v970 = vpack.c.b16 %v882, %v874
          %v971 = vpack.c.b16 %v883, %v875
          %v972 = vpack.c.b16 %v884, %v876
          %v973 = vpack.c.b16 %v893, %v885
          %v974 = vpack.c.b16 %v894, %v886
          %v975 = vpack.c.b16 %v895, %v887
          %v976 = vpack.c.b16 %v896, %v888
          %v977 = vpack.c.b16 %v897, %v889
          %v978 = vpack.c.b16 %v898, %v890
          %v979 = vpack.c.b16 %v899, %v891
          %v980 = vpack.c.b16 %v900, %v892
          %v981 = vpack.c.b16 %v909, %v901
          %v982 = vpack.c.b16 %v910, %v902
          %v983 = vpack.c.b16 %v911, %v903
          %v984 = vpack.c.b16 %v912, %v904
          %v985 = vpack.c.b16 %v913, %v905
          %v986 = vpack.c.b16 %v914, %v906
          %v987 = vpack.c.b16 %v915, %v907
          %v988 = vpack.c.b16 %v916, %v908
          %v989 = vpack.c.b16 %v925, %v917
          %v990 = vpack.c.b16 %v926, %v918
          %v991 = vpack.c.b16 %v927, %v919
          %v992 = vpack.c.b16 %v928, %v920
          %v993 = vpack.c.b16 %v929, %v921
          %v994 = vpack.c.b16 %v930, %v922
          %v995 = vpack.c.b16 %v931, %v923
          %v996 = vpack.c.b16 %v932, %v924
          %1061 = vmatprep.subr.bf16.mxu0 %v934
          %1062 = vmatpush1.bf16.msra.mxu0 %v933
          %1063 = vmatprep.subr.bf16.mxu0 %v942
          %1064 = vmatpush1.bf16.msra.mxu0 %v941
          %1065 = vmatprep.subr.bf16.mxu0 %v950
          %1066 = vmatpush1.bf16.msra.mxu0 %v949
          %1067 = vmatprep.subr.bf16.mxu0 %v958
          %1068 = vmatpush1.bf16.msra.mxu0 %v957
          %1069 = vmatprep.subr.bf16.mxu0 %v966
          %1070 = vmatpush1.bf16.msra.mxu0 %v965
          %1071 = vmatprep.subr.bf16.mxu0 %v974
          %1072 = vmatpush1.bf16.msra.mxu0 %v973
          %1073 = vmatprep.subr.bf16.mxu0 %v982
          %1074 = vmatpush1.bf16.msra.mxu0 %v981
          %1075 = vmatprep.subr.bf16.mxu0 %v990
          %1076 = vmatpush1.bf16.msra.mxu0 %v989
          %1077 = vmatprep.subr.bf16.mxu0 0
          %1078 = vmatpush1.bf16.msra.mxu0 0
          %1079 = vmatprep.subr.bf16.mxu0 0
          %1080 = vmatpush1.bf16.msra.mxu0 0
          %1081 = vmatprep.subr.bf16.mxu0 0
          %1082 = vmatpush1.bf16.msra.mxu0 0
          %1083 = vmatprep.subr.bf16.mxu0 0
          %1084 = vmatpush1.bf16.msra.mxu0 0
          %1085 = vmatprep.subr.bf16.mxu0 0
          %1086 = vmatpush1.bf16.msra.mxu0 0
          %1087 = vmatprep.subr.bf16.mxu0 0
          %1088 = vmatpush1.bf16.msra.mxu0 0
          %1089 = vmatprep.subr.bf16.mxu0 0
          %1090 = vmatpush1.bf16.msra.mxu0 0
          %1091 = vmatprep.subr.bf16.mxu0 0
          %1092 = vmatpush1.bf16.msra.mxu0 0
          %1093 = vmatprep.mubr.bf16.mxu0 0
          %1094 = vmatmul.mubr.bf16.gmra.mrb[0].mxu0 %v634
          %v1095 = vpop.f32.mrb[0].mxu0
          %v1096 = vadd.f32 %v704, %v1095
          %v1097 = vpop.f32.mrb[0].mxu0
          %v1098 = vadd.f32 %v708, %v1097
          %v1099 = vpop.f32.mrb[0].mxu0
          %v1100 = vpop.f32.mrb[0].mxu0
          %1101 = vdwg.mxu0
          %1102 = vmatprep.subr.bf16.mxu0 %v936
          %1103 = vmatpush1.bf16.msra.mxu0 %v935
          %1104 = vmatprep.subr.bf16.mxu0 %v944
          %1105 = vmatpush1.bf16.msra.mxu0 %v943
          %1106 = vmatprep.subr.bf16.mxu0 %v952
          %1107 = vmatpush1.bf16.msra.mxu0 %v951
          %1108 = vmatprep.subr.bf16.mxu0 %v960
          %1109 = vmatpush1.bf16.msra.mxu0 %v959
          %1110 = vmatprep.subr.bf16.mxu0 %v968
          %1111 = vmatpush1.bf16.msra.mxu0 %v967
          %1112 = vmatprep.subr.bf16.mxu0 %v976
          %1113 = vmatpush1.bf16.msra.mxu0 %v975
          %1114 = vmatprep.subr.bf16.mxu0 %v984
          %1115 = vmatpush1.bf16.msra.mxu0 %v983
          %1116 = vmatprep.subr.bf16.mxu0 %v992
          %1117 = vmatpush1.bf16.msra.mxu0 %v991
          %1118 = vmatprep.subr.bf16.mxu0 0
          %1119 = vmatpush1.bf16.msra.mxu0 0
          %1120 = vmatprep.subr.bf16.mxu0 0
          %1121 = vmatpush1.bf16.msra.mxu0 0
          %1122 = vmatprep.subr.bf16.mxu0 0
          %1123 = vmatpush1.bf16.msra.mxu0 0
          %1124 = vmatprep.subr.bf16.mxu0 0
          %1125 = vmatpush1.bf16.msra.mxu0 0
          %1126 = vmatprep.subr.bf16.mxu0 0
          %1127 = vmatpush1.bf16.msra.mxu0 0
          %1128 = vmatprep.subr.bf16.mxu0 0
          %1129 = vmatpush1.bf16.msra.mxu0 0
          %1130 = vmatprep.subr.bf16.mxu0 0
          %1131 = vmatpush1.bf16.msra.mxu0 0
          %1132 = vmatprep.subr.bf16.mxu0 0
          %1133 = vmatpush1.bf16.msra.mxu0 0
          %1134 = vmatprep.mubr.bf16.mxu0 0
          %1135 = vmatmul.mubr.bf16.gmra.mrb[0].mxu0 %v634
          %v1136 = vpop.f32.mrb[0].mxu0
          %v1137 = vadd.f32 %v712, %v1136
          %v1138 = vpop.f32.mrb[0].mxu0
          %v1139 = vadd.f32 %v716, %v1138
          %v1140 = vpop.f32.mrb[0].mxu0
          %v1141 = vpop.f32.mrb[0].mxu0
          %1142 = vdwg.mxu0
          %1143 = vmatprep.subr.bf16.mxu0 %v938
          %1144 = vmatpush1.bf16.msra.mxu0 %v937
          %1145 = vmatprep.subr.bf16.mxu0 %v946
          %1146 = vmatpush1.bf16.msra.mxu0 %v945
          %1147 = vmatprep.subr.bf16.mxu0 %v954
          %1148 = vmatpush1.bf16.msra.mxu0 %v953
          %1149 = vmatprep.subr.bf16.mxu0 %v962
          %1150 = vmatpush1.bf16.msra.mxu0 %v961
          %1151 = vmatprep.subr.bf16.mxu0 %v970
          %1152 = vmatpush1.bf16.msra.mxu0 %v969
          %1153 = vmatprep.subr.bf16.mxu0 %v978
          %1154 = vmatpush1.bf16.msra.mxu0 %v977
          %1155 = vmatprep.subr.bf16.mxu0 %v986
          %1156 = vmatpush1.bf16.msra.mxu0 %v985
          %1157 = vmatprep.subr.bf16.mxu0 %v994
          %1158 = vmatpush1.bf16.msra.mxu0 %v993
          %1159 = vmatprep.subr.bf16.mxu0 0
          %1160 = vmatpush1.bf16.msra.mxu0 0
          %1161 = vmatprep.subr.bf16.mxu0 0
          %1162 = vmatpush1.bf16.msra.mxu0 0
          %1163 = vmatprep.subr.bf16.mxu0 0
          %1164 = vmatpush1.bf16.msra.mxu0 0
          %1165 = vmatprep.subr.bf16.mxu0 0
          %1166 = vmatpush1.bf16.msra.mxu0 0
          %1167 = vmatprep.subr.bf16.mxu0 0
          %1168 = vmatpush1.bf16.msra.mxu0 0
          %1169 = vmatprep.subr.bf16.mxu0 0
          %1170 = vmatpush1.bf16.msra.mxu0 0
          %1171 = vmatprep.subr.bf16.mxu0 0
          %1172 = vmatpush1.bf16.msra.mxu0 0
          %1173 = vmatprep.subr.bf16.mxu0 0
          %1174 = vmatpush1.bf16.msra.mxu0 0
          %1175 = vmatprep.mubr.bf16.mxu0 0
          %1176 = vmatmul.mubr.bf16.gmra.mrb[0].mxu0 %v634
          %v1177 = vpop.f32.mrb[0].mxu0
          %v1178 = vadd.f32 %v720, %v1177
          %v1179 = vpop.f32.mrb[0].mxu0
          %v1180 = vadd.f32 %v724, %v1179
          %v1181 = vpop.f32.mrb[0].mxu0
          %v1182 = vpop.f32.mrb[0].mxu0
          %1183 = vdwg.mxu0
          %1184 = vmatprep.subr.bf16.mxu0 %v940
          %1185 = vmatpush1.bf16.msra.mxu0 %v939
          %1186 = vmatprep.subr.bf16.mxu0 %v948
          %1187 = vmatpush1.bf16.msra.mxu0 %v947
          %1188 = vmatprep.subr.bf16.mxu0 %v956
          %1189 = vmatpush1.bf16.msra.mxu0 %v955
          %1190 = vmatprep.subr.bf16.mxu0 %v964
          %1191 = vmatpush1.bf16.msra.mxu0 %v963
          %1192 = vmatprep.subr.bf16.mxu0 %v972
          %1193 = vmatpush1.bf16.msra.mxu0 %v971
          %1194 = vmatprep.subr.bf16.mxu0 %v980
          %1195 = vmatpush1.bf16.msra.mxu0 %v979
          %1196 = vmatprep.subr.bf16.mxu0 %v988
          %1197 = vmatpush1.bf16.msra.mxu0 %v987
          %1198 = vmatprep.subr.bf16.mxu0 %v996
          %1199 = vmatpush1.bf16.msra.mxu0 %v995
          %1200 = vmatprep.subr.bf16.mxu0 0
          %1201 = vmatpush1.bf16.msra.mxu0 0
          %1202 = vmatprep.subr.bf16.mxu0 0
          %1203 = vmatpush1.bf16.msra.mxu0 0
          %1204 = vmatprep.subr.bf16.mxu0 0
          %1205 = vmatpush1.bf16.msra.mxu0 0
          %1206 = vmatprep.subr.bf16.mxu0 0
          %1207 = vmatpush1.bf16.msra.mxu0 0
          %1208 = vmatprep.subr.bf16.mxu0 0
          %1209 = vmatpush1.bf16.msra.mxu0 0
          %1210 = vmatprep.subr.bf16.mxu0 0
          %1211 = vmatpush1.bf16.msra.mxu0 0
          %1212 = vmatprep.subr.bf16.mxu0 0
          %1213 = vmatpush1.bf16.msra.mxu0 0
          %1214 = vmatprep.subr.bf16.mxu0 0
          %1215 = vmatpush1.bf16.msra.mxu0 0
          %1216 = vmatprep.mubr.bf16.mxu0 0
          %1217 = vmatmul.mubr.bf16.gmra.mrb[0].mxu0 %v634
          %v1218 = vpop.f32.mrb[0].mxu0
          %v1219 = vadd.f32 %v728, %v1218
          %v1220 = vpop.f32.mrb[0].mxu0
          %v1221 = vadd.f32 %v732, %v1220
          %v1222 = vpop.f32.mrb[0].mxu0
          %v1223 = vpop.f32.mrb[0].mxu0
          %1224 = vdwg.mxu0
          %v1225 = vmax.f32 %v1096, 0.0
          %v1226 = vmax.f32 %v1098, 0.0
          %v1227 = vmax.f32 %v1137, 0.0
          %v1228 = vmax.f32 %v1139, 0.0
          %v1229 = vmax.f32 %v1178, 0.0
          %v1230 = vmax.f32 %v1180, 0.0
          %v1231 = vmax.f32 %v1219, 0.0
          %v1232 = vmax.f32 %v1221, 0.0
          %1233 = vst [vmem:[#allocation2] sm:$0xff] %v1225
          %1234 = vst [vmem:[#allocation2 + $0x8] sm:$0xff] %v1226
          %1235 = vst [vmem:[#allocation2 + $0x10] sm:$0xff] %v1227
          %1236 = vst [vmem:[#allocation2 + $0x18] sm:$0xff] %v1228
          %1237 = vst [vmem:[#allocation2 + $0x20] sm:$0xff] %v1229
          %1238 = vst [vmem:[#allocation2 + $0x28] sm:$0xff] %v1230
          %1239 = vst [vmem:[#allocation2 + $0x30] sm:$0xff] %v1231
          %1240 = vst [vmem:[#allocation2 + $0x38] sm:$0xff] %v1232
        $region128: #{tpu_custom_call.1} parent=71 // pred_fallthru
          _
        %v1241 = vld [vmem:[#allocation2] sm:$0xff]
        %v1242 = vld [vmem:[#allocation2 + $0x8] sm:$0xff]
        %v1243 = vld [vmem:[#allocation2 + $0x10] sm:$0xff]
        %v1244 = vld [vmem:[#allocation2 + $0x18] sm:$0xff]
        %v1245 = vld [vmem:[#allocation2 + $0x20] sm:$0xff]
        %v1246 = vld [vmem:[#allocation2 + $0x28] sm:$0xff]
        %v1247 = vld [vmem:[#allocation2 + $0x30] sm:$0xff]
        %v1248 = vld [vmem:[#allocation2 + $0x38] sm:$0xff]
        %s1249 = sshra.s32 %s34, 1
        %s1250 = sand.u32 %s34, 1
        %s1251 = sshra.s32 %s34, 1
        %s1252 = sand.u32 %s34, 1
        %s1253 = smul.u32 %s1249, 8
        %s1254 = smul.u32 %s1253, 2
        %s1255 = sadd.s32 %s1254, %s1252
        %s1256 = scalar_lea.vmem [#allocation12], %s1255
        %v1257 = vld [vmem:[%s1256] ss:$2 sm:$0xff]
        %s1258 = scalar_lea.vmem [#allocation14], %s1255
        %v1259 = vld [vmem:[%s1258] ss:$2 sm:$0xff]
        %s1260 = scalar_lea.vmem [#allocation15], %s1255
        %v1261 = vld [vmem:[%s1260] ss:$2 sm:$0xff]
        %s1262 = scalar_lea.vmem [#allocation17], %s1255
        %v1263 = vld [vmem:[%s1262] ss:$2 sm:$0xff]
        %v1264 = vpack.c.bf16 %v1241, %v1241
        %v1265 = vpack.c.bf16 %v1242, %v1242
        %v1266 = vpack.c.bf16 %v1243, %v1243
        %v1267 = vpack.c.bf16 %v1244, %v1244
        %v1268 = vpack.c.bf16 %v1245, %v1245
        %v1269 = vpack.c.bf16 %v1246, %v1246
        %v1270 = vpack.c.bf16 %v1247, %v1247
        %v1271 = vpack.c.bf16 %v1248, %v1248
        %v1272 = vld [vmem:[%s544] sm:$0xff]
        %v1273 = vld [vmem:[%s544 + $0x8] sm:$0xff]
        %v1274 = vld [vmem:[%s544 + $0x10] sm:$0xff]
        %v1275 = vld [vmem:[%s544 + $0x18] sm:$0xff]
        %v1276 = vld [vmem:[%s544 + $0x20] sm:$0xff]
        %v1277 = vld [vmem:[%s544 + $0x28] sm:$0xff]
        %v1278 = vld [vmem:[%s544 + $0x30] sm:$0xff]
        %v1279 = vld [vmem:[%s544 + $0x38] sm:$0xff]
        %v1280 = vld [vmem:[%s544 + $0x40] sm:$0xff]
        %v1281 = vld [vmem:[%s544 + $0x48] sm:$0xff]
        %v1282 = vld [vmem:[%s544 + $0x50] sm:$0xff]
        %v1283 = vld [vmem:[%s544 + $0x58] sm:$0xff]
        %v1284 = vld [vmem:[%s544 + $0x60] sm:$0xff]
        %v1285 = vld [vmem:[%s544 + $0x68] sm:$0xff]
        %v1286 = vld [vmem:[%s544 + $0x70] sm:$0xff]
        %v1287 = vld [vmem:[%s544 + $0x78] sm:$0xff]
        %v1288 = vld [vmem:[%s544 + $0x80] sm:$0xff]
        %v1289 = vld [vmem:[%s544 + $0x88] sm:$0xff]
        %v1290 = vld [vmem:[%s544 + $0x90] sm:$0xff]
        %v1291 = vld [vmem:[%s544 + $0x98] sm:$0xff]
        %v1292 = vld [vmem:[%s544 + $0xa0] sm:$0xff]
        %v1293 = vld [vmem:[%s544 + $0xa8] sm:$0xff]
        %v1294 = vld [vmem:[%s544 + $0xb0] sm:$0xff]
        %v1295 = vld [vmem:[%s544 + $0xb8] sm:$0xff]
        %v1296 = vld [vmem:[%s544 + $0xc0] sm:$0xff]
        %v1297 = vld [vmem:[%s544 + $0xc8] sm:$0xff]
        %v1298 = vld [vmem:[%s544 + $0xd0] sm:$0xff]
        %v1299 = vld [vmem:[%s544 + $0xd8] sm:$0xff]
        %v1300 = vld [vmem:[%s544 + $0xe0] sm:$0xff]
        %v1301 = vld [vmem:[%s544 + $0xe8] sm:$0xff]
        %v1302 = vld [vmem:[%s544 + $0xf0] sm:$0xff]
        %v1303 = vld [vmem:[%s544 + $0xf8] sm:$0xff]
        %v1304 = vld [vmem:[%s544 + $0x100] sm:$0xff]
        %v1305 = vld [vmem:[%s544 + $0x108] sm:$0xff]
        %v1306 = vld [vmem:[%s544 + $0x110] sm:$0xff]
        %v1307 = vld [vmem:[%s544 + $0x118] sm:$0xff]
        %v1308 = vld [vmem:[%s544 + $0x120] sm:$0xff]
        %v1309 = vld [vmem:[%s544 + $0x128] sm:$0xff]
        %v1310 = vld [vmem:[%s544 + $0x130] sm:$0xff]
        %v1311 = vld [vmem:[%s544 + $0x138] sm:$0xff]
        %v1312 = vld [vmem:[%s544 + $0x140] sm:$0xff]
        %v1313 = vld [vmem:[%s544 + $0x148] sm:$0xff]
        %v1314 = vld [vmem:[%s544 + $0x150] sm:$0xff]
        %v1315 = vld [vmem:[%s544 + $0x158] sm:$0xff]
        %v1316 = vld [vmem:[%s544 + $0x160] sm:$0xff]
        %v1317 = vld [vmem:[%s544 + $0x168] sm:$0xff]
        %v1318 = vld [vmem:[%s544 + $0x170] sm:$0xff]
        %v1319 = vld [vmem:[%s544 + $0x178] sm:$0xff]
        %v1320 = vld [vmem:[%s544 + $0x180] sm:$0xff]
        %v1321 = vld [vmem:[%s544 + $0x188] sm:$0xff]
        %v1322 = vld [vmem:[%s544 + $0x190] sm:$0xff]
        %v1323 = vld [vmem:[%s544 + $0x198] sm:$0xff]
        %v1324 = vld [vmem:[%s544 + $0x1a0] sm:$0xff]
        %v1325 = vld [vmem:[%s544 + $0x1a8] sm:$0xff]
        %v1326 = vld [vmem:[%s544 + $0x1b0] sm:$0xff]
        %v1327 = vld [vmem:[%s544 + $0x1b8] sm:$0xff]
        %v1328 = vld [vmem:[%s544 + $0x1c0] sm:$0xff]
        %v1329 = vld [vmem:[%s544 + $0x1c8] sm:$0xff]
        %v1330 = vld [vmem:[%s544 + $0x1d0] sm:$0xff]
        %v1331 = vld [vmem:[%s544 + $0x1d8] sm:$0xff]
        %v1332 = vld [vmem:[%s544 + $0x1e0] sm:$0xff]
        %v1333 = vld [vmem:[%s544 + $0x1e8] sm:$0xff]
        %v1334 = vld [vmem:[%s544 + $0x1f0] sm:$0xff]
        %v1335 = vld [vmem:[%s544 + $0x1f8] sm:$0xff]
        %v1336 = vld [vmem:[%s544 + $0x200] sm:$0xff]
        %v1337 = vld [vmem:[%s544 + $0x208] sm:$0xff]
        %v1338 = vld [vmem:[%s544 + $0x210] sm:$0xff]
        %v1339 = vld [vmem:[%s544 + $0x218] sm:$0xff]
        %v1340 = vld [vmem:[%s544 + $0x220] sm:$0xff]
        %v1341 = vld [vmem:[%s544 + $0x228] sm:$0xff]
        %v1342 = vld [vmem:[%s544 + $0x230] sm:$0xff]
        %v1343 = vld [vmem:[%s544 + $0x238] sm:$0xff]
        %v1344 = vld [vmem:[%s544 + $0x240] sm:$0xff]
        %v1345 = vld [vmem:[%s544 + $0x248] sm:$0xff]
        %v1346 = vld [vmem:[%s544 + $0x250] sm:$0xff]
        %v1347 = vld [vmem:[%s544 + $0x258] sm:$0xff]
        %v1348 = vld [vmem:[%s544 + $0x260] sm:$0xff]
        %v1349 = vld [vmem:[%s544 + $0x268] sm:$0xff]
        %v1350 = vld [vmem:[%s544 + $0x270] sm:$0xff]
        %v1351 = vld [vmem:[%s544 + $0x278] sm:$0xff]
        %v1352 = vld [vmem:[%s544 + $0x280] sm:$0xff]
        %v1353 = vld [vmem:[%s544 + $0x288] sm:$0xff]
        %v1354 = vld [vmem:[%s544 + $0x290] sm:$0xff]
        %v1355 = vld [vmem:[%s544 + $0x298] sm:$0xff]
        %v1356 = vld [vmem:[%s544 + $0x2a0] sm:$0xff]
        %v1357 = vld [vmem:[%s544 + $0x2a8] sm:$0xff]
        %v1358 = vld [vmem:[%s544 + $0x2b0] sm:$0xff]
        %v1359 = vld [vmem:[%s544 + $0x2b8] sm:$0xff]
        %v1360 = vld [vmem:[%s544 + $0x2c0] sm:$0xff]
        %v1361 = vld [vmem:[%s544 + $0x2c8] sm:$0xff]
        %v1362 = vld [vmem:[%s544 + $0x2d0] sm:$0xff]
        %v1363 = vld [vmem:[%s544 + $0x2d8] sm:$0xff]
        %v1364 = vld [vmem:[%s544 + $0x2e0] sm:$0xff]
        %v1365 = vld [vmem:[%s544 + $0x2e8] sm:$0xff]
        %v1366 = vld [vmem:[%s544 + $0x2f0] sm:$0xff]
        %v1367 = vld [vmem:[%s544 + $0x2f8] sm:$0xff]
        %v1368 = vld [vmem:[%s544 + $0x300] sm:$0xff]
        %v1369 = vld [vmem:[%s544 + $0x308] sm:$0xff]
        %v1370 = vld [vmem:[%s544 + $0x310] sm:$0xff]
        %v1371 = vld [vmem:[%s544 + $0x318] sm:$0xff]
        %v1372 = vld [vmem:[%s544 + $0x320] sm:$0xff]
        %v1373 = vld [vmem:[%s544 + $0x328] sm:$0xff]
        %v1374 = vld [vmem:[%s544 + $0x330] sm:$0xff]
        %v1375 = vld [vmem:[%s544 + $0x338] sm:$0xff]
        %v1376 = vld [vmem:[%s544 + $0x340] sm:$0xff]
        %v1377 = vld [vmem:[%s544 + $0x348] sm:$0xff]
        %v1378 = vld [vmem:[%s544 + $0x350] sm:$0xff]
        %v1379 = vld [vmem:[%s544 + $0x358] sm:$0xff]
        %v1380 = vld [vmem:[%s544 + $0x360] sm:$0xff]
        %v1381 = vld [vmem:[%s544 + $0x368] sm:$0xff]
        %v1382 = vld [vmem:[%s544 + $0x370] sm:$0xff]
        %v1383 = vld [vmem:[%s544 + $0x378] sm:$0xff]
        %v1384 = vld [vmem:[%s544 + $0x380] sm:$0xff]
        %v1385 = vld [vmem:[%s544 + $0x388] sm:$0xff]
        %v1386 = vld [vmem:[%s544 + $0x390] sm:$0xff]
        %v1387 = vld [vmem:[%s544 + $0x398] sm:$0xff]
        %v1388 = vld [vmem:[%s544 + $0x3a0] sm:$0xff]
        %v1389 = vld [vmem:[%s544 + $0x3a8] sm:$0xff]
        %v1390 = vld [vmem:[%s544 + $0x3b0] sm:$0xff]
        %v1391 = vld [vmem:[%s544 + $0x3b8] sm:$0xff]
        %v1392 = vld [vmem:[%s544 + $0x3c0] sm:$0xff]
        %v1393 = vld [vmem:[%s544 + $0x3c8] sm:$0xff]
        %v1394 = vld [vmem:[%s544 + $0x3d0] sm:$0xff]
        %v1395 = vld [vmem:[%s544 + $0x3d8] sm:$0xff]
        %v1396 = vld [vmem:[%s544 + $0x3e0] sm:$0xff]
        %v1397 = vld [vmem:[%s544 + $0x3e8] sm:$0xff]
        %v1398 = vld [vmem:[%s544 + $0x3f0] sm:$0xff]
        %v1399 = vld [vmem:[%s544 + $0x3f8] sm:$0xff]
        %v1400 = vld [vmem:[%s544 + $0x400] sm:$0xff]
        %v1401 = vld [vmem:[%s544 + $0x408] sm:$0xff]
        %v1402 = vld [vmem:[%s544 + $0x410] sm:$0xff]
        %v1403 = vld [vmem:[%s544 + $0x418] sm:$0xff]
        %v1404 = vld [vmem:[%s544 + $0x420] sm:$0xff]
        %v1405 = vld [vmem:[%s544 + $0x428] sm:$0xff]
        %v1406 = vld [vmem:[%s544 + $0x430] sm:$0xff]
        %v1407 = vld [vmem:[%s544 + $0x438] sm:$0xff]
        %v1408 = vld [vmem:[%s544 + $0x440] sm:$0xff]
        %v1409 = vld [vmem:[%s544 + $0x448] sm:$0xff]
        %v1410 = vld [vmem:[%s544 + $0x450] sm:$0xff]
        %v1411 = vld [vmem:[%s544 + $0x458] sm:$0xff]
        %v1412 = vld [vmem:[%s544 + $0x460] sm:$0xff]
        %v1413 = vld [vmem:[%s544 + $0x468] sm:$0xff]
        %v1414 = vld [vmem:[%s544 + $0x470] sm:$0xff]
        %v1415 = vld [vmem:[%s544 + $0x478] sm:$0xff]
        %v1416 = vld [vmem:[%s544 + $0x480] sm:$0xff]
        %v1417 = vld [vmem:[%s544 + $0x488] sm:$0xff]
        %v1418 = vld [vmem:[%s544 + $0x490] sm:$0xff]
        %v1419 = vld [vmem:[%s544 + $0x498] sm:$0xff]
        %v1420 = vld [vmem:[%s544 + $0x4a0] sm:$0xff]
        %v1421 = vld [vmem:[%s544 + $0x4a8] sm:$0xff]
        %v1422 = vld [vmem:[%s544 + $0x4b0] sm:$0xff]
        %v1423 = vld [vmem:[%s544 + $0x4b8] sm:$0xff]
        %v1424 = vld [vmem:[%s544 + $0x4c0] sm:$0xff]
        %v1425 = vld [vmem:[%s544 + $0x4c8] sm:$0xff]
        %v1426 = vld [vmem:[%s544 + $0x4d0] sm:$0xff]
        %v1427 = vld [vmem:[%s544 + $0x4d8] sm:$0xff]
        %v1428 = vld [vmem:[%s544 + $0x4e0] sm:$0xff]
        %v1429 = vld [vmem:[%s544 + $0x4e8] sm:$0xff]
        %v1430 = vld [vmem:[%s544 + $0x4f0] sm:$0xff]
        %v1431 = vld [vmem:[%s544 + $0x4f8] sm:$0xff]
        %v1432 = vld [vmem:[%s544 + $0x500] sm:$0xff]
        %v1433 = vld [vmem:[%s544 + $0x508] sm:$0xff]
        %v1434 = vld [vmem:[%s544 + $0x510] sm:$0xff]
        %v1435 = vld [vmem:[%s544 + $0x518] sm:$0xff]
        %v1436 = vld [vmem:[%s544 + $0x520] sm:$0xff]
        %v1437 = vld [vmem:[%s544 + $0x528] sm:$0xff]
        %v1438 = vld [vmem:[%s544 + $0x530] sm:$0xff]
        %v1439 = vld [vmem:[%s544 + $0x538] sm:$0xff]
        %v1440 = vld [vmem:[%s544 + $0x540] sm:$0xff]
        %v1441 = vld [vmem:[%s544 + $0x548] sm:$0xff]
        %v1442 = vld [vmem:[%s544 + $0x550] sm:$0xff]
        %v1443 = vld [vmem:[%s544 + $0x558] sm:$0xff]
        %v1444 = vld [vmem:[%s544 + $0x560] sm:$0xff]
        %v1445 = vld [vmem:[%s544 + $0x568] sm:$0xff]
        %v1446 = vld [vmem:[%s544 + $0x570] sm:$0xff]
        %v1447 = vld [vmem:[%s544 + $0x578] sm:$0xff]
        %v1448 = vld [vmem:[%s544 + $0x580] sm:$0xff]
        %v1449 = vld [vmem:[%s544 + $0x588] sm:$0xff]
        %v1450 = vld [vmem:[%s544 + $0x590] sm:$0xff]
        %v1451 = vld [vmem:[%s544 + $0x598] sm:$0xff]
        %v1452 = vld [vmem:[%s544 + $0x5a0] sm:$0xff]
        %v1453 = vld [vmem:[%s544 + $0x5a8] sm:$0xff]
        %v1454 = vld [vmem:[%s544 + $0x5b0] sm:$0xff]
        %v1455 = vld [vmem:[%s544 + $0x5b8] sm:$0xff]
        %v1456 = vld [vmem:[%s544 + $0x5c0] sm:$0xff]
        %v1457 = vld [vmem:[%s544 + $0x5c8] sm:$0xff]
        %v1458 = vld [vmem:[%s544 + $0x5d0] sm:$0xff]
        %v1459 = vld [vmem:[%s544 + $0x5d8] sm:$0xff]
        %v1460 = vld [vmem:[%s544 + $0x5e0] sm:$0xff]
        %v1461 = vld [vmem:[%s544 + $0x5e8] sm:$0xff]
        %v1462 = vld [vmem:[%s544 + $0x5f0] sm:$0xff]
        %v1463 = vld [vmem:[%s544 + $0x5f8] sm:$0xff]
        %v1464 = vld [vmem:[%s544 + $0x600] sm:$0xff]
        %v1465 = vld [vmem:[%s544 + $0x608] sm:$0xff]
        %v1466 = vld [vmem:[%s544 + $0x610] sm:$0xff]
        %v1467 = vld [vmem:[%s544 + $0x618] sm:$0xff]
        %v1468 = vld [vmem:[%s544 + $0x620] sm:$0xff]
        %v1469 = vld [vmem:[%s544 + $0x628] sm:$0xff]
        %v1470 = vld [vmem:[%s544 + $0x630] sm:$0xff]
        %v1471 = vld [vmem:[%s544 + $0x638] sm:$0xff]
        %v1472 = vld [vmem:[%s544 + $0x640] sm:$0xff]
        %v1473 = vld [vmem:[%s544 + $0x648] sm:$0xff]
        %v1474 = vld [vmem:[%s544 + $0x650] sm:$0xff]
        %v1475 = vld [vmem:[%s544 + $0x658] sm:$0xff]
        %v1476 = vld [vmem:[%s544 + $0x660] sm:$0xff]
        %v1477 = vld [vmem:[%s544 + $0x668] sm:$0xff]
        %v1478 = vld [vmem:[%s544 + $0x670] sm:$0xff]
        %v1479 = vld [vmem:[%s544 + $0x678] sm:$0xff]
        %v1480 = vld [vmem:[%s544 + $0x680] sm:$0xff]
        %v1481 = vld [vmem:[%s544 + $0x688] sm:$0xff]
        %v1482 = vld [vmem:[%s544 + $0x690] sm:$0xff]
        %v1483 = vld [vmem:[%s544 + $0x698] sm:$0xff]
        %v1484 = vld [vmem:[%s544 + $0x6a0] sm:$0xff]
        %v1485 = vld [vmem:[%s544 + $0x6a8] sm:$0xff]
        %v1486 = vld [vmem:[%s544 + $0x6b0] sm:$0xff]
        %v1487 = vld [vmem:[%s544 + $0x6b8] sm:$0xff]
        %v1488 = vld [vmem:[%s544 + $0x6c0] sm:$0xff]
        %v1489 = vld [vmem:[%s544 + $0x6c8] sm:$0xff]
        %v1490 = vld [vmem:[%s544 + $0x6d0] sm:$0xff]
        %v1491 = vld [vmem:[%s544 + $0x6d8] sm:$0xff]
        %v1492 = vld [vmem:[%s544 + $0x6e0] sm:$0xff]
        %v1493 = vld [vmem:[%s544 + $0x6e8] sm:$0xff]
        %v1494 = vld [vmem:[%s544 + $0x6f0] sm:$0xff]
        %v1495 = vld [vmem:[%s544 + $0x6f8] sm:$0xff]
        %v1496 = vld [vmem:[%s544 + $0x700] sm:$0xff]
        %v1497 = vld [vmem:[%s544 + $0x708] sm:$0xff]
        %v1498 = vld [vmem:[%s544 + $0x710] sm:$0xff]
        %v1499 = vld [vmem:[%s544 + $0x718] sm:$0xff]
        %v1500 = vld [vmem:[%s544 + $0x720] sm:$0xff]
        %v1501 = vld [vmem:[%s544 + $0x728] sm:$0xff]
        %v1502 = vld [vmem:[%s544 + $0x730] sm:$0xff]
        %v1503 = vld [vmem:[%s544 + $0x738] sm:$0xff]
        %v1504 = vld [vmem:[%s544 + $0x740] sm:$0xff]
        %v1505 = vld [vmem:[%s544 + $0x748] sm:$0xff]
        %v1506 = vld [vmem:[%s544 + $0x750] sm:$0xff]
        %v1507 = vld [vmem:[%s544 + $0x758] sm:$0xff]
        %v1508 = vld [vmem:[%s544 + $0x760] sm:$0xff]
        %v1509 = vld [vmem:[%s544 + $0x768] sm:$0xff]
        %v1510 = vld [vmem:[%s544 + $0x770] sm:$0xff]
        %v1511 = vld [vmem:[%s544 + $0x778] sm:$0xff]
        %v1512 = vld [vmem:[%s544 + $0x780] sm:$0xff]
        %v1513 = vld [vmem:[%s544 + $0x788] sm:$0xff]
        %v1514 = vld [vmem:[%s544 + $0x790] sm:$0xff]
        %v1515 = vld [vmem:[%s544 + $0x798] sm:$0xff]
        %v1516 = vld [vmem:[%s544 + $0x7a0] sm:$0xff]
        %v1517 = vld [vmem:[%s544 + $0x7a8] sm:$0xff]
        %v1518 = vld [vmem:[%s544 + $0x7b0] sm:$0xff]
        %v1519 = vld [vmem:[%s544 + $0x7b8] sm:$0xff]
        %v1520 = vld [vmem:[%s544 + $0x7c0] sm:$0xff]
        %v1521 = vld [vmem:[%s544 + $0x7c8] sm:$0xff]
        %v1522 = vld [vmem:[%s544 + $0x7d0] sm:$0xff]
        %v1523 = vld [vmem:[%s544 + $0x7d8] sm:$0xff]
        %v1524 = vld [vmem:[%s544 + $0x7e0] sm:$0xff]
        %v1525 = vld [vmem:[%s544 + $0x7e8] sm:$0xff]
        %v1526 = vld [vmem:[%s544 + $0x7f0] sm:$0xff]
        %v1527 = vld [vmem:[%s544 + $0x7f8] sm:$0xff]
        %v1528 = vunpack.c.l.s8.bf16 %v1272
        %v1529 = vunpack.c.l.s8.bf16 %v1273
        %v1530 = vunpack.c.l.s8.bf16 %v1274
        %v1531 = vunpack.c.l.s8.bf16 %v1275
        %v1532 = vunpack.c.l.s8.bf16 %v1276
        %v1533 = vunpack.c.l.s8.bf16 %v1277
        %v1534 = vunpack.c.l.s8.bf16 %v1278
        %v1535 = vunpack.c.l.s8.bf16 %v1279
        %v1536 = vunpack.c.h.s8.bf16 %v1272
        %v1537 = vunpack.c.h.s8.bf16 %v1273
        %v1538 = vunpack.c.h.s8.bf16 %v1274
        %v1539 = vunpack.c.h.s8.bf16 %v1275
        %v1540 = vunpack.c.h.s8.bf16 %v1276
        %v1541 = vunpack.c.h.s8.bf16 %v1277
        %v1542 = vunpack.c.h.s8.bf16 %v1278
        %v1543 = vunpack.c.h.s8.bf16 %v1279
        %v1544 = vunpack.c.l.s8.bf16 %v1280
        %v1545 = vunpack.c.l.s8.bf16 %v1281
        %v1546 = vunpack.c.l.s8.bf16 %v1282
        %v1547 = vunpack.c.l.s8.bf16 %v1283
        %v1548 = vunpack.c.l.s8.bf16 %v1284
        %v1549 = vunpack.c.l.s8.bf16 %v1285
        %v1550 = vunpack.c.l.s8.bf16 %v1286
        %v1551 = vunpack.c.l.s8.bf16 %v1287
        %v1552 = vunpack.c.h.s8.bf16 %v1280
        %v1553 = vunpack.c.h.s8.bf16 %v1281
        %v1554 = vunpack.c.h.s8.bf16 %v1282
        %v1555 = vunpack.c.h.s8.bf16 %v1283
        %v1556 = vunpack.c.h.s8.bf16 %v1284
        %v1557 = vunpack.c.h.s8.bf16 %v1285
        %v1558 = vunpack.c.h.s8.bf16 %v1286
        %v1559 = vunpack.c.h.s8.bf16 %v1287
        %v1560 = vunpack.c.l.s8.bf16 %v1288
        %v1561 = vunpack.c.l.s8.bf16 %v1289
        %v1562 = vunpack.c.l.s8.bf16 %v1290
        %v1563 = vunpack.c.l.s8.bf16 %v1291
        %v1564 = vunpack.c.l.s8.bf16 %v1292
        %v1565 = vunpack.c.l.s8.bf16 %v1293
        %v1566 = vunpack.c.l.s8.bf16 %v1294
        %v1567 = vunpack.c.l.s8.bf16 %v1295
        %v1568 = vunpack.c.h.s8.bf16 %v1288
        %v1569 = vunpack.c.h.s8.bf16 %v1289
        %v1570 = vunpack.c.h.s8.bf16 %v1290
        %v1571 = vunpack.c.h.s8.bf16 %v1291
        %v1572 = vunpack.c.h.s8.bf16 %v1292
        %v1573 = vunpack.c.h.s8.bf16 %v1293
        %v1574 = vunpack.c.h.s8.bf16 %v1294
        %v1575 = vunpack.c.h.s8.bf16 %v1295
        %v1576 = vunpack.c.l.s8.bf16 %v1296
        %v1577 = vunpack.c.l.s8.bf16 %v1297
        %v1578 = vunpack.c.l.s8.bf16 %v1298
        %v1579 = vunpack.c.l.s8.bf16 %v1299
        %v1580 = vunpack.c.l.s8.bf16 %v1300
        %v1581 = vunpack.c.l.s8.bf16 %v1301
        %v1582 = vunpack.c.l.s8.bf16 %v1302
        %v1583 = vunpack.c.l.s8.bf16 %v1303
        %v1584 = vunpack.c.h.s8.bf16 %v1296
        %v1585 = vunpack.c.h.s8.bf16 %v1297
        %v1586 = vunpack.c.h.s8.bf16 %v1298
        %v1587 = vunpack.c.h.s8.bf16 %v1299
        %v1588 = vunpack.c.h.s8.bf16 %v1300
        %v1589 = vunpack.c.h.s8.bf16 %v1301
        %v1590 = vunpack.c.h.s8.bf16 %v1302
        %v1591 = vunpack.c.h.s8.bf16 %v1303
        %v1592 = vunpack.c.l.s8.bf16 %v1304
        %v1593 = vunpack.c.l.s8.bf16 %v1305
        %v1594 = vunpack.c.l.s8.bf16 %v1306
        %v1595 = vunpack.c.l.s8.bf16 %v1307
        %v1596 = vunpack.c.l.s8.bf16 %v1308
        %v1597 = vunpack.c.l.s8.bf16 %v1309
        %v1598 = vunpack.c.l.s8.bf16 %v1310
        %v1599 = vunpack.c.l.s8.bf16 %v1311
        %v1600 = vunpack.c.h.s8.bf16 %v1304
        %v1601 = vunpack.c.h.s8.bf16 %v1305
        %v1602 = vunpack.c.h.s8.bf16 %v1306
        %v1603 = vunpack.c.h.s8.bf16 %v1307
        %v1604 = vunpack.c.h.s8.bf16 %v1308
        %v1605 = vunpack.c.h.s8.bf16 %v1309
        %v1606 = vunpack.c.h.s8.bf16 %v1310
        %v1607 = vunpack.c.h.s8.bf16 %v1311
        %v1608 = vunpack.c.l.s8.bf16 %v1312
        %v1609 = vunpack.c.l.s8.bf16 %v1313
        %v1610 = vunpack.c.l.s8.bf16 %v1314
        %v1611 = vunpack.c.l.s8.bf16 %v1315
        %v1612 = vunpack.c.l.s8.bf16 %v1316
        %v1613 = vunpack.c.l.s8.bf16 %v1317
        %v1614 = vunpack.c.l.s8.bf16 %v1318
        %v1615 = vunpack.c.l.s8.bf16 %v1319
        %v1616 = vunpack.c.h.s8.bf16 %v1312
        %v1617 = vunpack.c.h.s8.bf16 %v1313
        %v1618 = vunpack.c.h.s8.bf16 %v1314
        %v1619 = vunpack.c.h.s8.bf16 %v1315
        %v1620 = vunpack.c.h.s8.bf16 %v1316
        %v1621 = vunpack.c.h.s8.bf16 %v1317
        %v1622 = vunpack.c.h.s8.bf16 %v1318
        %v1623 = vunpack.c.h.s8.bf16 %v1319
        %v1624 = vunpack.c.l.s8.bf16 %v1320
        %v1625 = vunpack.c.l.s8.bf16 %v1321
        %v1626 = vunpack.c.l.s8.bf16 %v1322
        %v1627 = vunpack.c.l.s8.bf16 %v1323
        %v1628 = vunpack.c.l.s8.bf16 %v1324
        %v1629 = vunpack.c.l.s8.bf16 %v1325
        %v1630 = vunpack.c.l.s8.bf16 %v1326
        %v1631 = vunpack.c.l.s8.bf16 %v1327
        %v1632 = vunpack.c.h.s8.bf16 %v1320
        %v1633 = vunpack.c.h.s8.bf16 %v1321
        %v1634 = vunpack.c.h.s8.bf16 %v1322
        %v1635 = vunpack.c.h.s8.bf16 %v1323
        %v1636 = vunpack.c.h.s8.bf16 %v1324
        %v1637 = vunpack.c.h.s8.bf16 %v1325
        %v1638 = vunpack.c.h.s8.bf16 %v1326
        %v1639 = vunpack.c.h.s8.bf16 %v1327
        %v1640 = vunpack.c.l.s8.bf16 %v1328
        %v1641 = vunpack.c.l.s8.bf16 %v1329
        %v1642 = vunpack.c.l.s8.bf16 %v1330
        %v1643 = vunpack.c.l.s8.bf16 %v1331
        %v1644 = vunpack.c.l.s8.bf16 %v1332
        %v1645 = vunpack.c.l.s8.bf16 %v1333
        %v1646 = vunpack.c.l.s8.bf16 %v1334
        %v1647 = vunpack.c.l.s8.bf16 %v1335
        %v1648 = vunpack.c.h.s8.bf16 %v1328
        %v1649 = vunpack.c.h.s8.bf16 %v1329
        %v1650 = vunpack.c.h.s8.bf16 %v1330
        %v1651 = vunpack.c.h.s8.bf16 %v1331
        %v1652 = vunpack.c.h.s8.bf16 %v1332
        %v1653 = vunpack.c.h.s8.bf16 %v1333
        %v1654 = vunpack.c.h.s8.bf16 %v1334
        %v1655 = vunpack.c.h.s8.bf16 %v1335
        %v1656 = vunpack.c.l.s8.bf16 %v1336
        %v1657 = vunpack.c.l.s8.bf16 %v1337
        %v1658 = vunpack.c.l.s8.bf16 %v1338
        %v1659 = vunpack.c.l.s8.bf16 %v1339
        %v1660 = vunpack.c.l.s8.bf16 %v1340
        %v1661 = vunpack.c.l.s8.bf16 %v1341
        %v1662 = vunpack.c.l.s8.bf16 %v1342
        %v1663 = vunpack.c.l.s8.bf16 %v1343
        %v1664 = vunpack.c.h.s8.bf16 %v1336
        %v1665 = vunpack.c.h.s8.bf16 %v1337
        %v1666 = vunpack.c.h.s8.bf16 %v1338
        %v1667 = vunpack.c.h.s8.bf16 %v1339
        %v1668 = vunpack.c.h.s8.bf16 %v1340
        %v1669 = vunpack.c.h.s8.bf16 %v1341
        %v1670 = vunpack.c.h.s8.bf16 %v1342
        %v1671 = vunpack.c.h.s8.bf16 %v1343
        %v1672 = vunpack.c.l.s8.bf16 %v1344
        %v1673 = vunpack.c.l.s8.bf16 %v1345
        %v1674 = vunpack.c.l.s8.bf16 %v1346
        %v1675 = vunpack.c.l.s8.bf16 %v1347
        %v1676 = vunpack.c.l.s8.bf16 %v1348
        %v1677 = vunpack.c.l.s8.bf16 %v1349
        %v1678 = vunpack.c.l.s8.bf16 %v1350
        %v1679 = vunpack.c.l.s8.bf16 %v1351
        %v1680 = vunpack.c.h.s8.bf16 %v1344
        %v1681 = vunpack.c.h.s8.bf16 %v1345
        %v1682 = vunpack.c.h.s8.bf16 %v1346
        %v1683 = vunpack.c.h.s8.bf16 %v1347
        %v1684 = vunpack.c.h.s8.bf16 %v1348
        %v1685 = vunpack.c.h.s8.bf16 %v1349
        %v1686 = vunpack.c.h.s8.bf16 %v1350
        %v1687 = vunpack.c.h.s8.bf16 %v1351
        %v1688 = vunpack.c.l.s8.bf16 %v1352
        %v1689 = vunpack.c.l.s8.bf16 %v1353
        %v1690 = vunpack.c.l.s8.bf16 %v1354
        %v1691 = vunpack.c.l.s8.bf16 %v1355
        %v1692 = vunpack.c.l.s8.bf16 %v1356
        %v1693 = vunpack.c.l.s8.bf16 %v1357
        %v1694 = vunpack.c.l.s8.bf16 %v1358
        %v1695 = vunpack.c.l.s8.bf16 %v1359
        %v1696 = vunpack.c.h.s8.bf16 %v1352
        %v1697 = vunpack.c.h.s8.bf16 %v1353
        %v1698 = vunpack.c.h.s8.bf16 %v1354
        %v1699 = vunpack.c.h.s8.bf16 %v1355
        %v1700 = vunpack.c.h.s8.bf16 %v1356
        %v1701 = vunpack.c.h.s8.bf16 %v1357
        %v1702 = vunpack.c.h.s8.bf16 %v1358
        %v1703 = vunpack.c.h.s8.bf16 %v1359
        %v1704 = vunpack.c.l.s8.bf16 %v1360
        %v1705 = vunpack.c.l.s8.bf16 %v1361
        %v1706 = vunpack.c.l.s8.bf16 %v1362
        %v1707 = vunpack.c.l.s8.bf16 %v1363
        %v1708 = vunpack.c.l.s8.bf16 %v1364
        %v1709 = vunpack.c.l.s8.bf16 %v1365
        %v1710 = vunpack.c.l.s8.bf16 %v1366
        %v1711 = vunpack.c.l.s8.bf16 %v1367
        %v1712 = vunpack.c.h.s8.bf16 %v1360
        %v1713 = vunpack.c.h.s8.bf16 %v1361
        %v1714 = vunpack.c.h.s8.bf16 %v1362
        %v1715 = vunpack.c.h.s8.bf16 %v1363
        %v1716 = vunpack.c.h.s8.bf16 %v1364
        %v1717 = vunpack.c.h.s8.bf16 %v1365
        %v1718 = vunpack.c.h.s8.bf16 %v1366
        %v1719 = vunpack.c.h.s8.bf16 %v1367
        %v1720 = vunpack.c.l.s8.bf16 %v1368
        %v1721 = vunpack.c.l.s8.bf16 %v1369
        %v1722 = vunpack.c.l.s8.bf16 %v1370
        %v1723 = vunpack.c.l.s8.bf16 %v1371
        %v1724 = vunpack.c.l.s8.bf16 %v1372
        %v1725 = vunpack.c.l.s8.bf16 %v1373
        %v1726 = vunpack.c.l.s8.bf16 %v1374
        %v1727 = vunpack.c.l.s8.bf16 %v1375
        %v1728 = vunpack.c.h.s8.bf16 %v1368
        %v1729 = vunpack.c.h.s8.bf16 %v1369
        %v1730 = vunpack.c.h.s8.bf16 %v1370
        %v1731 = vunpack.c.h.s8.bf16 %v1371
        %v1732 = vunpack.c.h.s8.bf16 %v1372
        %v1733 = vunpack.c.h.s8.bf16 %v1373
        %v1734 = vunpack.c.h.s8.bf16 %v1374
        %v1735 = vunpack.c.h.s8.bf16 %v1375
        %v1736 = vunpack.c.l.s8.bf16 %v1376
        %v1737 = vunpack.c.l.s8.bf16 %v1377
        %v1738 = vunpack.c.l.s8.bf16 %v1378
        %v1739 = vunpack.c.l.s8.bf16 %v1379
        %v1740 = vunpack.c.l.s8.bf16 %v1380
        %v1741 = vunpack.c.l.s8.bf16 %v1381
        %v1742 = vunpack.c.l.s8.bf16 %v1382
        %v1743 = vunpack.c.l.s8.bf16 %v1383
        %v1744 = vunpack.c.h.s8.bf16 %v1376
        %v1745 = vunpack.c.h.s8.bf16 %v1377
        %v1746 = vunpack.c.h.s8.bf16 %v1378
        %v1747 = vunpack.c.h.s8.bf16 %v1379
        %v1748 = vunpack.c.h.s8.bf16 %v1380
        %v1749 = vunpack.c.h.s8.bf16 %v1381
        %v1750 = vunpack.c.h.s8.bf16 %v1382
        %v1751 = vunpack.c.h.s8.bf16 %v1383
        %v1752 = vunpack.c.l.s8.bf16 %v1384
        %v1753 = vunpack.c.l.s8.bf16 %v1385
        %v1754 = vunpack.c.l.s8.bf16 %v1386
        %v1755 = vunpack.c.l.s8.bf16 %v1387
        %v1756 = vunpack.c.l.s8.bf16 %v1388
        %v1757 = vunpack.c.l.s8.bf16 %v1389
        %v1758 = vunpack.c.l.s8.bf16 %v1390
        %v1759 = vunpack.c.l.s8.bf16 %v1391
        %v1760 = vunpack.c.h.s8.bf16 %v1384
        %v1761 = vunpack.c.h.s8.bf16 %v1385
        %v1762 = vunpack.c.h.s8.bf16 %v1386
        %v1763 = vunpack.c.h.s8.bf16 %v1387
        %v1764 = vunpack.c.h.s8.bf16 %v1388
        %v1765 = vunpack.c.h.s8.bf16 %v1389
        %v1766 = vunpack.c.h.s8.bf16 %v1390
        %v1767 = vunpack.c.h.s8.bf16 %v1391
        %v1768 = vunpack.c.l.s8.bf16 %v1392
        %v1769 = vunpack.c.l.s8.bf16 %v1393
        %v1770 = vunpack.c.l.s8.bf16 %v1394
        %v1771 = vunpack.c.l.s8.bf16 %v1395
        %v1772 = vunpack.c.l.s8.bf16 %v1396
        %v1773 = vunpack.c.l.s8.bf16 %v1397
        %v1774 = vunpack.c.l.s8.bf16 %v1398
        %v1775 = vunpack.c.l.s8.bf16 %v1399
        %v1776 = vunpack.c.h.s8.bf16 %v1392
        %v1777 = vunpack.c.h.s8.bf16 %v1393
        %v1778 = vunpack.c.h.s8.bf16 %v1394
        %v1779 = vunpack.c.h.s8.bf16 %v1395
        %v1780 = vunpack.c.h.s8.bf16 %v1396
        %v1781 = vunpack.c.h.s8.bf16 %v1397
        %v1782 = vunpack.c.h.s8.bf16 %v1398
        %v1783 = vunpack.c.h.s8.bf16 %v1399
        %v1784 = vunpack.c.l.s8.bf16 %v1400
        %v1785 = vunpack.c.l.s8.bf16 %v1401
        %v1786 = vunpack.c.l.s8.bf16 %v1402
        %v1787 = vunpack.c.l.s8.bf16 %v1403
        %v1788 = vunpack.c.l.s8.bf16 %v1404
        %v1789 = vunpack.c.l.s8.bf16 %v1405
        %v1790 = vunpack.c.l.s8.bf16 %v1406
        %v1791 = vunpack.c.l.s8.bf16 %v1407
        %v1792 = vunpack.c.h.s8.bf16 %v1400
        %v1793 = vunpack.c.h.s8.bf16 %v1401
        %v1794 = vunpack.c.h.s8.bf16 %v1402
        %v1795 = vunpack.c.h.s8.bf16 %v1403
        %v1796 = vunpack.c.h.s8.bf16 %v1404
        %v1797 = vunpack.c.h.s8.bf16 %v1405
        %v1798 = vunpack.c.h.s8.bf16 %v1406
        %v1799 = vunpack.c.h.s8.bf16 %v1407
        %v1800 = vunpack.c.l.s8.bf16 %v1408
        %v1801 = vunpack.c.l.s8.bf16 %v1409
        %v1802 = vunpack.c.l.s8.bf16 %v1410
        %v1803 = vunpack.c.l.s8.bf16 %v1411
        %v1804 = vunpack.c.l.s8.bf16 %v1412
        %v1805 = vunpack.c.l.s8.bf16 %v1413
        %v1806 = vunpack.c.l.s8.bf16 %v1414
        %v1807 = vunpack.c.l.s8.bf16 %v1415
        %v1808 = vunpack.c.h.s8.bf16 %v1408
        %v1809 = vunpack.c.h.s8.bf16 %v1409
        %v1810 = vunpack.c.h.s8.bf16 %v1410
        %v1811 = vunpack.c.h.s8.bf16 %v1411
        %v1812 = vunpack.c.h.s8.bf16 %v1412
        %v1813 = vunpack.c.h.s8.bf16 %v1413
        %v1814 = vunpack.c.h.s8.bf16 %v1414
        %v1815 = vunpack.c.h.s8.bf16 %v1415
        %v1816 = vunpack.c.l.s8.bf16 %v1416
        %v1817 = vunpack.c.l.s8.bf16 %v1417
        %v1818 = vunpack.c.l.s8.bf16 %v1418
        %v1819 = vunpack.c.l.s8.bf16 %v1419
        %v1820 = vunpack.c.l.s8.bf16 %v1420
        %v1821 = vunpack.c.l.s8.bf16 %v1421
        %v1822 = vunpack.c.l.s8.bf16 %v1422
        %v1823 = vunpack.c.l.s8.bf16 %v1423
        %v1824 = vunpack.c.h.s8.bf16 %v1416
        %v1825 = vunpack.c.h.s8.bf16 %v1417
        %v1826 = vunpack.c.h.s8.bf16 %v1418
        %v1827 = vunpack.c.h.s8.bf16 %v1419
        %v1828 = vunpack.c.h.s8.bf16 %v1420
        %v1829 = vunpack.c.h.s8.bf16 %v1421
        %v1830 = vunpack.c.h.s8.bf16 %v1422
        %v1831 = vunpack.c.h.s8.bf16 %v1423
        %v1832 = vunpack.c.l.s8.bf16 %v1424
        %v1833 = vunpack.c.l.s8.bf16 %v1425
        %v1834 = vunpack.c.l.s8.bf16 %v1426
        %v1835 = vunpack.c.l.s8.bf16 %v1427
        %v1836 = vunpack.c.l.s8.bf16 %v1428
        %v1837 = vunpack.c.l.s8.bf16 %v1429
        %v1838 = vunpack.c.l.s8.bf16 %v1430
        %v1839 = vunpack.c.l.s8.bf16 %v1431
        %v1840 = vunpack.c.h.s8.bf16 %v1424
        %v1841 = vunpack.c.h.s8.bf16 %v1425
        %v1842 = vunpack.c.h.s8.bf16 %v1426
        %v1843 = vunpack.c.h.s8.bf16 %v1427
        %v1844 = vunpack.c.h.s8.bf16 %v1428
        %v1845 = vunpack.c.h.s8.bf16 %v1429
        %v1846 = vunpack.c.h.s8.bf16 %v1430
        %v1847 = vunpack.c.h.s8.bf16 %v1431
        %v1848 = vunpack.c.l.s8.bf16 %v1432
        %v1849 = vunpack.c.l.s8.bf16 %v1433
        %v1850 = vunpack.c.l.s8.bf16 %v1434
        %v1851 = vunpack.c.l.s8.bf16 %v1435
        %v1852 = vunpack.c.l.s8.bf16 %v1436
        %v1853 = vunpack.c.l.s8.bf16 %v1437
        %v1854 = vunpack.c.l.s8.bf16 %v1438
        %v1855 = vunpack.c.l.s8.bf16 %v1439
        %v1856 = vunpack.c.h.s8.bf16 %v1432
        %v1857 = vunpack.c.h.s8.bf16 %v1433
        %v1858 = vunpack.c.h.s8.bf16 %v1434
        %v1859 = vunpack.c.h.s8.bf16 %v1435
        %v1860 = vunpack.c.h.s8.bf16 %v1436
        %v1861 = vunpack.c.h.s8.bf16 %v1437
        %v1862 = vunpack.c.h.s8.bf16 %v1438
        %v1863 = vunpack.c.h.s8.bf16 %v1439
        %v1864 = vunpack.c.l.s8.bf16 %v1440
        %v1865 = vunpack.c.l.s8.bf16 %v1441
        %v1866 = vunpack.c.l.s8.bf16 %v1442
        %v1867 = vunpack.c.l.s8.bf16 %v1443
        %v1868 = vunpack.c.l.s8.bf16 %v1444
        %v1869 = vunpack.c.l.s8.bf16 %v1445
        %v1870 = vunpack.c.l.s8.bf16 %v1446
        %v1871 = vunpack.c.l.s8.bf16 %v1447
        %v1872 = vunpack.c.h.s8.bf16 %v1440
        %v1873 = vunpack.c.h.s8.bf16 %v1441
        %v1874 = vunpack.c.h.s8.bf16 %v1442
        %v1875 = vunpack.c.h.s8.bf16 %v1443
        %v1876 = vunpack.c.h.s8.bf16 %v1444
        %v1877 = vunpack.c.h.s8.bf16 %v1445
        %v1878 = vunpack.c.h.s8.bf16 %v1446
        %v1879 = vunpack.c.h.s8.bf16 %v1447
        %v1880 = vunpack.c.l.s8.bf16 %v1448
        %v1881 = vunpack.c.l.s8.bf16 %v1449
        %v1882 = vunpack.c.l.s8.bf16 %v1450
        %v1883 = vunpack.c.l.s8.bf16 %v1451
        %v1884 = vunpack.c.l.s8.bf16 %v1452
        %v1885 = vunpack.c.l.s8.bf16 %v1453
        %v1886 = vunpack.c.l.s8.bf16 %v1454
        %v1887 = vunpack.c.l.s8.bf16 %v1455
        %v1888 = vunpack.c.h.s8.bf16 %v1448
        %v1889 = vunpack.c.h.s8.bf16 %v1449
        %v1890 = vunpack.c.h.s8.bf16 %v1450
        %v1891 = vunpack.c.h.s8.bf16 %v1451
        %v1892 = vunpack.c.h.s8.bf16 %v1452
        %v1893 = vunpack.c.h.s8.bf16 %v1453
        %v1894 = vunpack.c.h.s8.bf16 %v1454
        %v1895 = vunpack.c.h.s8.bf16 %v1455
        %v1896 = vunpack.c.l.s8.bf16 %v1456
        %v1897 = vunpack.c.l.s8.bf16 %v1457
        %v1898 = vunpack.c.l.s8.bf16 %v1458
        %v1899 = vunpack.c.l.s8.bf16 %v1459
        %v1900 = vunpack.c.l.s8.bf16 %v1460
        %v1901 = vunpack.c.l.s8.bf16 %v1461
        %v1902 = vunpack.c.l.s8.bf16 %v1462
        %v1903 = vunpack.c.l.s8.bf16 %v1463
        %v1904 = vunpack.c.h.s8.bf16 %v1456
        %v1905 = vunpack.c.h.s8.bf16 %v1457
        %v1906 = vunpack.c.h.s8.bf16 %v1458
        %v1907 = vunpack.c.h.s8.bf16 %v1459
        %v1908 = vunpack.c.h.s8.bf16 %v1460
        %v1909 = vunpack.c.h.s8.bf16 %v1461
        %v1910 = vunpack.c.h.s8.bf16 %v1462
        %v1911 = vunpack.c.h.s8.bf16 %v1463
        %v1912 = vunpack.c.l.s8.bf16 %v1464
        %v1913 = vunpack.c.l.s8.bf16 %v1465
        %v1914 = vunpack.c.l.s8.bf16 %v1466
        %v1915 = vunpack.c.l.s8.bf16 %v1467
        %v1916 = vunpack.c.l.s8.bf16 %v1468
        %v1917 = vunpack.c.l.s8.bf16 %v1469
        %v1918 = vunpack.c.l.s8.bf16 %v1470
        %v1919 = vunpack.c.l.s8.bf16 %v1471
        %v1920 = vunpack.c.h.s8.bf16 %v1464
        %v1921 = vunpack.c.h.s8.bf16 %v1465
        %v1922 = vunpack.c.h.s8.bf16 %v1466
        %v1923 = vunpack.c.h.s8.bf16 %v1467
        %v1924 = vunpack.c.h.s8.bf16 %v1468
        %v1925 = vunpack.c.h.s8.bf16 %v1469
        %v1926 = vunpack.c.h.s8.bf16 %v1470
        %v1927 = vunpack.c.h.s8.bf16 %v1471
        %v1928 = vunpack.c.l.s8.bf16 %v1472
        %v1929 = vunpack.c.l.s8.bf16 %v1473
        %v1930 = vunpack.c.l.s8.bf16 %v1474
        %v1931 = vunpack.c.l.s8.bf16 %v1475
        %v1932 = vunpack.c.l.s8.bf16 %v1476
        %v1933 = vunpack.c.l.s8.bf16 %v1477
        %v1934 = vunpack.c.l.s8.bf16 %v1478
        %v1935 = vunpack.c.l.s8.bf16 %v1479
        %v1936 = vunpack.c.h.s8.bf16 %v1472
        %v1937 = vunpack.c.h.s8.bf16 %v1473
        %v1938 = vunpack.c.h.s8.bf16 %v1474
        %v1939 = vunpack.c.h.s8.bf16 %v1475
        %v1940 = vunpack.c.h.s8.bf16 %v1476
        %v1941 = vunpack.c.h.s8.bf16 %v1477
        %v1942 = vunpack.c.h.s8.bf16 %v1478
        %v1943 = vunpack.c.h.s8.bf16 %v1479
        %v1944 = vunpack.c.l.s8.bf16 %v1480
        %v1945 = vunpack.c.l.s8.bf16 %v1481
        %v1946 = vunpack.c.l.s8.bf16 %v1482
        %v1947 = vunpack.c.l.s8.bf16 %v1483
        %v1948 = vunpack.c.l.s8.bf16 %v1484
        %v1949 = vunpack.c.l.s8.bf16 %v1485
        %v1950 = vunpack.c.l.s8.bf16 %v1486
        %v1951 = vunpack.c.l.s8.bf16 %v1487
        %v1952 = vunpack.c.h.s8.bf16 %v1480
        %v1953 = vunpack.c.h.s8.bf16 %v1481
        %v1954 = vunpack.c.h.s8.bf16 %v1482
        %v1955 = vunpack.c.h.s8.bf16 %v1483
        %v1956 = vunpack.c.h.s8.bf16 %v1484
        %v1957 = vunpack.c.h.s8.bf16 %v1485
        %v1958 = vunpack.c.h.s8.bf16 %v1486
        %v1959 = vunpack.c.h.s8.bf16 %v1487
        %v1960 = vunpack.c.l.s8.bf16 %v1488
        %v1961 = vunpack.c.l.s8.bf16 %v1489
        %v1962 = vunpack.c.l.s8.bf16 %v1490
        %v1963 = vunpack.c.l.s8.bf16 %v1491
        %v1964 = vunpack.c.l.s8.bf16 %v1492
        %v1965 = vunpack.c.l.s8.bf16 %v1493
        %v1966 = vunpack.c.l.s8.bf16 %v1494
        %v1967 = vunpack.c.l.s8.bf16 %v1495
        %v1968 = vunpack.c.h.s8.bf16 %v1488
        %v1969 = vunpack.c.h.s8.bf16 %v1489
        %v1970 = vunpack.c.h.s8.bf16 %v1490
        %v1971 = vunpack.c.h.s8.bf16 %v1491
        %v1972 = vunpack.c.h.s8.bf16 %v1492
        %v1973 = vunpack.c.h.s8.bf16 %v1493
        %v1974 = vunpack.c.h.s8.bf16 %v1494
        %v1975 = vunpack.c.h.s8.bf16 %v1495
        %v1976 = vunpack.c.l.s8.bf16 %v1496
        %v1977 = vunpack.c.l.s8.bf16 %v1497
        %v1978 = vunpack.c.l.s8.bf16 %v1498
        %v1979 = vunpack.c.l.s8.bf16 %v1499
        %v1980 = vunpack.c.l.s8.bf16 %v1500
        %v1981 = vunpack.c.l.s8.bf16 %v1501
        %v1982 = vunpack.c.l.s8.bf16 %v1502
        %v1983 = vunpack.c.l.s8.bf16 %v1503
        %v1984 = vunpack.c.h.s8.bf16 %v1496
        %v1985 = vunpack.c.h.s8.bf16 %v1497
        %v1986 = vunpack.c.h.s8.bf16 %v1498
        %v1987 = vunpack.c.h.s8.bf16 %v1499
        %v1988 = vunpack.c.h.s8.bf16 %v1500
        %v1989 = vunpack.c.h.s8.bf16 %v1501
        %v1990 = vunpack.c.h.s8.bf16 %v1502
        %v1991 = vunpack.c.h.s8.bf16 %v1503
        %v1992 = vunpack.c.l.s8.bf16 %v1504
        %v1993 = vunpack.c.l.s8.bf16 %v1505
        %v1994 = vunpack.c.l.s8.bf16 %v1506
        %v1995 = vunpack.c.l.s8.bf16 %v1507
        %v1996 = vunpack.c.l.s8.bf16 %v1508
        %v1997 = vunpack.c.l.s8.bf16 %v1509
        %v1998 = vunpack.c.l.s8.bf16 %v1510
        %v1999 = vunpack.c.l.s8.bf16 %v1511
        %v2000 = vunpack.c.h.s8.bf16 %v1504
        %v2001 = vunpack.c.h.s8.bf16 %v1505
        %v2002 = vunpack.c.h.s8.bf16 %v1506
        %v2003 = vunpack.c.h.s8.bf16 %v1507
        %v2004 = vunpack.c.h.s8.bf16 %v1508
        %v2005 = vunpack.c.h.s8.bf16 %v1509
        %v2006 = vunpack.c.h.s8.bf16 %v1510
        %v2007 = vunpack.c.h.s8.bf16 %v1511
        %v2008 = vunpack.c.l.s8.bf16 %v1512
        %v2009 = vunpack.c.l.s8.bf16 %v1513
        %v2010 = vunpack.c.l.s8.bf16 %v1514
        %v2011 = vunpack.c.l.s8.bf16 %v1515
        %v2012 = vunpack.c.l.s8.bf16 %v1516
        %v2013 = vunpack.c.l.s8.bf16 %v1517
        %v2014 = vunpack.c.l.s8.bf16 %v1518
        %v2015 = vunpack.c.l.s8.bf16 %v1519
        %v2016 = vunpack.c.h.s8.bf16 %v1512
        %v2017 = vunpack.c.h.s8.bf16 %v1513
        %v2018 = vunpack.c.h.s8.bf16 %v1514
        %v2019 = vunpack.c.h.s8.bf16 %v1515
        %v2020 = vunpack.c.h.s8.bf16 %v1516
        %v2021 = vunpack.c.h.s8.bf16 %v1517
        %v2022 = vunpack.c.h.s8.bf16 %v1518
        %v2023 = vunpack.c.h.s8.bf16 %v1519
        %v2024 = vunpack.c.l.s8.bf16 %v1520
        %v2025 = vunpack.c.l.s8.bf16 %v1521
        %v2026 = vunpack.c.l.s8.bf16 %v1522
        %v2027 = vunpack.c.l.s8.bf16 %v1523
        %v2028 = vunpack.c.l.s8.bf16 %v1524
        %v2029 = vunpack.c.l.s8.bf16 %v1525
        %v2030 = vunpack.c.l.s8.bf16 %v1526
        %v2031 = vunpack.c.l.s8.bf16 %v1527
        %v2032 = vunpack.c.h.s8.bf16 %v1520
        %v2033 = vunpack.c.h.s8.bf16 %v1521
        %v2034 = vunpack.c.h.s8.bf16 %v1522
        %v2035 = vunpack.c.h.s8.bf16 %v1523
        %v2036 = vunpack.c.h.s8.bf16 %v1524
        %v2037 = vunpack.c.h.s8.bf16 %v1525
        %v2038 = vunpack.c.h.s8.bf16 %v1526
        %v2039 = vunpack.c.h.s8.bf16 %v1527
        %2040 = vmatprep.subr.bf16.mxu0 %v1529
        %2041 = vmatpush1.bf16.msra.mxu0 %v1528
        %2042 = vmatprep.subr.bf16.mxu0 %v1537
        %2043 = vmatpush1.bf16.msra.mxu0 %v1536
        %2044 = vmatprep.subr.bf16.mxu0 %v1545
        %2045 = vmatpush1.bf16.msra.mxu0 %v1544
        %2046 = vmatprep.subr.bf16.mxu0 %v1553
        %2047 = vmatpush1.bf16.msra.mxu0 %v1552
        %2048 = vmatprep.subr.bf16.mxu0 %v1561
        %2049 = vmatpush1.bf16.msra.mxu0 %v1560
        %2050 = vmatprep.subr.bf16.mxu0 %v1569
        %2051 = vmatpush1.bf16.msra.mxu0 %v1568
        %2052 = vmatprep.subr.bf16.mxu0 %v1577
        %2053 = vmatpush1.bf16.msra.mxu0 %v1576
        %2054 = vmatprep.subr.bf16.mxu0 %v1585
        %2055 = vmatpush1.bf16.msra.mxu0 %v1584
        %2056 = vmatprep.subr.bf16.mxu0 %v1593
        %2057 = vmatpush1.bf16.msra.mxu0 %v1592
        %2058 = vmatprep.subr.bf16.mxu0 %v1601
        %2059 = vmatpush1.bf16.msra.mxu0 %v1600
        %2060 = vmatprep.subr.bf16.mxu0 %v1609
        %2061 = vmatpush1.bf16.msra.mxu0 %v1608
        %2062 = vmatprep.subr.bf16.mxu0 %v1617
        %2063 = vmatpush1.bf16.msra.mxu0 %v1616
        %2064 = vmatprep.subr.bf16.mxu0 %v1625
        %2065 = vmatpush1.bf16.msra.mxu0 %v1624
        %2066 = vmatprep.subr.bf16.mxu0 %v1633
        %2067 = vmatpush1.bf16.msra.mxu0 %v1632
        %2068 = vmatprep.subr.bf16.mxu0 %v1641
        %2069 = vmatpush1.bf16.msra.mxu0 %v1640
        %2070 = vmatprep.subr.bf16.mxu0 %v1649
        %2071 = vmatpush1.bf16.msra.mxu0 %v1648
        %2072 = vmatprep.mubr.bf16.mxu0 %v1265
        %2073 = vmatmul.mubr.bf16.gmra.mrb[0].mxu0 %v1264
        %v2074 = vpop.f32.mrb[0].mxu0
        %v2075 = vadd.f32 0.0, %v2074
        %v2076 = vpop.f32.mrb[0].mxu0
        %v2077 = vadd.f32 0.0, %v2076
        %v2078 = vpop.f32.mrb[0].mxu0
        %v2079 = vpop.f32.mrb[0].mxu0
        %2080 = vdwg.mxu0
        %2081 = vmatprep.subr.bf16.mxu0 %v1657
        %2082 = vmatpush1.bf16.msra.mxu0 %v1656
        %2083 = vmatprep.subr.bf16.mxu0 %v1665
        %2084 = vmatpush1.bf16.msra.mxu0 %v1664
        %2085 = vmatprep.subr.bf16.mxu0 %v1673
        %2086 = vmatpush1.bf16.msra.mxu0 %v1672
        %2087 = vmatprep.subr.bf16.mxu0 %v1681
        %2088 = vmatpush1.bf16.msra.mxu0 %v1680
        %2089 = vmatprep.subr.bf16.mxu0 %v1689
        %2090 = vmatpush1.bf16.msra.mxu0 %v1688
        %2091 = vmatprep.subr.bf16.mxu0 %v1697
        %2092 = vmatpush1.bf16.msra.mxu0 %v1696
        %2093 = vmatprep.subr.bf16.mxu0 %v1705
        %2094 = vmatpush1.bf16.msra.mxu0 %v1704
        %2095 = vmatprep.subr.bf16.mxu0 %v1713
        %2096 = vmatpush1.bf16.msra.mxu0 %v1712
        %2097 = vmatprep.subr.bf16.mxu0 %v1721
        %2098 = vmatpush1.bf16.msra.mxu0 %v1720
        %2099 = vmatprep.subr.bf16.mxu0 %v1729
        %2100 = vmatpush1.bf16.msra.mxu0 %v1728
        %2101 = vmatprep.subr.bf16.mxu0 %v1737
        %2102 = vmatpush1.bf16.msra.mxu0 %v1736
        %2103 = vmatprep.subr.bf16.mxu0 %v1745
        %2104 = vmatpush1.bf16.msra.mxu0 %v1744
        %2105 = vmatprep.subr.bf16.mxu0 %v1753
        %2106 = vmatpush1.bf16.msra.mxu0 %v1752
        %2107 = vmatprep.subr.bf16.mxu0 %v1761
        %2108 = vmatpush1.bf16.msra.mxu0 %v1760
        %2109 = vmatprep.subr.bf16.mxu0 %v1769
        %2110 = vmatpush1.bf16.msra.mxu0 %v1768
        %2111 = vmatprep.subr.bf16.mxu0 %v1777
        %2112 = vmatpush1.bf16.msra.mxu0 %v1776
        %2113 = vmatprep.mubr.bf16.mxu0 %v1267
        %2114 = vmatmul.mubr.bf16.gmra.mrb[0].mxu0 %v1266
        %v2115 = vpop.f32.mrb[0].mxu0
        %v2116 = vadd.f32 %v2075, %v2115
        %v2117 = vpop.f32.mrb[0].mxu0
        %v2118 = vadd.f32 %v2077, %v2117
        %v2119 = vpop.f32.mrb[0].mxu0
        %v2120 = vpop.f32.mrb[0].mxu0
        %2121 = vdwg.mxu0
        %2122 = vmatprep.subr.bf16.mxu0 %v1785
        %2123 = vmatpush1.bf16.msra.mxu0 %v1784
        %2124 = vmatprep.subr.bf16.mxu0 %v1793
        %2125 = vmatpush1.bf16.msra.mxu0 %v1792
        %2126 = vmatprep.subr.bf16.mxu0 %v1801
        %2127 = vmatpush1.bf16.msra.mxu0 %v1800
        %2128 = vmatprep.subr.bf16.mxu0 %v1809
        %2129 = vmatpush1.bf16.msra.mxu0 %v1808
        %2130 = vmatprep.subr.bf16.mxu0 %v1817
        %2131 = vmatpush1.bf16.msra.mxu0 %v1816
        %2132 = vmatprep.subr.bf16.mxu0 %v1825
        %2133 = vmatpush1.bf16.msra.mxu0 %v1824
        %2134 = vmatprep.subr.bf16.mxu0 %v1833
        %2135 = vmatpush1.bf16.msra.mxu0 %v1832
        %2136 = vmatprep.subr.bf16.mxu0 %v1841
        %2137 = vmatpush1.bf16.msra.mxu0 %v1840
        %2138 = vmatprep.subr.bf16.mxu0 %v1849
        %2139 = vmatpush1.bf16.msra.mxu0 %v1848
        %2140 = vmatprep.subr.bf16.mxu0 %v1857
        %2141 = vmatpush1.bf16.msra.mxu0 %v1856
        %2142 = vmatprep.subr.bf16.mxu0 %v1865
        %2143 = vmatpush1.bf16.msra.mxu0 %v1864
        %2144 = vmatprep.subr.bf16.mxu0 %v1873
        %2145 = vmatpush1.bf16.msra.mxu0 %v1872
        %2146 = vmatprep.subr.bf16.mxu0 %v1881
        %2147 = vmatpush1.bf16.msra.mxu0 %v1880
        %2148 = vmatprep.subr.bf16.mxu0 %v1889
        %2149 = vmatpush1.bf16.msra.mxu0 %v1888
        %2150 = vmatprep.subr.bf16.mxu0 %v1897
        %2151 = vmatpush1.bf16.msra.mxu0 %v1896
        %2152 = vmatprep.subr.bf16.mxu0 %v1905
        %2153 = vmatpush1.bf16.msra.mxu0 %v1904
        %2154 = vmatprep.mubr.bf16.mxu0 %v1269
        %2155 = vmatmul.mubr.bf16.gmra.mrb[0].mxu0 %v1268
        %v2156 = vpop.f32.mrb[0].mxu0
        %v2157 = vadd.f32 %v2116, %v2156
        %v2158 = vpop.f32.mrb[0].mxu0
        %v2159 = vadd.f32 %v2118, %v2158
        %v2160 = vpop.f32.mrb[0].mxu0
        %v2161 = vpop.f32.mrb[0].mxu0
        %2162 = vdwg.mxu0
        %2163 = vmatprep.subr.bf16.mxu0 %v1913
        %2164 = vmatpush1.bf16.msra.mxu0 %v1912
        %2165 = vmatprep.subr.bf16.mxu0 %v1921
        %2166 = vmatpush1.bf16.msra.mxu0 %v1920
        %2167 = vmatprep.subr.bf16.mxu0 %v1929
        %2168 = vmatpush1.bf16.msra.mxu0 %v1928
        %2169 = vmatprep.subr.bf16.mxu0 %v1937
        %2170 = vmatpush1.bf16.msra.mxu0 %v1936
        %2171 = vmatprep.subr.bf16.mxu0 %v1945
        %2172 = vmatpush1.bf16.msra.mxu0 %v1944
        %2173 = vmatprep.subr.bf16.mxu0 %v1953
        %2174 = vmatpush1.bf16.msra.mxu0 %v1952
        %2175 = vmatprep.subr.bf16.mxu0 %v1961
        %2176 = vmatpush1.bf16.msra.mxu0 %v1960
        %2177 = vmatprep.subr.bf16.mxu0 %v1969
        %2178 = vmatpush1.bf16.msra.mxu0 %v1968
        %2179 = vmatprep.subr.bf16.mxu0 %v1977
        %2180 = vmatpush1.bf16.msra.mxu0 %v1976
        %2181 = vmatprep.subr.bf16.mxu0 %v1985
        %2182 = vmatpush1.bf16.msra.mxu0 %v1984
        %2183 = vmatprep.subr.bf16.mxu0 %v1993
        %2184 = vmatpush1.bf16.msra.mxu0 %v1992
        %2185 = vmatprep.subr.bf16.mxu0 %v2001
        %2186 = vmatpush1.bf16.msra.mxu0 %v2000
        %2187 = vmatprep.subr.bf16.mxu0 %v2009
        %2188 = vmatpush1.bf16.msra.mxu0 %v2008
        %2189 = vmatprep.subr.bf16.mxu0 %v2017
        %2190 = vmatpush1.bf16.msra.mxu0 %v2016
        %2191 = vmatprep.subr.bf16.mxu0 %v2025
        %2192 = vmatpush1.bf16.msra.mxu0 %v2024
        %2193 = vmatprep.subr.bf16.mxu0 %v2033
        %2194 = vmatpush1.bf16.msra.mxu0 %v2032
        %2195 = vmatprep.mubr.bf16.mxu0 %v1271
        %2196 = vmatmul.mubr.bf16.gmra.mrb[0].mxu0 %v1270
        %v2197 = vpop.f32.mrb[0].mxu0
        %v2198 = vadd.f32 %v2157, %v2197
        %v2199 = vpop.f32.mrb[0].mxu0
        %v2200 = vadd.f32 %v2159, %v2199
        %v2201 = vpop.f32.mrb[0].mxu0
        %v2202 = vpop.f32.mrb[0].mxu0
        %2203 = vdwg.mxu0
        %2204 = vmatprep.subr.bf16.mxu0 %v1531
        %2205 = vmatpush1.bf16.msra.mxu0 %v1530
        %2206 = vmatprep.subr.bf16.mxu0 %v1539
        %2207 = vmatpush1.bf16.msra.mxu0 %v1538
        %2208 = vmatprep.subr.bf16.mxu0 %v1547
        %2209 = vmatpush1.bf16.msra.mxu0 %v1546
        %2210 = vmatprep.subr.bf16.mxu0 %v1555
        %2211 = vmatpush1.bf16.msra.mxu0 %v1554
        %2212 = vmatprep.subr.bf16.mxu0 %v1563
        %2213 = vmatpush1.bf16.msra.mxu0 %v1562
        %2214 = vmatprep.subr.bf16.mxu0 %v1571
        %2215 = vmatpush1.bf16.msra.mxu0 %v1570
        %2216 = vmatprep.subr.bf16.mxu0 %v1579
        %2217 = vmatpush1.bf16.msra.mxu0 %v1578
        %2218 = vmatprep.subr.bf16.mxu0 %v1587
        %2219 = vmatpush1.bf16.msra.mxu0 %v1586
        %2220 = vmatprep.subr.bf16.mxu0 %v1595
        %2221 = vmatpush1.bf16.msra.mxu0 %v1594
        %2222 = vmatprep.subr.bf16.mxu0 %v1603
        %2223 = vmatpush1.bf16.msra.mxu0 %v1602
        %2224 = vmatprep.subr.bf16.mxu0 %v1611
        %2225 = vmatpush1.bf16.msra.mxu0 %v1610
        %2226 = vmatprep.subr.bf16.mxu0 %v1619
        %2227 = vmatpush1.bf16.msra.mxu0 %v1618
        %2228 = vmatprep.subr.bf16.mxu0 %v1627
        %2229 = vmatpush1.bf16.msra.mxu0 %v1626
        %2230 = vmatprep.subr.bf16.mxu0 %v1635
        %2231 = vmatpush1.bf16.msra.mxu0 %v1634
        %2232 = vmatprep.subr.bf16.mxu0 %v1643
        %2233 = vmatpush1.bf16.msra.mxu0 %v1642
        %2234 = vmatprep.subr.bf16.mxu0 %v1651
        %2235 = vmatpush1.bf16.msra.mxu0 %v1650
        %2236 = vmatprep.mubr.bf16.mxu0 %v1265
        %2237 = vmatmul.mubr.bf16.gmra.mrb[0].mxu0 %v1264
        %v2238 = vpop.f32.mrb[0].mxu0
        %v2239 = vadd.f32 0.0, %v2238
        %v2240 = vpop.f32.mrb[0].mxu0
        %v2241 = vadd.f32 0.0, %v2240
        %v2242 = vpop.f32.mrb[0].mxu0
        %v2243 = vpop.f32.mrb[0].mxu0
        %2244 = vdwg.mxu0
        %2245 = vmatprep.subr.bf16.mxu0 %v1659
        %2246 = vmatpush1.bf16.msra.mxu0 %v1658
        %2247 = vmatprep.subr.bf16.mxu0 %v1667
        %2248 = vmatpush1.bf16.msra.mxu0 %v1666
        %2249 = vmatprep.subr.bf16.mxu0 %v1675
        %2250 = vmatpush1.bf16.msra.mxu0 %v1674
        %2251 = vmatprep.subr.bf16.mxu0 %v1683
        %2252 = vmatpush1.bf16.msra.mxu0 %v1682
        %2253 = vmatprep.subr.bf16.mxu0 %v1691
        %2254 = vmatpush1.bf16.msra.mxu0 %v1690
        %2255 = vmatprep.subr.bf16.mxu0 %v1699
        %2256 = vmatpush1.bf16.msra.mxu0 %v1698
        %2257 = vmatprep.subr.bf16.mxu0 %v1707
        %2258 = vmatpush1.bf16.msra.mxu0 %v1706
        %2259 = vmatprep.subr.bf16.mxu0 %v1715
        %2260 = vmatpush1.bf16.msra.mxu0 %v1714
        %2261 = vmatprep.subr.bf16.mxu0 %v1723
        %2262 = vmatpush1.bf16.msra.mxu0 %v1722
        %2263 = vmatprep.subr.bf16.mxu0 %v1731
        %2264 = vmatpush1.bf16.msra.mxu0 %v1730
        %2265 = vmatprep.subr.bf16.mxu0 %v1739
        %2266 = vmatpush1.bf16.msra.mxu0 %v1738
        %2267 = vmatprep.subr.bf16.mxu0 %v1747
        %2268 = vmatpush1.bf16.msra.mxu0 %v1746
        %2269 = vmatprep.subr.bf16.mxu0 %v1755
        %2270 = vmatpush1.bf16.msra.mxu0 %v1754
        %2271 = vmatprep.subr.bf16.mxu0 %v1763
        %2272 = vmatpush1.bf16.msra.mxu0 %v1762
        %2273 = vmatprep.subr.bf16.mxu0 %v1771
        %2274 = vmatpush1.bf16.msra.mxu0 %v1770
        %2275 = vmatprep.subr.bf16.mxu0 %v1779
        %2276 = vmatpush1.bf16.msra.mxu0 %v1778
        %2277 = vmatprep.mubr.bf16.mxu0 %v1267
        %2278 = vmatmul.mubr.bf16.gmra.mrb[0].mxu0 %v1266
        %v2279 = vpop.f32.mrb[0].mxu0
        %v2280 = vadd.f32 %v2239, %v2279
        %v2281 = vpop.f32.mrb[0].mxu0
        %v2282 = vadd.f32 %v2241, %v2281
        %v2283 = vpop.f32.mrb[0].mxu0
        %v2284 = vpop.f32.mrb[0].mxu0
        %2285 = vdwg.mxu0
        %2286 = vmatprep.subr.bf16.mxu0 %v1787
        %2287 = vmatpush1.bf16.msra.mxu0 %v1786
        %2288 = vmatprep.subr.bf16.mxu0 %v1795
        %2289 = vmatpush1.bf16.msra.mxu0 %v1794
        %2290 = vmatprep.subr.bf16.mxu0 %v1803
        %2291 = vmatpush1.bf16.msra.mxu0 %v1802
        %2292 = vmatprep.subr.bf16.mxu0 %v1811
        %2293 = vmatpush1.bf16.msra.mxu0 %v1810
        %2294 = vmatprep.subr.bf16.mxu0 %v1819
        %2295 = vmatpush1.bf16.msra.mxu0 %v1818
        %2296 = vmatprep.subr.bf16.mxu0 %v1827
        %2297 = vmatpush1.bf16.msra.mxu0 %v1826
        %2298 = vmatprep.subr.bf16.mxu0 %v1835
        %2299 = vmatpush1.bf16.msra.mxu0 %v1834
        %2300 = vmatprep.subr.bf16.mxu0 %v1843
        %2301 = vmatpush1.bf16.msra.mxu0 %v1842
        %2302 = vmatprep.subr.bf16.mxu0 %v1851
        %2303 = vmatpush1.bf16.msra.mxu0 %v1850
        %2304 = vmatprep.subr.bf16.mxu0 %v1859
        %2305 = vmatpush1.bf16.msra.mxu0 %v1858
        %2306 = vmatprep.subr.bf16.mxu0 %v1867
        %2307 = vmatpush1.bf16.msra.mxu0 %v1866
        %2308 = vmatprep.subr.bf16.mxu0 %v1875
        %2309 = vmatpush1.bf16.msra.mxu0 %v1874
        %2310 = vmatprep.subr.bf16.mxu0 %v1883
        %2311 = vmatpush1.bf16.msra.mxu0 %v1882
        %2312 = vmatprep.subr.bf16.mxu0 %v1891
        %2313 = vmatpush1.bf16.msra.mxu0 %v1890
        %2314 = vmatprep.subr.bf16.mxu0 %v1899
        %2315 = vmatpush1.bf16.msra.mxu0 %v1898
        %2316 = vmatprep.subr.bf16.mxu0 %v1907
        %2317 = vmatpush1.bf16.msra.mxu0 %v1906
        %2318 = vmatprep.mubr.bf16.mxu0 %v1269
        %2319 = vmatmul.mubr.bf16.gmra.mrb[0].mxu0 %v1268
        %v2320 = vpop.f32.mrb[0].mxu0
        %v2321 = vadd.f32 %v2280, %v2320
        %v2322 = vpop.f32.mrb[0].mxu0
        %v2323 = vadd.f32 %v2282, %v2322
        %v2324 = vpop.f32.mrb[0].mxu0
        %v2325 = vpop.f32.mrb[0].mxu0
        %2326 = vdwg.mxu0
        %2327 = vmatprep.subr.bf16.mxu0 %v1915
        %2328 = vmatpush1.bf16.msra.mxu0 %v1914
        %2329 = vmatprep.subr.bf16.mxu0 %v1923
        %2330 = vmatpush1.bf16.msra.mxu0 %v1922
        %2331 = vmatprep.subr.bf16.mxu0 %v1931
        %2332 = vmatpush1.bf16.msra.mxu0 %v1930
        %2333 = vmatprep.subr.bf16.mxu0 %v1939
        %2334 = vmatpush1.bf16.msra.mxu0 %v1938
        %2335 = vmatprep.subr.bf16.mxu0 %v1947
        %2336 = vmatpush1.bf16.msra.mxu0 %v1946
        %2337 = vmatprep.subr.bf16.mxu0 %v1955
        %2338 = vmatpush1.bf16.msra.mxu0 %v1954
        %2339 = vmatprep.subr.bf16.mxu0 %v1963
        %2340 = vmatpush1.bf16.msra.mxu0 %v1962
        %2341 = vmatprep.subr.bf16.mxu0 %v1971
        %2342 = vmatpush1.bf16.msra.mxu0 %v1970
        %2343 = vmatprep.subr.bf16.mxu0 %v1979
        %2344 = vmatpush1.bf16.msra.mxu0 %v1978
        %2345 = vmatprep.subr.bf16.mxu0 %v1987
        %2346 = vmatpush1.bf16.msra.mxu0 %v1986
        %2347 = vmatprep.subr.bf16.mxu0 %v1995
        %2348 = vmatpush1.bf16.msra.mxu0 %v1994
        %2349 = vmatprep.subr.bf16.mxu0 %v2003
        %2350 = vmatpush1.bf16.msra.mxu0 %v2002
        %2351 = vmatprep.subr.bf16.mxu0 %v2011
        %2352 = vmatpush1.bf16.msra.mxu0 %v2010
        %2353 = vmatprep.subr.bf16.mxu0 %v2019
        %2354 = vmatpush1.bf16.msra.mxu0 %v2018
        %2355 = vmatprep.subr.bf16.mxu0 %v2027
        %2356 = vmatpush1.bf16.msra.mxu0 %v2026
        %2357 = vmatprep.subr.bf16.mxu0 %v2035
        %2358 = vmatpush1.bf16.msra.mxu0 %v2034
        %2359 = vmatprep.mubr.bf16.mxu0 %v1271
        %2360 = vmatmul.mubr.bf16.gmra.mrb[0].mxu0 %v1270
        %v2361 = vpop.f32.mrb[0].mxu0
        %v2362 = vadd.f32 %v2321, %v2361
        %v2363 = vpop.f32.mrb[0].mxu0
        %v2364 = vadd.f32 %v2323, %v2363
        %v2365 = vpop.f32.mrb[0].mxu0
        %v2366 = vpop.f32.mrb[0].mxu0
        %2367 = vdwg.mxu0
        %2368 = vmatprep.subr.bf16.mxu0 %v1533
        %2369 = vmatpush1.bf16.msra.mxu0 %v1532
        %2370 = vmatprep.subr.bf16.mxu0 %v1541
        %2371 = vmatpush1.bf16.msra.mxu0 %v1540
        %2372 = vmatprep.subr.bf16.mxu0 %v1549
        %2373 = vmatpush1.bf16.msra.mxu0 %v1548
        %2374 = vmatprep.subr.bf16.mxu0 %v1557
        %2375 = vmatpush1.bf16.msra.mxu0 %v1556
        %2376 = vmatprep.subr.bf16.mxu0 %v1565
        %2377 = vmatpush1.bf16.msra.mxu0 %v1564
        %2378 = vmatprep.subr.bf16.mxu0 %v1573
        %2379 = vmatpush1.bf16.msra.mxu0 %v1572
        %2380 = vmatprep.subr.bf16.mxu0 %v1581
        %2381 = vmatpush1.bf16.msra.mxu0 %v1580
        %2382 = vmatprep.subr.bf16.mxu0 %v1589
        %2383 = vmatpush1.bf16.msra.mxu0 %v1588
        %2384 = vmatprep.subr.bf16.mxu0 %v1597
        %2385 = vmatpush1.bf16.msra.mxu0 %v1596
        %2386 = vmatprep.subr.bf16.mxu0 %v1605
        %2387 = vmatpush1.bf16.msra.mxu0 %v1604
        %2388 = vmatprep.subr.bf16.mxu0 %v1613
        %2389 = vmatpush1.bf16.msra.mxu0 %v1612
        %2390 = vmatprep.subr.bf16.mxu0 %v1621
        %2391 = vmatpush1.bf16.msra.mxu0 %v1620
        %2392 = vmatprep.subr.bf16.mxu0 %v1629
        %2393 = vmatpush1.bf16.msra.mxu0 %v1628
        %2394 = vmatprep.subr.bf16.mxu0 %v1637
        %2395 = vmatpush1.bf16.msra.mxu0 %v1636
        %2396 = vmatprep.subr.bf16.mxu0 %v1645
        %2397 = vmatpush1.bf16.msra.mxu0 %v1644
        %2398 = vmatprep.subr.bf16.mxu0 %v1653
        %2399 = vmatpush1.bf16.msra.mxu0 %v1652
        %2400 = vmatprep.mubr.bf16.mxu0 %v1265
        %2401 = vmatmul.mubr.bf16.gmra.mrb[0].mxu0 %v1264
        %v2402 = vpop.f32.mrb[0].mxu0
        %v2403 = vadd.f32 0.0, %v2402
        %v2404 = vpop.f32.mrb[0].mxu0
        %v2405 = vadd.f32 0.0, %v2404
        %v2406 = vpop.f32.mrb[0].mxu0
        %v2407 = vpop.f32.mrb[0].mxu0
        %2408 = vdwg.mxu0
        %2409 = vmatprep.subr.bf16.mxu0 %v1661
        %2410 = vmatpush1.bf16.msra.mxu0 %v1660
        %2411 = vmatprep.subr.bf16.mxu0 %v1669
        %2412 = vmatpush1.bf16.msra.mxu0 %v1668
        %2413 = vmatprep.subr.bf16.mxu0 %v1677
        %2414 = vmatpush1.bf16.msra.mxu0 %v1676
        %2415 = vmatprep.subr.bf16.mxu0 %v1685
        %2416 = vmatpush1.bf16.msra.mxu0 %v1684
        %2417 = vmatprep.subr.bf16.mxu0 %v1693
        %2418 = vmatpush1.bf16.msra.mxu0 %v1692
        %2419 = vmatprep.subr.bf16.mxu0 %v1701
        %2420 = vmatpush1.bf16.msra.mxu0 %v1700
        %2421 = vmatprep.subr.bf16.mxu0 %v1709
        %2422 = vmatpush1.bf16.msra.mxu0 %v1708
        %2423 = vmatprep.subr.bf16.mxu0 %v1717
        %2424 = vmatpush1.bf16.msra.mxu0 %v1716
        %2425 = vmatprep.subr.bf16.mxu0 %v1725
        %2426 = vmatpush1.bf16.msra.mxu0 %v1724
        %2427 = vmatprep.subr.bf16.mxu0 %v1733
        %2428 = vmatpush1.bf16.msra.mxu0 %v1732
        %2429 = vmatprep.subr.bf16.mxu0 %v1741
        %2430 = vmatpush1.bf16.msra.mxu0 %v1740
        %2431 = vmatprep.subr.bf16.mxu0 %v1749
        %2432 = vmatpush1.bf16.msra.mxu0 %v1748
        %2433 = vmatprep.subr.bf16.mxu0 %v1757
        %2434 = vmatpush1.bf16.msra.mxu0 %v1756
        %2435 = vmatprep.subr.bf16.mxu0 %v1765
        %2436 = vmatpush1.bf16.msra.mxu0 %v1764
        %2437 = vmatprep.subr.bf16.mxu0 %v1773
        %2438 = vmatpush1.bf16.msra.mxu0 %v1772
        %2439 = vmatprep.subr.bf16.mxu0 %v1781
        %2440 = vmatpush1.bf16.msra.mxu0 %v1780
        %2441 = vmatprep.mubr.bf16.mxu0 %v1267
        %2442 = vmatmul.mubr.bf16.gmra.mrb[0].mxu0 %v1266
        %v2443 = vpop.f32.mrb[0].mxu0
        %v2444 = vadd.f32 %v2403, %v2443
        %v2445 = vpop.f32.mrb[0].mxu0
        %v2446 = vadd.f32 %v2405, %v2445
        %v2447 = vpop.f32.mrb[0].mxu0
        %v2448 = vpop.f32.mrb[0].mxu0
        %2449 = vdwg.mxu0
        %2450 = vmatprep.subr.bf16.mxu0 %v1789
        %2451 = vmatpush1.bf16.msra.mxu0 %v1788
        %2452 = vmatprep.subr.bf16.mxu0 %v1797
        %2453 = vmatpush1.bf16.msra.mxu0 %v1796
        %2454 = vmatprep.subr.bf16.mxu0 %v1805
        %2455 = vmatpush1.bf16.msra.mxu0 %v1804
        %2456 = vmatprep.subr.bf16.mxu0 %v1813
        %2457 = vmatpush1.bf16.msra.mxu0 %v1812
        %2458 = vmatprep.subr.bf16.mxu0 %v1821
        %2459 = vmatpush1.bf16.msra.mxu0 %v1820
        %2460 = vmatprep.subr.bf16.mxu0 %v1829
        %2461 = vmatpush1.bf16.msra.mxu0 %v1828
        %2462 = vmatprep.subr.bf16.mxu0 %v1837
        %2463 = vmatpush1.bf16.msra.mxu0 %v1836
        %2464 = vmatprep.subr.bf16.mxu0 %v1845
        %2465 = vmatpush1.bf16.msra.mxu0 %v1844
        %2466 = vmatprep.subr.bf16.mxu0 %v1853
        %2467 = vmatpush1.bf16.msra.mxu0 %v1852
        %2468 = vmatprep.subr.bf16.mxu0 %v1861
        %2469 = vmatpush1.bf16.msra.mxu0 %v1860
        %2470 = vmatprep.subr.bf16.mxu0 %v1869
        %2471 = vmatpush1.bf16.msra.mxu0 %v1868
        %2472 = vmatprep.subr.bf16.mxu0 %v1877
        %2473 = vmatpush1.bf16.msra.mxu0 %v1876
        %2474 = vmatprep.subr.bf16.mxu0 %v1885
        %2475 = vmatpush1.bf16.msra.mxu0 %v1884
        %2476 = vmatprep.subr.bf16.mxu0 %v1893
        %2477 = vmatpush1.bf16.msra.mxu0 %v1892
        %2478 = vmatprep.subr.bf16.mxu0 %v1901
        %2479 = vmatpush1.bf16.msra.mxu0 %v1900
        %2480 = vmatprep.subr.bf16.mxu0 %v1909
        %2481 = vmatpush1.bf16.msra.mxu0 %v1908
        %2482 = vmatprep.mubr.bf16.mxu0 %v1269
        %2483 = vmatmul.mubr.bf16.gmra.mrb[0].mxu0 %v1268
        %v2484 = vpop.f32.mrb[0].mxu0
        %v2485 = vadd.f32 %v2444, %v2484
        %v2486 = vpop.f32.mrb[0].mxu0
        %v2487 = vadd.f32 %v2446, %v2486
        %v2488 = vpop.f32.mrb[0].mxu0
        %v2489 = vpop.f32.mrb[0].mxu0
        %2490 = vdwg.mxu0
        %2491 = vmatprep.subr.bf16.mxu0 %v1917
        %2492 = vmatpush1.bf16.msra.mxu0 %v1916
        %2493 = vmatprep.subr.bf16.mxu0 %v1925
        %2494 = vmatpush1.bf16.msra.mxu0 %v1924
        %2495 = vmatprep.subr.bf16.mxu0 %v1933
        %2496 = vmatpush1.bf16.msra.mxu0 %v1932
        %2497 = vmatprep.subr.bf16.mxu0 %v1941
        %2498 = vmatpush1.bf16.msra.mxu0 %v1940
        %2499 = vmatprep.subr.bf16.mxu0 %v1949
        %2500 = vmatpush1.bf16.msra.mxu0 %v1948
        %2501 = vmatprep.subr.bf16.mxu0 %v1957
        %2502 = vmatpush1.bf16.msra.mxu0 %v1956
        %2503 = vmatprep.subr.bf16.mxu0 %v1965
        %2504 = vmatpush1.bf16.msra.mxu0 %v1964
        %2505 = vmatprep.subr.bf16.mxu0 %v1973
        %2506 = vmatpush1.bf16.msra.mxu0 %v1972
        %2507 = vmatprep.subr.bf16.mxu0 %v1981
        %2508 = vmatpush1.bf16.msra.mxu0 %v1980
        %2509 = vmatprep.subr.bf16.mxu0 %v1989
        %2510 = vmatpush1.bf16.msra.mxu0 %v1988
        %2511 = vmatprep.subr.bf16.mxu0 %v1997
        %2512 = vmatpush1.bf16.msra.mxu0 %v1996
        %2513 = vmatprep.subr.bf16.mxu0 %v2005
        %2514 = vmatpush1.bf16.msra.mxu0 %v2004
        %2515 = vmatprep.subr.bf16.mxu0 %v2013
        %2516 = vmatpush1.bf16.msra.mxu0 %v2012
        %2517 = vmatprep.subr.bf16.mxu0 %v2021
        %2518 = vmatpush1.bf16.msra.mxu0 %v2020
        %2519 = vmatprep.subr.bf16.mxu0 %v2029
        %2520 = vmatpush1.bf16.msra.mxu0 %v2028
        %2521 = vmatprep.subr.bf16.mxu0 %v2037
        %2522 = vmatpush1.bf16.msra.mxu0 %v2036
        %2523 = vmatprep.mubr.bf16.mxu0 %v1271
        %2524 = vmatmul.mubr.bf16.gmra.mrb[0].mxu0 %v1270
        %v2525 = vpop.f32.mrb[0].mxu0
        %v2526 = vadd.f32 %v2485, %v2525
        %v2527 = vpop.f32.mrb[0].mxu0
        %v2528 = vadd.f32 %v2487, %v2527
        %v2529 = vpop.f32.mrb[0].mxu0
        %v2530 = vpop.f32.mrb[0].mxu0
        %2531 = vdwg.mxu0
        %2532 = vmatprep.subr.bf16.mxu0 %v1535
        %2533 = vmatpush1.bf16.msra.mxu0 %v1534
        %2534 = vmatprep.subr.bf16.mxu0 %v1543
        %2535 = vmatpush1.bf16.msra.mxu0 %v1542
        %2536 = vmatprep.subr.bf16.mxu0 %v1551
        %2537 = vmatpush1.bf16.msra.mxu0 %v1550
        %2538 = vmatprep.subr.bf16.mxu0 %v1559
        %2539 = vmatpush1.bf16.msra.mxu0 %v1558
        %2540 = vmatprep.subr.bf16.mxu0 %v1567
        %2541 = vmatpush1.bf16.msra.mxu0 %v1566
        %2542 = vmatprep.subr.bf16.mxu0 %v1575
        %2543 = vmatpush1.bf16.msra.mxu0 %v1574
        %2544 = vmatprep.subr.bf16.mxu0 %v1583
        %2545 = vmatpush1.bf16.msra.mxu0 %v1582
        %2546 = vmatprep.subr.bf16.mxu0 %v1591
        %2547 = vmatpush1.bf16.msra.mxu0 %v1590
        %2548 = vmatprep.subr.bf16.mxu0 %v1599
        %2549 = vmatpush1.bf16.msra.mxu0 %v1598
        %2550 = vmatprep.subr.bf16.mxu0 %v1607
        %2551 = vmatpush1.bf16.msra.mxu0 %v1606
        %2552 = vmatprep.subr.bf16.mxu0 %v1615
        %2553 = vmatpush1.bf16.msra.mxu0 %v1614
        %2554 = vmatprep.subr.bf16.mxu0 %v1623
        %2555 = vmatpush1.bf16.msra.mxu0 %v1622
        %2556 = vmatprep.subr.bf16.mxu0 %v1631
        %2557 = vmatpush1.bf16.msra.mxu0 %v1630
        %2558 = vmatprep.subr.bf16.mxu0 %v1639
        %2559 = vmatpush1.bf16.msra.mxu0 %v1638
        %2560 = vmatprep.subr.bf16.mxu0 %v1647
        %2561 = vmatpush1.bf16.msra.mxu0 %v1646
        %2562 = vmatprep.subr.bf16.mxu0 %v1655
        %2563 = vmatpush1.bf16.msra.mxu0 %v1654
        %2564 = vmatprep.mubr.bf16.mxu0 %v1265
        %2565 = vmatmul.mubr.bf16.gmra.mrb[0].mxu0 %v1264
        %v2566 = vpop.f32.mrb[0].mxu0
        %v2567 = vadd.f32 0.0, %v2566
        %v2568 = vpop.f32.mrb[0].mxu0
        %v2569 = vadd.f32 0.0, %v2568
        %v2570 = vpop.f32.mrb[0].mxu0
        %v2571 = vpop.f32.mrb[0].mxu0
        %2572 = vdwg.mxu0
        %2573 = vmatprep.subr.bf16.mxu0 %v1663
        %2574 = vmatpush1.bf16.msra.mxu0 %v1662
        %2575 = vmatprep.subr.bf16.mxu0 %v1671
        %2576 = vmatpush1.bf16.msra.mxu0 %v1670
        %2577 = vmatprep.subr.bf16.mxu0 %v1679
        %2578 = vmatpush1.bf16.msra.mxu0 %v1678
        %2579 = vmatprep.subr.bf16.mxu0 %v1687
        %2580 = vmatpush1.bf16.msra.mxu0 %v1686
        %2581 = vmatprep.subr.bf16.mxu0 %v1695
        %2582 = vmatpush1.bf16.msra.mxu0 %v1694
        %2583 = vmatprep.subr.bf16.mxu0 %v1703
        %2584 = vmatpush1.bf16.msra.mxu0 %v1702
        %2585 = vmatprep.subr.bf16.mxu0 %v1711
        %2586 = vmatpush1.bf16.msra.mxu0 %v1710
        %2587 = vmatprep.subr.bf16.mxu0 %v1719
        %2588 = vmatpush1.bf16.msra.mxu0 %v1718
        %2589 = vmatprep.subr.bf16.mxu0 %v1727
        %2590 = vmatpush1.bf16.msra.mxu0 %v1726
        %2591 = vmatprep.subr.bf16.mxu0 %v1735
        %2592 = vmatpush1.bf16.msra.mxu0 %v1734
        %2593 = vmatprep.subr.bf16.mxu0 %v1743
        %2594 = vmatpush1.bf16.msra.mxu0 %v1742
        %2595 = vmatprep.subr.bf16.mxu0 %v1751
        %2596 = vmatpush1.bf16.msra.mxu0 %v1750
        %2597 = vmatprep.subr.bf16.mxu0 %v1759
        %2598 = vmatpush1.bf16.msra.mxu0 %v1758
        %2599 = vmatprep.subr.bf16.mxu0 %v1767
        %2600 = vmatpush1.bf16.msra.mxu0 %v1766
        %2601 = vmatprep.subr.bf16.mxu0 %v1775
        %2602 = vmatpush1.bf16.msra.mxu0 %v1774
        %2603 = vmatprep.subr.bf16.mxu0 %v1783
        %2604 = vmatpush1.bf16.msra.mxu0 %v1782
        %2605 = vmatprep.mubr.bf16.mxu0 %v1267
        %2606 = vmatmul.mubr.bf16.gmra.mrb[0].mxu0 %v1266
        %v2607 = vpop.f32.mrb[0].mxu0
        %v2608 = vadd.f32 %v2567, %v2607
        %v2609 = vpop.f32.mrb[0].mxu0
        %v2610 = vadd.f32 %v2569, %v2609
        %v2611 = vpop.f32.mrb[0].mxu0
        %v2612 = vpop.f32.mrb[0].mxu0
        %2613 = vdwg.mxu0
        %2614 = vmatprep.subr.bf16.mxu0 %v1791
        %2615 = vmatpush1.bf16.msra.mxu0 %v1790
        %2616 = vmatprep.subr.bf16.mxu0 %v1799
        %2617 = vmatpush1.bf16.msra.mxu0 %v1798
        %2618 = vmatprep.subr.bf16.mxu0 %v1807
        %2619 = vmatpush1.bf16.msra.mxu0 %v1806
        %2620 = vmatprep.subr.bf16.mxu0 %v1815
        %2621 = vmatpush1.bf16.msra.mxu0 %v1814
        %2622 = vmatprep.subr.bf16.mxu0 %v1823
        %2623 = vmatpush1.bf16.msra.mxu0 %v1822
        %2624 = vmatprep.subr.bf16.mxu0 %v1831
        %2625 = vmatpush1.bf16.msra.mxu0 %v1830
        %2626 = vmatprep.subr.bf16.mxu0 %v1839
        %2627 = vmatpush1.bf16.msra.mxu0 %v1838
        %2628 = vmatprep.subr.bf16.mxu0 %v1847
        %2629 = vmatpush1.bf16.msra.mxu0 %v1846
        %2630 = vmatprep.subr.bf16.mxu0 %v1855
        %2631 = vmatpush1.bf16.msra.mxu0 %v1854
        %2632 = vmatprep.subr.bf16.mxu0 %v1863
        %2633 = vmatpush1.bf16.msra.mxu0 %v1862
        %2634 = vmatprep.subr.bf16.mxu0 %v1871
        %2635 = vmatpush1.bf16.msra.mxu0 %v1870
        %2636 = vmatprep.subr.bf16.mxu0 %v1879
        %2637 = vmatpush1.bf16.msra.mxu0 %v1878
        %2638 = vmatprep.subr.bf16.mxu0 %v1887
        %2639 = vmatpush1.bf16.msra.mxu0 %v1886
        %2640 = vmatprep.subr.bf16.mxu0 %v1895
        %2641 = vmatpush1.bf16.msra.mxu0 %v1894
        %2642 = vmatprep.subr.bf16.mxu0 %v1903
        %2643 = vmatpush1.bf16.msra.mxu0 %v1902
        %2644 = vmatprep.subr.bf16.mxu0 %v1911
        %2645 = vmatpush1.bf16.msra.mxu0 %v1910
        %2646 = vmatprep.mubr.bf16.mxu0 %v1269
        %2647 = vmatmul.mubr.bf16.gmra.mrb[0].mxu0 %v1268
        %v2648 = vpop.f32.mrb[0].mxu0
        %v2649 = vadd.f32 %v2608, %v2648
        %v2650 = vpop.f32.mrb[0].mxu0
        %v2651 = vadd.f32 %v2610, %v2650
        %v2652 = vpop.f32.mrb[0].mxu0
        %v2653 = vpop.f32.mrb[0].mxu0
        %2654 = vdwg.mxu0
        %2655 = vmatprep.subr.bf16.mxu0 %v1919
        %2656 = vmatpush1.bf16.msra.mxu0 %v1918
        %2657 = vmatprep.subr.bf16.mxu0 %v1927
        %2658 = vmatpush1.bf16.msra.mxu0 %v1926
        %2659 = vmatprep.subr.bf16.mxu0 %v1935
        %2660 = vmatpush1.bf16.msra.mxu0 %v1934
        %2661 = vmatprep.subr.bf16.mxu0 %v1943
        %2662 = vmatpush1.bf16.msra.mxu0 %v1942
        %2663 = vmatprep.subr.bf16.mxu0 %v1951
        %2664 = vmatpush1.bf16.msra.mxu0 %v1950
        %2665 = vmatprep.subr.bf16.mxu0 %v1959
        %2666 = vmatpush1.bf16.msra.mxu0 %v1958
        %2667 = vmatprep.subr.bf16.mxu0 %v1967
        %2668 = vmatpush1.bf16.msra.mxu0 %v1966
        %2669 = vmatprep.subr.bf16.mxu0 %v1975
        %2670 = vmatpush1.bf16.msra.mxu0 %v1974
        %2671 = vmatprep.subr.bf16.mxu0 %v1983
        %2672 = vmatpush1.bf16.msra.mxu0 %v1982
        %2673 = vmatprep.subr.bf16.mxu0 %v1991
        %2674 = vmatpush1.bf16.msra.mxu0 %v1990
        %2675 = vmatprep.subr.bf16.mxu0 %v1999
        %2676 = vmatpush1.bf16.msra.mxu0 %v1998
        %2677 = vmatprep.subr.bf16.mxu0 %v2007
        %2678 = vmatpush1.bf16.msra.mxu0 %v2006
        %2679 = vmatprep.subr.bf16.mxu0 %v2015
        %2680 = vmatpush1.bf16.msra.mxu0 %v2014
        %2681 = vmatprep.subr.bf16.mxu0 %v2023
        %2682 = vmatpush1.bf16.msra.mxu0 %v2022
        %2683 = vmatprep.subr.bf16.mxu0 %v2031
        %2684 = vmatpush1.bf16.msra.mxu0 %v2030
        %2685 = vmatprep.subr.bf16.mxu0 %v2039
        %2686 = vmatpush1.bf16.msra.mxu0 %v2038
        %2687 = vmatprep.mubr.bf16.mxu0 %v1271
        %2688 = vmatmul.mubr.bf16.gmra.mrb[0].mxu0 %v1270
        %v2689 = vpop.f32.mrb[0].mxu0
        %v2690 = vadd.f32 %v2649, %v2689
        %v2691 = vpop.f32.mrb[0].mxu0
        %v2692 = vadd.f32 %v2651, %v2691
        %v2693 = vpop.f32.mrb[0].mxu0
        %v2694 = vpop.f32.mrb[0].mxu0
        %2695 = vdwg.mxu0
        %v2697 = vlaneseq
        %v2698 = vshrl.u32 %v2697, 7
        %v2699 = vsub.s32 0, %v2698
        %v2700 = vrot.slane %v1257, %v2699
        %v2701 = vlaneseq
        %v2702 = vshrl.u32 %v2701, 7
        %v2703 = vsub.s32 1, %v2702
        %v2704 = vrot.slane %v1257, %v2703
        %v2705 = vlaneseq
        %v2706 = vshrl.u32 %v2705, 7
        %v2707 = vsub.s32 2, %v2706
        %v2708 = vrot.slane %v1257, %v2707
        %v2709 = vlaneseq
        %v2710 = vshrl.u32 %v2709, 7
        %v2711 = vsub.s32 3, %v2710
        %v2712 = vrot.slane %v1257, %v2711
        %v2713 = vlaneseq
        %v2714 = vshrl.u32 %v2713, 7
        %v2715 = vsub.s32 4, %v2714
        %v2716 = vrot.slane %v1257, %v2715
        %v2717 = vlaneseq
        %v2718 = vshrl.u32 %v2717, 7
        %v2719 = vsub.s32 5, %v2718
        %v2720 = vrot.slane %v1257, %v2719
        %v2721 = vlaneseq
        %v2722 = vshrl.u32 %v2721, 7
        %v2723 = vsub.s32 6, %v2722
        %v2724 = vrot.slane %v1257, %v2723
        %v2725 = vlaneseq
        %v2726 = vshrl.u32 %v2725, 7
        %v2727 = vsub.s32 7, %v2726
        %v2728 = vrot.slane %v1257, %v2727
        %v2737 = vmul.f32 %v2198, %v2700
        %v2738 = vmul.f32 %v2200, %v2704
        %v2739 = vmul.f32 %v2362, %v2708
        %v2740 = vmul.f32 %v2364, %v2712
        %v2741 = vmul.f32 %v2526, %v2716
        %v2742 = vmul.f32 %v2528, %v2720
        %v2743 = vmul.f32 %v2690, %v2724
        %v2744 = vmul.f32 %v2692, %v2728
        %v2746 = vlaneseq
        %v2747 = vshrl.u32 %v2746, 7
        %v2748 = vsub.s32 0, %v2747
        %v2749 = vrot.slane %v1259, %v2748
        %v2750 = vlaneseq
        %v2751 = vshrl.u32 %v2750, 7
        %v2752 = vsub.s32 1, %v2751
        %v2753 = vrot.slane %v1259, %v2752
        %v2754 = vlaneseq
        %v2755 = vshrl.u32 %v2754, 7
        %v2756 = vsub.s32 2, %v2755
        %v2757 = vrot.slane %v1259, %v2756
        %v2758 = vlaneseq
        %v2759 = vshrl.u32 %v2758, 7
        %v2760 = vsub.s32 3, %v2759
        %v2761 = vrot.slane %v1259, %v2760
        %v2762 = vlaneseq
        %v2763 = vshrl.u32 %v2762, 7
        %v2764 = vsub.s32 4, %v2763
        %v2765 = vrot.slane %v1259, %v2764
        %v2766 = vlaneseq
        %v2767 = vshrl.u32 %v2766, 7
        %v2768 = vsub.s32 5, %v2767
        %v2769 = vrot.slane %v1259, %v2768
        %v2770 = vlaneseq
        %v2771 = vshrl.u32 %v2770, 7
        %v2772 = vsub.s32 6, %v2771
        %v2773 = vrot.slane %v1259, %v2772
        %v2774 = vlaneseq
        %v2775 = vshrl.u32 %v2774, 7
        %v2776 = vsub.s32 7, %v2775
        %v2777 = vrot.slane %v1259, %v2776
        %v2786 = vadd.f32 %v2737, %v2749
        %v2787 = vadd.f32 %v2738, %v2753
        %v2788 = vadd.f32 %v2739, %v2757
        %v2789 = vadd.f32 %v2740, %v2761
        %v2790 = vadd.f32 %v2741, %v2765
        %v2791 = vadd.f32 %v2742, %v2769
        %v2792 = vadd.f32 %v2743, %v2773
        %v2793 = vadd.f32 %v2744, %v2777
        %v2794 = vmax.f32 %v2786, 0.0
        %v2795 = vmax.f32 %v2787, 0.0
        %v2796 = vmax.f32 %v2788, 0.0
        %v2797 = vmax.f32 %v2789, 0.0
        %v2798 = vmax.f32 %v2790, 0.0
        %v2799 = vmax.f32 %v2791, 0.0
        %v2800 = vmax.f32 %v2792, 0.0
        %v2801 = vmax.f32 %v2793, 0.0
        %v2802 = vpack.c.bf16 %v2794, %v2794
        %v2803 = vpack.c.bf16 %v2795, %v2795
        %v2804 = vpack.c.bf16 %v2796, %v2796
        %v2805 = vpack.c.bf16 %v2797, %v2797
        %v2806 = vpack.c.bf16 %v2798, %v2798
        %v2807 = vpack.c.bf16 %v2799, %v2799
        %v2808 = vpack.c.bf16 %v2800, %v2800
        %v2809 = vpack.c.bf16 %v2801, %v2801
        %v2810 = vld [vmem:[%s553] sm:$0xff]
        %v2811 = vld [vmem:[%s553 + $0x8] sm:$0xff]
        %v2812 = vld [vmem:[%s553 + $0x10] sm:$0xff]
        %v2813 = vld [vmem:[%s553 + $0x18] sm:$0xff]
        %v2814 = vld [vmem:[%s553 + $0x20] sm:$0xff]
        %v2815 = vld [vmem:[%s553 + $0x28] sm:$0xff]
        %v2816 = vld [vmem:[%s553 + $0x30] sm:$0xff]
        %v2817 = vld [vmem:[%s553 + $0x38] sm:$0xff]
        %v2818 = vld [vmem:[%s553 + $0x40] sm:$0xff]
        %v2819 = vld [vmem:[%s553 + $0x48] sm:$0xff]
        %v2820 = vld [vmem:[%s553 + $0x50] sm:$0xff]
        %v2821 = vld [vmem:[%s553 + $0x58] sm:$0xff]
        %v2822 = vld [vmem:[%s553 + $0x60] sm:$0xff]
        %v2823 = vld [vmem:[%s553 + $0x68] sm:$0xff]
        %v2824 = vld [vmem:[%s553 + $0x70] sm:$0xff]
        %v2825 = vld [vmem:[%s553 + $0x78] sm:$0xff]
        %v2826 = vld [vmem:[%s553 + $0x80] sm:$0xff]
        %v2827 = vld [vmem:[%s553 + $0x88] sm:$0xff]
        %v2828 = vld [vmem:[%s553 + $0x90] sm:$0xff]
        %v2829 = vld [vmem:[%s553 + $0x98] sm:$0xff]
        %v2830 = vld [vmem:[%s553 + $0xa0] sm:$0xff]
        %v2831 = vld [vmem:[%s553 + $0xa8] sm:$0xff]
        %v2832 = vld [vmem:[%s553 + $0xb0] sm:$0xff]
        %v2833 = vld [vmem:[%s553 + $0xb8] sm:$0xff]
        %v2834 = vld [vmem:[%s553 + $0xc0] sm:$0xff]
        %v2835 = vld [vmem:[%s553 + $0xc8] sm:$0xff]
        %v2836 = vld [vmem:[%s553 + $0xd0] sm:$0xff]
        %v2837 = vld [vmem:[%s553 + $0xd8] sm:$0xff]
        %v2838 = vld [vmem:[%s553 + $0xe0] sm:$0xff]
        %v2839 = vld [vmem:[%s553 + $0xe8] sm:$0xff]
        %v2840 = vld [vmem:[%s553 + $0xf0] sm:$0xff]
        %v2841 = vld [vmem:[%s553 + $0xf8] sm:$0xff]
        %v2842 = vld [vmem:[%s553 + $0x100] sm:$0xff]
        %v2843 = vld [vmem:[%s553 + $0x108] sm:$0xff]
        %v2844 = vld [vmem:[%s553 + $0x110] sm:$0xff]
        %v2845 = vld [vmem:[%s553 + $0x118] sm:$0xff]
        %v2846 = vld [vmem:[%s553 + $0x120] sm:$0xff]
        %v2847 = vld [vmem:[%s553 + $0x128] sm:$0xff]
        %v2848 = vld [vmem:[%s553 + $0x130] sm:$0xff]
        %v2849 = vld [vmem:[%s553 + $0x138] sm:$0xff]
        %v2850 = vld [vmem:[%s553 + $0x140] sm:$0xff]
        %v2851 = vld [vmem:[%s553 + $0x148] sm:$0xff]
        %v2852 = vld [vmem:[%s553 + $0x150] sm:$0xff]
        %v2853 = vld [vmem:[%s553 + $0x158] sm:$0xff]
        %v2854 = vld [vmem:[%s553 + $0x160] sm:$0xff]
        %v2855 = vld [vmem:[%s553 + $0x168] sm:$0xff]
        %v2856 = vld [vmem:[%s553 + $0x170] sm:$0xff]
        %v2857 = vld [vmem:[%s553 + $0x178] sm:$0xff]
        %v2858 = vld [vmem:[%s553 + $0x180] sm:$0xff]
        %v2859 = vld [vmem:[%s553 + $0x188] sm:$0xff]
        %v2860 = vld [vmem:[%s553 + $0x190] sm:$0xff]
        %v2861 = vld [vmem:[%s553 + $0x198] sm:$0xff]
        %v2862 = vld [vmem:[%s553 + $0x1a0] sm:$0xff]
        %v2863 = vld [vmem:[%s553 + $0x1a8] sm:$0xff]
        %v2864 = vld [vmem:[%s553 + $0x1b0] sm:$0xff]
        %v2865 = vld [vmem:[%s553 + $0x1b8] sm:$0xff]
        %v2866 = vld [vmem:[%s553 + $0x1c0] sm:$0xff]
        %v2867 = vld [vmem:[%s553 + $0x1c8] sm:$0xff]
        %v2868 = vld [vmem:[%s553 + $0x1d0] sm:$0xff]
        %v2869 = vld [vmem:[%s553 + $0x1d8] sm:$0xff]
        %v2870 = vld [vmem:[%s553 + $0x1e0] sm:$0xff]
        %v2871 = vld [vmem:[%s553 + $0x1e8] sm:$0xff]
        %v2872 = vld [vmem:[%s553 + $0x1f0] sm:$0xff]
        %v2873 = vld [vmem:[%s553 + $0x1f8] sm:$0xff]
        %v2874 = vld [vmem:[%s553 + $0x200] sm:$0xff]
        %v2875 = vld [vmem:[%s553 + $0x208] sm:$0xff]
        %v2876 = vld [vmem:[%s553 + $0x210] sm:$0xff]
        %v2877 = vld [vmem:[%s553 + $0x218] sm:$0xff]
        %v2878 = vld [vmem:[%s553 + $0x220] sm:$0xff]
        %v2879 = vld [vmem:[%s553 + $0x228] sm:$0xff]
        %v2880 = vld [vmem:[%s553 + $0x230] sm:$0xff]
        %v2881 = vld [vmem:[%s553 + $0x238] sm:$0xff]
        %v2882 = vld [vmem:[%s553 + $0x240] sm:$0xff]
        %v2883 = vld [vmem:[%s553 + $0x248] sm:$0xff]
        %v2884 = vld [vmem:[%s553 + $0x250] sm:$0xff]
        %v2885 = vld [vmem:[%s553 + $0x258] sm:$0xff]
        %v2886 = vld [vmem:[%s553 + $0x260] sm:$0xff]
        %v2887 = vld [vmem:[%s553 + $0x268] sm:$0xff]
        %v2888 = vld [vmem:[%s553 + $0x270] sm:$0xff]
        %v2889 = vld [vmem:[%s553 + $0x278] sm:$0xff]
        %v2890 = vld [vmem:[%s553 + $0x280] sm:$0xff]
        %v2891 = vld [vmem:[%s553 + $0x288] sm:$0xff]
        %v2892 = vld [vmem:[%s553 + $0x290] sm:$0xff]
        %v2893 = vld [vmem:[%s553 + $0x298] sm:$0xff]
        %v2894 = vld [vmem:[%s553 + $0x2a0] sm:$0xff]
        %v2895 = vld [vmem:[%s553 + $0x2a8] sm:$0xff]
        %v2896 = vld [vmem:[%s553 + $0x2b0] sm:$0xff]
        %v2897 = vld [vmem:[%s553 + $0x2b8] sm:$0xff]
        %v2898 = vld [vmem:[%s553 + $0x2c0] sm:$0xff]
        %v2899 = vld [vmem:[%s553 + $0x2c8] sm:$0xff]
        %v2900 = vld [vmem:[%s553 + $0x2d0] sm:$0xff]
        %v2901 = vld [vmem:[%s553 + $0x2d8] sm:$0xff]
        %v2902 = vld [vmem:[%s553 + $0x2e0] sm:$0xff]
        %v2903 = vld [vmem:[%s553 + $0x2e8] sm:$0xff]
        %v2904 = vld [vmem:[%s553 + $0x2f0] sm:$0xff]
        %v2905 = vld [vmem:[%s553 + $0x2f8] sm:$0xff]
        %v2906 = vld [vmem:[%s553 + $0x300] sm:$0xff]
        %v2907 = vld [vmem:[%s553 + $0x308] sm:$0xff]
        %v2908 = vld [vmem:[%s553 + $0x310] sm:$0xff]
        %v2909 = vld [vmem:[%s553 + $0x318] sm:$0xff]
        %v2910 = vld [vmem:[%s553 + $0x320] sm:$0xff]
        %v2911 = vld [vmem:[%s553 + $0x328] sm:$0xff]
        %v2912 = vld [vmem:[%s553 + $0x330] sm:$0xff]
        %v2913 = vld [vmem:[%s553 + $0x338] sm:$0xff]
        %v2914 = vld [vmem:[%s553 + $0x340] sm:$0xff]
        %v2915 = vld [vmem:[%s553 + $0x348] sm:$0xff]
        %v2916 = vld [vmem:[%s553 + $0x350] sm:$0xff]
        %v2917 = vld [vmem:[%s553 + $0x358] sm:$0xff]
        %v2918 = vld [vmem:[%s553 + $0x360] sm:$0xff]
        %v2919 = vld [vmem:[%s553 + $0x368] sm:$0xff]
        %v2920 = vld [vmem:[%s553 + $0x370] sm:$0xff]
        %v2921 = vld [vmem:[%s553 + $0x378] sm:$0xff]
        %v2922 = vld [vmem:[%s553 + $0x380] sm:$0xff]
        %v2923 = vld [vmem:[%s553 + $0x388] sm:$0xff]
        %v2924 = vld [vmem:[%s553 + $0x390] sm:$0xff]
        %v2925 = vld [vmem:[%s553 + $0x398] sm:$0xff]
        %v2926 = vld [vmem:[%s553 + $0x3a0] sm:$0xff]
        %v2927 = vld [vmem:[%s553 + $0x3a8] sm:$0xff]
        %v2928 = vld [vmem:[%s553 + $0x3b0] sm:$0xff]
        %v2929 = vld [vmem:[%s553 + $0x3b8] sm:$0xff]
        %v2930 = vld [vmem:[%s553 + $0x3c0] sm:$0xff]
        %v2931 = vld [vmem:[%s553 + $0x3c8] sm:$0xff]
        %v2932 = vld [vmem:[%s553 + $0x3d0] sm:$0xff]
        %v2933 = vld [vmem:[%s553 + $0x3d8] sm:$0xff]
        %v2934 = vld [vmem:[%s553 + $0x3e0] sm:$0xff]
        %v2935 = vld [vmem:[%s553 + $0x3e8] sm:$0xff]
        %v2936 = vld [vmem:[%s553 + $0x3f0] sm:$0xff]
        %v2937 = vld [vmem:[%s553 + $0x3f8] sm:$0xff]
        %v2938 = vld [vmem:[%s553 + $0x400] sm:$0xff]
        %v2939 = vld [vmem:[%s553 + $0x408] sm:$0xff]
        %v2940 = vld [vmem:[%s553 + $0x410] sm:$0xff]
        %v2941 = vld [vmem:[%s553 + $0x418] sm:$0xff]
        %v2942 = vld [vmem:[%s553 + $0x420] sm:$0xff]
        %v2943 = vld [vmem:[%s553 + $0x428] sm:$0xff]
        %v2944 = vld [vmem:[%s553 + $0x430] sm:$0xff]
        %v2945 = vld [vmem:[%s553 + $0x438] sm:$0xff]
        %v2946 = vld [vmem:[%s553 + $0x440] sm:$0xff]
        %v2947 = vld [vmem:[%s553 + $0x448] sm:$0xff]
        %v2948 = vld [vmem:[%s553 + $0x450] sm:$0xff]
        %v2949 = vld [vmem:[%s553 + $0x458] sm:$0xff]
        %v2950 = vld [vmem:[%s553 + $0x460] sm:$0xff]
        %v2951 = vld [vmem:[%s553 + $0x468] sm:$0xff]
        %v2952 = vld [vmem:[%s553 + $0x470] sm:$0xff]
        %v2953 = vld [vmem:[%s553 + $0x478] sm:$0xff]
        %v2954 = vld [vmem:[%s553 + $0x480] sm:$0xff]
        %v2955 = vld [vmem:[%s553 + $0x488] sm:$0xff]
        %v2956 = vld [vmem:[%s553 + $0x490] sm:$0xff]
        %v2957 = vld [vmem:[%s553 + $0x498] sm:$0xff]
        %v2958 = vld [vmem:[%s553 + $0x4a0] sm:$0xff]
        %v2959 = vld [vmem:[%s553 + $0x4a8] sm:$0xff]
        %v2960 = vld [vmem:[%s553 + $0x4b0] sm:$0xff]
        %v2961 = vld [vmem:[%s553 + $0x4b8] sm:$0xff]
        %v2962 = vld [vmem:[%s553 + $0x4c0] sm:$0xff]
        %v2963 = vld [vmem:[%s553 + $0x4c8] sm:$0xff]
        %v2964 = vld [vmem:[%s553 + $0x4d0] sm:$0xff]
        %v2965 = vld [vmem:[%s553 + $0x4d8] sm:$0xff]
        %v2966 = vld [vmem:[%s553 + $0x4e0] sm:$0xff]
        %v2967 = vld [vmem:[%s553 + $0x4e8] sm:$0xff]
        %v2968 = vld [vmem:[%s553 + $0x4f0] sm:$0xff]
        %v2969 = vld [vmem:[%s553 + $0x4f8] sm:$0xff]
        %v2970 = vld [vmem:[%s553 + $0x500] sm:$0xff]
        %v2971 = vld [vmem:[%s553 + $0x508] sm:$0xff]
        %v2972 = vld [vmem:[%s553 + $0x510] sm:$0xff]
        %v2973 = vld [vmem:[%s553 + $0x518] sm:$0xff]
        %v2974 = vld [vmem:[%s553 + $0x520] sm:$0xff]
        %v2975 = vld [vmem:[%s553 + $0x528] sm:$0xff]
        %v2976 = vld [vmem:[%s553 + $0x530] sm:$0xff]
        %v2977 = vld [vmem:[%s553 + $0x538] sm:$0xff]
        %v2978 = vld [vmem:[%s553 + $0x540] sm:$0xff]
        %v2979 = vld [vmem:[%s553 + $0x548] sm:$0xff]
        %v2980 = vld [vmem:[%s553 + $0x550] sm:$0xff]
        %v2981 = vld [vmem:[%s553 + $0x558] sm:$0xff]
        %v2982 = vld [vmem:[%s553 + $0x560] sm:$0xff]
        %v2983 = vld [vmem:[%s553 + $0x568] sm:$0xff]
        %v2984 = vld [vmem:[%s553 + $0x570] sm:$0xff]
        %v2985 = vld [vmem:[%s553 + $0x578] sm:$0xff]
        %v2986 = vld [vmem:[%s553 + $0x580] sm:$0xff]
        %v2987 = vld [vmem:[%s553 + $0x588] sm:$0xff]
        %v2988 = vld [vmem:[%s553 + $0x590] sm:$0xff]
        %v2989 = vld [vmem:[%s553 + $0x598] sm:$0xff]
        %v2990 = vld [vmem:[%s553 + $0x5a0] sm:$0xff]
        %v2991 = vld [vmem:[%s553 + $0x5a8] sm:$0xff]
        %v2992 = vld [vmem:[%s553 + $0x5b0] sm:$0xff]
        %v2993 = vld [vmem:[%s553 + $0x5b8] sm:$0xff]
        %v2994 = vld [vmem:[%s553 + $0x5c0] sm:$0xff]
        %v2995 = vld [vmem:[%s553 + $0x5c8] sm:$0xff]
        %v2996 = vld [vmem:[%s553 + $0x5d0] sm:$0xff]
        %v2997 = vld [vmem:[%s553 + $0x5d8] sm:$0xff]
        %v2998 = vld [vmem:[%s553 + $0x5e0] sm:$0xff]
        %v2999 = vld [vmem:[%s553 + $0x5e8] sm:$0xff]
        %v3000 = vld [vmem:[%s553 + $0x5f0] sm:$0xff]
        %v3001 = vld [vmem:[%s553 + $0x5f8] sm:$0xff]
        %v3002 = vld [vmem:[%s553 + $0x600] sm:$0xff]
        %v3003 = vld [vmem:[%s553 + $0x608] sm:$0xff]
        %v3004 = vld [vmem:[%s553 + $0x610] sm:$0xff]
        %v3005 = vld [vmem:[%s553 + $0x618] sm:$0xff]
        %v3006 = vld [vmem:[%s553 + $0x620] sm:$0xff]
        %v3007 = vld [vmem:[%s553 + $0x628] sm:$0xff]
        %v3008 = vld [vmem:[%s553 + $0x630] sm:$0xff]
        %v3009 = vld [vmem:[%s553 + $0x638] sm:$0xff]
        %v3010 = vld [vmem:[%s553 + $0x640] sm:$0xff]
        %v3011 = vld [vmem:[%s553 + $0x648] sm:$0xff]
        %v3012 = vld [vmem:[%s553 + $0x650] sm:$0xff]
        %v3013 = vld [vmem:[%s553 + $0x658] sm:$0xff]
        %v3014 = vld [vmem:[%s553 + $0x660] sm:$0xff]
        %v3015 = vld [vmem:[%s553 + $0x668] sm:$0xff]
        %v3016 = vld [vmem:[%s553 + $0x670] sm:$0xff]
        %v3017 = vld [vmem:[%s553 + $0x678] sm:$0xff]
        %v3018 = vld [vmem:[%s553 + $0x680] sm:$0xff]
        %v3019 = vld [vmem:[%s553 + $0x688] sm:$0xff]
        %v3020 = vld [vmem:[%s553 + $0x690] sm:$0xff]
        %v3021 = vld [vmem:[%s553 + $0x698] sm:$0xff]
        %v3022 = vld [vmem:[%s553 + $0x6a0] sm:$0xff]
        %v3023 = vld [vmem:[%s553 + $0x6a8] sm:$0xff]
        %v3024 = vld [vmem:[%s553 + $0x6b0] sm:$0xff]
        %v3025 = vld [vmem:[%s553 + $0x6b8] sm:$0xff]
        %v3026 = vld [vmem:[%s553 + $0x6c0] sm:$0xff]
        %v3027 = vld [vmem:[%s553 + $0x6c8] sm:$0xff]
        %v3028 = vld [vmem:[%s553 + $0x6d0] sm:$0xff]
        %v3029 = vld [vmem:[%s553 + $0x6d8] sm:$0xff]
        %v3030 = vld [vmem:[%s553 + $0x6e0] sm:$0xff]
        %v3031 = vld [vmem:[%s553 + $0x6e8] sm:$0xff]
        %v3032 = vld [vmem:[%s553 + $0x6f0] sm:$0xff]
        %v3033 = vld [vmem:[%s553 + $0x6f8] sm:$0xff]
        %v3034 = vld [vmem:[%s553 + $0x700] sm:$0xff]
        %v3035 = vld [vmem:[%s553 + $0x708] sm:$0xff]
        %v3036 = vld [vmem:[%s553 + $0x710] sm:$0xff]
        %v3037 = vld [vmem:[%s553 + $0x718] sm:$0xff]
        %v3038 = vld [vmem:[%s553 + $0x720] sm:$0xff]
        %v3039 = vld [vmem:[%s553 + $0x728] sm:$0xff]
        %v3040 = vld [vmem:[%s553 + $0x730] sm:$0xff]
        %v3041 = vld [vmem:[%s553 + $0x738] sm:$0xff]
        %v3042 = vld [vmem:[%s553 + $0x740] sm:$0xff]
        %v3043 = vld [vmem:[%s553 + $0x748] sm:$0xff]
        %v3044 = vld [vmem:[%s553 + $0x750] sm:$0xff]
        %v3045 = vld [vmem:[%s553 + $0x758] sm:$0xff]
        %v3046 = vld [vmem:[%s553 + $0x760] sm:$0xff]
        %v3047 = vld [vmem:[%s553 + $0x768] sm:$0xff]
        %v3048 = vld [vmem:[%s553 + $0x770] sm:$0xff]
        %v3049 = vld [vmem:[%s553 + $0x778] sm:$0xff]
        %v3050 = vld [vmem:[%s553 + $0x780] sm:$0xff]
        %v3051 = vld [vmem:[%s553 + $0x788] sm:$0xff]
        %v3052 = vld [vmem:[%s553 + $0x790] sm:$0xff]
        %v3053 = vld [vmem:[%s553 + $0x798] sm:$0xff]
        %v3054 = vld [vmem:[%s553 + $0x7a0] sm:$0xff]
        %v3055 = vld [vmem:[%s553 + $0x7a8] sm:$0xff]
        %v3056 = vld [vmem:[%s553 + $0x7b0] sm:$0xff]
        %v3057 = vld [vmem:[%s553 + $0x7b8] sm:$0xff]
        %v3058 = vld [vmem:[%s553 + $0x7c0] sm:$0xff]
        %v3059 = vld [vmem:[%s553 + $0x7c8] sm:$0xff]
        %v3060 = vld [vmem:[%s553 + $0x7d0] sm:$0xff]
        %v3061 = vld [vmem:[%s553 + $0x7d8] sm:$0xff]
        %v3062 = vld [vmem:[%s553 + $0x7e0] sm:$0xff]
        %v3063 = vld [vmem:[%s553 + $0x7e8] sm:$0xff]
        %v3064 = vld [vmem:[%s553 + $0x7f0] sm:$0xff]
        %v3065 = vld [vmem:[%s553 + $0x7f8] sm:$0xff]
        %v3066 = vunpack.c.l.s8.bf16 %v2810
        %v3067 = vunpack.c.l.s8.bf16 %v2811
        %v3068 = vunpack.c.l.s8.bf16 %v2812
        %v3069 = vunpack.c.l.s8.bf16 %v2813
        %v3070 = vunpack.c.l.s8.bf16 %v2814
        %v3071 = vunpack.c.l.s8.bf16 %v2815
        %v3072 = vunpack.c.l.s8.bf16 %v2816
        %v3073 = vunpack.c.l.s8.bf16 %v2817
        %v3074 = vunpack.c.h.s8.bf16 %v2810
        %v3075 = vunpack.c.h.s8.bf16 %v2811
        %v3076 = vunpack.c.h.s8.bf16 %v2812
        %v3077 = vunpack.c.h.s8.bf16 %v2813
        %v3078 = vunpack.c.h.s8.bf16 %v2814
        %v3079 = vunpack.c.h.s8.bf16 %v2815
        %v3080 = vunpack.c.h.s8.bf16 %v2816
        %v3081 = vunpack.c.h.s8.bf16 %v2817
        %v3082 = vunpack.c.l.s8.bf16 %v2818
        %v3083 = vunpack.c.l.s8.bf16 %v2819
        %v3084 = vunpack.c.l.s8.bf16 %v2820
        %v3085 = vunpack.c.l.s8.bf16 %v2821
        %v3086 = vunpack.c.l.s8.bf16 %v2822
        %v3087 = vunpack.c.l.s8.bf16 %v2823
        %v3088 = vunpack.c.l.s8.bf16 %v2824
        %v3089 = vunpack.c.l.s8.bf16 %v2825
        %v3090 = vunpack.c.h.s8.bf16 %v2818
        %v3091 = vunpack.c.h.s8.bf16 %v2819
        %v3092 = vunpack.c.h.s8.bf16 %v2820
        %v3093 = vunpack.c.h.s8.bf16 %v2821
        %v3094 = vunpack.c.h.s8.bf16 %v2822
        %v3095 = vunpack.c.h.s8.bf16 %v2823
        %v3096 = vunpack.c.h.s8.bf16 %v2824
        %v3097 = vunpack.c.h.s8.bf16 %v2825
        %v3098 = vunpack.c.l.s8.bf16 %v2826
        %v3099 = vunpack.c.l.s8.bf16 %v2827
        %v3100 = vunpack.c.l.s8.bf16 %v2828
        %v3101 = vunpack.c.l.s8.bf16 %v2829
        %v3102 = vunpack.c.l.s8.bf16 %v2830
        %v3103 = vunpack.c.l.s8.bf16 %v2831
        %v3104 = vunpack.c.l.s8.bf16 %v2832
        %v3105 = vunpack.c.l.s8.bf16 %v2833
        %v3106 = vunpack.c.h.s8.bf16 %v2826
        %v3107 = vunpack.c.h.s8.bf16 %v2827
        %v3108 = vunpack.c.h.s8.bf16 %v2828
        %v3109 = vunpack.c.h.s8.bf16 %v2829
        %v3110 = vunpack.c.h.s8.bf16 %v2830
        %v3111 = vunpack.c.h.s8.bf16 %v2831
        %v3112 = vunpack.c.h.s8.bf16 %v2832
        %v3113 = vunpack.c.h.s8.bf16 %v2833
        %v3114 = vunpack.c.l.s8.bf16 %v2834
        %v3115 = vunpack.c.l.s8.bf16 %v2835
        %v3116 = vunpack.c.l.s8.bf16 %v2836
        %v3117 = vunpack.c.l.s8.bf16 %v2837
        %v3118 = vunpack.c.l.s8.bf16 %v2838
        %v3119 = vunpack.c.l.s8.bf16 %v2839
        %v3120 = vunpack.c.l.s8.bf16 %v2840
        %v3121 = vunpack.c.l.s8.bf16 %v2841
        %v3122 = vunpack.c.h.s8.bf16 %v2834
        %v3123 = vunpack.c.h.s8.bf16 %v2835
        %v3124 = vunpack.c.h.s8.bf16 %v2836
        %v3125 = vunpack.c.h.s8.bf16 %v2837
        %v3126 = vunpack.c.h.s8.bf16 %v2838
        %v3127 = vunpack.c.h.s8.bf16 %v2839
        %v3128 = vunpack.c.h.s8.bf16 %v2840
        %v3129 = vunpack.c.h.s8.bf16 %v2841
        %v3130 = vunpack.c.l.s8.bf16 %v2842
        %v3131 = vunpack.c.l.s8.bf16 %v2843
        %v3132 = vunpack.c.l.s8.bf16 %v2844
        %v3133 = vunpack.c.l.s8.bf16 %v2845
        %v3134 = vunpack.c.l.s8.bf16 %v2846
        %v3135 = vunpack.c.l.s8.bf16 %v2847
        %v3136 = vunpack.c.l.s8.bf16 %v2848
        %v3137 = vunpack.c.l.s8.bf16 %v2849
        %v3138 = vunpack.c.h.s8.bf16 %v2842
        %v3139 = vunpack.c.h.s8.bf16 %v2843
        %v3140 = vunpack.c.h.s8.bf16 %v2844
        %v3141 = vunpack.c.h.s8.bf16 %v2845
        %v3142 = vunpack.c.h.s8.bf16 %v2846
        %v3143 = vunpack.c.h.s8.bf16 %v2847
        %v3144 = vunpack.c.h.s8.bf16 %v2848
        %v3145 = vunpack.c.h.s8.bf16 %v2849
        %v3146 = vunpack.c.l.s8.bf16 %v2850
        %v3147 = vunpack.c.l.s8.bf16 %v2851
        %v3148 = vunpack.c.l.s8.bf16 %v2852
        %v3149 = vunpack.c.l.s8.bf16 %v2853
        %v3150 = vunpack.c.l.s8.bf16 %v2854
        %v3151 = vunpack.c.l.s8.bf16 %v2855
        %v3152 = vunpack.c.l.s8.bf16 %v2856
        %v3153 = vunpack.c.l.s8.bf16 %v2857
        %v3154 = vunpack.c.h.s8.bf16 %v2850
        %v3155 = vunpack.c.h.s8.bf16 %v2851
        %v3156 = vunpack.c.h.s8.bf16 %v2852
        %v3157 = vunpack.c.h.s8.bf16 %v2853
        %v3158 = vunpack.c.h.s8.bf16 %v2854
        %v3159 = vunpack.c.h.s8.bf16 %v2855
        %v3160 = vunpack.c.h.s8.bf16 %v2856
        %v3161 = vunpack.c.h.s8.bf16 %v2857
        %v3162 = vunpack.c.l.s8.bf16 %v2858
        %v3163 = vunpack.c.l.s8.bf16 %v2859
        %v3164 = vunpack.c.l.s8.bf16 %v2860
        %v3165 = vunpack.c.l.s8.bf16 %v2861
        %v3166 = vunpack.c.l.s8.bf16 %v2862
        %v3167 = vunpack.c.l.s8.bf16 %v2863
        %v3168 = vunpack.c.l.s8.bf16 %v2864
        %v3169 = vunpack.c.l.s8.bf16 %v2865
        %v3170 = vunpack.c.h.s8.bf16 %v2858
        %v3171 = vunpack.c.h.s8.bf16 %v2859
        %v3172 = vunpack.c.h.s8.bf16 %v2860
        %v3173 = vunpack.c.h.s8.bf16 %v2861
        %v3174 = vunpack.c.h.s8.bf16 %v2862
        %v3175 = vunpack.c.h.s8.bf16 %v2863
        %v3176 = vunpack.c.h.s8.bf16 %v2864
        %v3177 = vunpack.c.h.s8.bf16 %v2865
        %v3178 = vunpack.c.l.s8.bf16 %v2866
        %v3179 = vunpack.c.l.s8.bf16 %v2867
        %v3180 = vunpack.c.l.s8.bf16 %v2868
        %v3181 = vunpack.c.l.s8.bf16 %v2869
        %v3182 = vunpack.c.l.s8.bf16 %v2870
        %v3183 = vunpack.c.l.s8.bf16 %v2871
        %v3184 = vunpack.c.l.s8.bf16 %v2872
        %v3185 = vunpack.c.l.s8.bf16 %v2873
        %v3186 = vunpack.c.h.s8.bf16 %v2866
        %v3187 = vunpack.c.h.s8.bf16 %v2867
        %v3188 = vunpack.c.h.s8.bf16 %v2868
        %v3189 = vunpack.c.h.s8.bf16 %v2869
        %v3190 = vunpack.c.h.s8.bf16 %v2870
        %v3191 = vunpack.c.h.s8.bf16 %v2871
        %v3192 = vunpack.c.h.s8.bf16 %v2872
        %v3193 = vunpack.c.h.s8.bf16 %v2873
        %v3194 = vunpack.c.l.s8.bf16 %v2874
        %v3195 = vunpack.c.l.s8.bf16 %v2875
        %v3196 = vunpack.c.l.s8.bf16 %v2876
        %v3197 = vunpack.c.l.s8.bf16 %v2877
        %v3198 = vunpack.c.l.s8.bf16 %v2878
        %v3199 = vunpack.c.l.s8.bf16 %v2879
        %v3200 = vunpack.c.l.s8.bf16 %v2880
        %v3201 = vunpack.c.l.s8.bf16 %v2881
        %v3202 = vunpack.c.h.s8.bf16 %v2874
        %v3203 = vunpack.c.h.s8.bf16 %v2875
        %v3204 = vunpack.c.h.s8.bf16 %v2876
        %v3205 = vunpack.c.h.s8.bf16 %v2877
        %v3206 = vunpack.c.h.s8.bf16 %v2878
        %v3207 = vunpack.c.h.s8.bf16 %v2879
        %v3208 = vunpack.c.h.s8.bf16 %v2880
        %v3209 = vunpack.c.h.s8.bf16 %v2881
        %v3210 = vunpack.c.l.s8.bf16 %v2882
        %v3211 = vunpack.c.l.s8.bf16 %v2883
        %v3212 = vunpack.c.l.s8.bf16 %v2884
        %v3213 = vunpack.c.l.s8.bf16 %v2885
        %v3214 = vunpack.c.l.s8.bf16 %v2886
        %v3215 = vunpack.c.l.s8.bf16 %v2887
        %v3216 = vunpack.c.l.s8.bf16 %v2888
        %v3217 = vunpack.c.l.s8.bf16 %v2889
        %v3218 = vunpack.c.h.s8.bf16 %v2882
        %v3219 = vunpack.c.h.s8.bf16 %v2883
        %v3220 = vunpack.c.h.s8.bf16 %v2884
        %v3221 = vunpack.c.h.s8.bf16 %v2885
        %v3222 = vunpack.c.h.s8.bf16 %v2886
        %v3223 = vunpack.c.h.s8.bf16 %v2887
        %v3224 = vunpack.c.h.s8.bf16 %v2888
        %v3225 = vunpack.c.h.s8.bf16 %v2889
        %v3226 = vunpack.c.l.s8.bf16 %v2890
        %v3227 = vunpack.c.l.s8.bf16 %v2891
        %v3228 = vunpack.c.l.s8.bf16 %v2892
        %v3229 = vunpack.c.l.s8.bf16 %v2893
        %v3230 = vunpack.c.l.s8.bf16 %v2894
        %v3231 = vunpack.c.l.s8.bf16 %v2895
        %v3232 = vunpack.c.l.s8.bf16 %v2896
        %v3233 = vunpack.c.l.s8.bf16 %v2897
        %v3234 = vunpack.c.h.s8.bf16 %v2890
        %v3235 = vunpack.c.h.s8.bf16 %v2891
        %v3236 = vunpack.c.h.s8.bf16 %v2892
        %v3237 = vunpack.c.h.s8.bf16 %v2893
        %v3238 = vunpack.c.h.s8.bf16 %v2894
        %v3239 = vunpack.c.h.s8.bf16 %v2895
        %v3240 = vunpack.c.h.s8.bf16 %v2896
        %v3241 = vunpack.c.h.s8.bf16 %v2897
        %v3242 = vunpack.c.l.s8.bf16 %v2898
        %v3243 = vunpack.c.l.s8.bf16 %v2899
        %v3244 = vunpack.c.l.s8.bf16 %v2900
        %v3245 = vunpack.c.l.s8.bf16 %v2901
        %v3246 = vunpack.c.l.s8.bf16 %v2902
        %v3247 = vunpack.c.l.s8.bf16 %v2903
        %v3248 = vunpack.c.l.s8.bf16 %v2904
        %v3249 = vunpack.c.l.s8.bf16 %v2905
        %v3250 = vunpack.c.h.s8.bf16 %v2898
        %v3251 = vunpack.c.h.s8.bf16 %v2899
        %v3252 = vunpack.c.h.s8.bf16 %v2900
        %v3253 = vunpack.c.h.s8.bf16 %v2901
        %v3254 = vunpack.c.h.s8.bf16 %v2902
        %v3255 = vunpack.c.h.s8.bf16 %v2903
        %v3256 = vunpack.c.h.s8.bf16 %v2904
        %v3257 = vunpack.c.h.s8.bf16 %v2905
        %v3258 = vunpack.c.l.s8.bf16 %v2906
        %v3259 = vunpack.c.l.s8.bf16 %v2907
        %v3260 = vunpack.c.l.s8.bf16 %v2908
        %v3261 = vunpack.c.l.s8.bf16 %v2909
        %v3262 = vunpack.c.l.s8.bf16 %v2910
        %v3263 = vunpack.c.l.s8.bf16 %v2911
        %v3264 = vunpack.c.l.s8.bf16 %v2912
        %v3265 = vunpack.c.l.s8.bf16 %v2913
        %v3266 = vunpack.c.h.s8.bf16 %v2906
        %v3267 = vunpack.c.h.s8.bf16 %v2907
        %v3268 = vunpack.c.h.s8.bf16 %v2908
        %v3269 = vunpack.c.h.s8.bf16 %v2909
        %v3270 = vunpack.c.h.s8.bf16 %v2910
        %v3271 = vunpack.c.h.s8.bf16 %v2911
        %v3272 = vunpack.c.h.s8.bf16 %v2912
        %v3273 = vunpack.c.h.s8.bf16 %v2913
        %v3274 = vunpack.c.l.s8.bf16 %v2914
        %v3275 = vunpack.c.l.s8.bf16 %v2915
        %v3276 = vunpack.c.l.s8.bf16 %v2916
        %v3277 = vunpack.c.l.s8.bf16 %v2917
        %v3278 = vunpack.c.l.s8.bf16 %v2918
        %v3279 = vunpack.c.l.s8.bf16 %v2919
        %v3280 = vunpack.c.l.s8.bf16 %v2920
        %v3281 = vunpack.c.l.s8.bf16 %v2921
        %v3282 = vunpack.c.h.s8.bf16 %v2914
        %v3283 = vunpack.c.h.s8.bf16 %v2915
        %v3284 = vunpack.c.h.s8.bf16 %v2916
        %v3285 = vunpack.c.h.s8.bf16 %v2917
        %v3286 = vunpack.c.h.s8.bf16 %v2918
        %v3287 = vunpack.c.h.s8.bf16 %v2919
        %v3288 = vunpack.c.h.s8.bf16 %v2920
        %v3289 = vunpack.c.h.s8.bf16 %v2921
        %v3290 = vunpack.c.l.s8.bf16 %v2922
        %v3291 = vunpack.c.l.s8.bf16 %v2923
        %v3292 = vunpack.c.l.s8.bf16 %v2924
        %v3293 = vunpack.c.l.s8.bf16 %v2925
        %v3294 = vunpack.c.l.s8.bf16 %v2926
        %v3295 = vunpack.c.l.s8.bf16 %v2927
        %v3296 = vunpack.c.l.s8.bf16 %v2928
        %v3297 = vunpack.c.l.s8.bf16 %v2929
        %v3298 = vunpack.c.h.s8.bf16 %v2922
        %v3299 = vunpack.c.h.s8.bf16 %v2923
        %v3300 = vunpack.c.h.s8.bf16 %v2924
        %v3301 = vunpack.c.h.s8.bf16 %v2925
        %v3302 = vunpack.c.h.s8.bf16 %v2926
        %v3303 = vunpack.c.h.s8.bf16 %v2927
        %v3304 = vunpack.c.h.s8.bf16 %v2928
        %v3305 = vunpack.c.h.s8.bf16 %v2929
        %v3306 = vunpack.c.l.s8.bf16 %v2930
        %v3307 = vunpack.c.l.s8.bf16 %v2931
        %v3308 = vunpack.c.l.s8.bf16 %v2932
        %v3309 = vunpack.c.l.s8.bf16 %v2933
        %v3310 = vunpack.c.l.s8.bf16 %v2934
        %v3311 = vunpack.c.l.s8.bf16 %v2935
        %v3312 = vunpack.c.l.s8.bf16 %v2936
        %v3313 = vunpack.c.l.s8.bf16 %v2937
        %v3314 = vunpack.c.h.s8.bf16 %v2930
        %v3315 = vunpack.c.h.s8.bf16 %v2931
        %v3316 = vunpack.c.h.s8.bf16 %v2932
        %v3317 = vunpack.c.h.s8.bf16 %v2933
        %v3318 = vunpack.c.h.s8.bf16 %v2934
        %v3319 = vunpack.c.h.s8.bf16 %v2935
        %v3320 = vunpack.c.h.s8.bf16 %v2936
        %v3321 = vunpack.c.h.s8.bf16 %v2937
        %v3322 = vunpack.c.l.s8.bf16 %v2938
        %v3323 = vunpack.c.l.s8.bf16 %v2939
        %v3324 = vunpack.c.l.s8.bf16 %v2940
        %v3325 = vunpack.c.l.s8.bf16 %v2941
        %v3326 = vunpack.c.l.s8.bf16 %v2942
        %v3327 = vunpack.c.l.s8.bf16 %v2943
        %v3328 = vunpack.c.l.s8.bf16 %v2944
        %v3329 = vunpack.c.l.s8.bf16 %v2945
        %v3330 = vunpack.c.h.s8.bf16 %v2938
        %v3331 = vunpack.c.h.s8.bf16 %v2939
        %v3332 = vunpack.c.h.s8.bf16 %v2940
        %v3333 = vunpack.c.h.s8.bf16 %v2941
        %v3334 = vunpack.c.h.s8.bf16 %v2942
        %v3335 = vunpack.c.h.s8.bf16 %v2943
        %v3336 = vunpack.c.h.s8.bf16 %v2944
        %v3337 = vunpack.c.h.s8.bf16 %v2945
        %v3338 = vunpack.c.l.s8.bf16 %v2946
        %v3339 = vunpack.c.l.s8.bf16 %v2947
        %v3340 = vunpack.c.l.s8.bf16 %v2948
        %v3341 = vunpack.c.l.s8.bf16 %v2949
        %v3342 = vunpack.c.l.s8.bf16 %v2950
        %v3343 = vunpack.c.l.s8.bf16 %v2951
        %v3344 = vunpack.c.l.s8.bf16 %v2952
        %v3345 = vunpack.c.l.s8.bf16 %v2953
        %v3346 = vunpack.c.h.s8.bf16 %v2946
        %v3347 = vunpack.c.h.s8.bf16 %v2947
        %v3348 = vunpack.c.h.s8.bf16 %v2948
        %v3349 = vunpack.c.h.s8.bf16 %v2949
        %v3350 = vunpack.c.h.s8.bf16 %v2950
        %v3351 = vunpack.c.h.s8.bf16 %v2951
        %v3352 = vunpack.c.h.s8.bf16 %v2952
        %v3353 = vunpack.c.h.s8.bf16 %v2953
        %v3354 = vunpack.c.l.s8.bf16 %v2954
        %v3355 = vunpack.c.l.s8.bf16 %v2955
        %v3356 = vunpack.c.l.s8.bf16 %v2956
        %v3357 = vunpack.c.l.s8.bf16 %v2957
        %v3358 = vunpack.c.l.s8.bf16 %v2958
        %v3359 = vunpack.c.l.s8.bf16 %v2959
        %v3360 = vunpack.c.l.s8.bf16 %v2960
        %v3361 = vunpack.c.l.s8.bf16 %v2961
        %v3362 = vunpack.c.h.s8.bf16 %v2954
        %v3363 = vunpack.c.h.s8.bf16 %v2955
        %v3364 = vunpack.c.h.s8.bf16 %v2956
        %v3365 = vunpack.c.h.s8.bf16 %v2957
        %v3366 = vunpack.c.h.s8.bf16 %v2958
        %v3367 = vunpack.c.h.s8.bf16 %v2959
        %v3368 = vunpack.c.h.s8.bf16 %v2960
        %v3369 = vunpack.c.h.s8.bf16 %v2961
        %v3370 = vunpack.c.l.s8.bf16 %v2962
        %v3371 = vunpack.c.l.s8.bf16 %v2963
        %v3372 = vunpack.c.l.s8.bf16 %v2964
        %v3373 = vunpack.c.l.s8.bf16 %v2965
        %v3374 = vunpack.c.l.s8.bf16 %v2966
        %v3375 = vunpack.c.l.s8.bf16 %v2967
        %v3376 = vunpack.c.l.s8.bf16 %v2968
        %v3377 = vunpack.c.l.s8.bf16 %v2969
        %v3378 = vunpack.c.h.s8.bf16 %v2962
        %v3379 = vunpack.c.h.s8.bf16 %v2963
        %v3380 = vunpack.c.h.s8.bf16 %v2964
        %v3381 = vunpack.c.h.s8.bf16 %v2965
        %v3382 = vunpack.c.h.s8.bf16 %v2966
        %v3383 = vunpack.c.h.s8.bf16 %v2967
        %v3384 = vunpack.c.h.s8.bf16 %v2968
        %v3385 = vunpack.c.h.s8.bf16 %v2969
        %v3386 = vunpack.c.l.s8.bf16 %v2970
        %v3387 = vunpack.c.l.s8.bf16 %v2971
        %v3388 = vunpack.c.l.s8.bf16 %v2972
        %v3389 = vunpack.c.l.s8.bf16 %v2973
        %v3390 = vunpack.c.l.s8.bf16 %v2974
        %v3391 = vunpack.c.l.s8.bf16 %v2975
        %v3392 = vunpack.c.l.s8.bf16 %v2976
        %v3393 = vunpack.c.l.s8.bf16 %v2977
        %v3394 = vunpack.c.h.s8.bf16 %v2970
        %v3395 = vunpack.c.h.s8.bf16 %v2971
        %v3396 = vunpack.c.h.s8.bf16 %v2972
        %v3397 = vunpack.c.h.s8.bf16 %v2973
        %v3398 = vunpack.c.h.s8.bf16 %v2974
        %v3399 = vunpack.c.h.s8.bf16 %v2975
        %v3400 = vunpack.c.h.s8.bf16 %v2976
        %v3401 = vunpack.c.h.s8.bf16 %v2977
        %v3402 = vunpack.c.l.s8.bf16 %v2978
        %v3403 = vunpack.c.l.s8.bf16 %v2979
        %v3404 = vunpack.c.l.s8.bf16 %v2980
        %v3405 = vunpack.c.l.s8.bf16 %v2981
        %v3406 = vunpack.c.l.s8.bf16 %v2982
        %v3407 = vunpack.c.l.s8.bf16 %v2983
        %v3408 = vunpack.c.l.s8.bf16 %v2984
        %v3409 = vunpack.c.l.s8.bf16 %v2985
        %v3410 = vunpack.c.h.s8.bf16 %v2978
        %v3411 = vunpack.c.h.s8.bf16 %v2979
        %v3412 = vunpack.c.h.s8.bf16 %v2980
        %v3413 = vunpack.c.h.s8.bf16 %v2981
        %v3414 = vunpack.c.h.s8.bf16 %v2982
        %v3415 = vunpack.c.h.s8.bf16 %v2983
        %v3416 = vunpack.c.h.s8.bf16 %v2984
        %v3417 = vunpack.c.h.s8.bf16 %v2985
        %v3418 = vunpack.c.l.s8.bf16 %v2986
        %v3419 = vunpack.c.l.s8.bf16 %v2987
        %v3420 = vunpack.c.l.s8.bf16 %v2988
        %v3421 = vunpack.c.l.s8.bf16 %v2989
        %v3422 = vunpack.c.l.s8.bf16 %v2990
        %v3423 = vunpack.c.l.s8.bf16 %v2991
        %v3424 = vunpack.c.l.s8.bf16 %v2992
        %v3425 = vunpack.c.l.s8.bf16 %v2993
        %v3426 = vunpack.c.h.s8.bf16 %v2986
        %v3427 = vunpack.c.h.s8.bf16 %v2987
        %v3428 = vunpack.c.h.s8.bf16 %v2988
        %v3429 = vunpack.c.h.s8.bf16 %v2989
        %v3430 = vunpack.c.h.s8.bf16 %v2990
        %v3431 = vunpack.c.h.s8.bf16 %v2991
        %v3432 = vunpack.c.h.s8.bf16 %v2992
        %v3433 = vunpack.c.h.s8.bf16 %v2993
        %v3434 = vunpack.c.l.s8.bf16 %v2994
        %v3435 = vunpack.c.l.s8.bf16 %v2995
        %v3436 = vunpack.c.l.s8.bf16 %v2996
        %v3437 = vunpack.c.l.s8.bf16 %v2997
        %v3438 = vunpack.c.l.s8.bf16 %v2998
        %v3439 = vunpack.c.l.s8.bf16 %v2999
        %v3440 = vunpack.c.l.s8.bf16 %v3000
        %v3441 = vunpack.c.l.s8.bf16 %v3001
        %v3442 = vunpack.c.h.s8.bf16 %v2994
        %v3443 = vunpack.c.h.s8.bf16 %v2995
        %v3444 = vunpack.c.h.s8.bf16 %v2996
        %v3445 = vunpack.c.h.s8.bf16 %v2997
        %v3446 = vunpack.c.h.s8.bf16 %v2998
        %v3447 = vunpack.c.h.s8.bf16 %v2999
        %v3448 = vunpack.c.h.s8.bf16 %v3000
        %v3449 = vunpack.c.h.s8.bf16 %v3001
        %v3450 = vunpack.c.l.s8.bf16 %v3002
        %v3451 = vunpack.c.l.s8.bf16 %v3003
        %v3452 = vunpack.c.l.s8.bf16 %v3004
        %v3453 = vunpack.c.l.s8.bf16 %v3005
        %v3454 = vunpack.c.l.s8.bf16 %v3006
        %v3455 = vunpack.c.l.s8.bf16 %v3007
        %v3456 = vunpack.c.l.s8.bf16 %v3008
        %v3457 = vunpack.c.l.s8.bf16 %v3009
        %v3458 = vunpack.c.h.s8.bf16 %v3002
        %v3459 = vunpack.c.h.s8.bf16 %v3003
        %v3460 = vunpack.c.h.s8.bf16 %v3004
        %v3461 = vunpack.c.h.s8.bf16 %v3005
        %v3462 = vunpack.c.h.s8.bf16 %v3006
        %v3463 = vunpack.c.h.s8.bf16 %v3007
        %v3464 = vunpack.c.h.s8.bf16 %v3008
        %v3465 = vunpack.c.h.s8.bf16 %v3009
        %v3466 = vunpack.c.l.s8.bf16 %v3010
        %v3467 = vunpack.c.l.s8.bf16 %v3011
        %v3468 = vunpack.c.l.s8.bf16 %v3012
        %v3469 = vunpack.c.l.s8.bf16 %v3013
        %v3470 = vunpack.c.l.s8.bf16 %v3014
        %v3471 = vunpack.c.l.s8.bf16 %v3015
        %v3472 = vunpack.c.l.s8.bf16 %v3016
        %v3473 = vunpack.c.l.s8.bf16 %v3017
        %v3474 = vunpack.c.h.s8.bf16 %v3010
        %v3475 = vunpack.c.h.s8.bf16 %v3011
        %v3476 = vunpack.c.h.s8.bf16 %v3012
        %v3477 = vunpack.c.h.s8.bf16 %v3013
        %v3478 = vunpack.c.h.s8.bf16 %v3014
        %v3479 = vunpack.c.h.s8.bf16 %v3015
        %v3480 = vunpack.c.h.s8.bf16 %v3016
        %v3481 = vunpack.c.h.s8.bf16 %v3017
        %v3482 = vunpack.c.l.s8.bf16 %v3018
        %v3483 = vunpack.c.l.s8.bf16 %v3019
        %v3484 = vunpack.c.l.s8.bf16 %v3020
        %v3485 = vunpack.c.l.s8.bf16 %v3021
        %v3486 = vunpack.c.l.s8.bf16 %v3022
        %v3487 = vunpack.c.l.s8.bf16 %v3023
        %v3488 = vunpack.c.l.s8.bf16 %v3024
        %v3489 = vunpack.c.l.s8.bf16 %v3025
        %v3490 = vunpack.c.h.s8.bf16 %v3018
        %v3491 = vunpack.c.h.s8.bf16 %v3019
        %v3492 = vunpack.c.h.s8.bf16 %v3020
        %v3493 = vunpack.c.h.s8.bf16 %v3021
        %v3494 = vunpack.c.h.s8.bf16 %v3022
        %v3495 = vunpack.c.h.s8.bf16 %v3023
        %v3496 = vunpack.c.h.s8.bf16 %v3024
        %v3497 = vunpack.c.h.s8.bf16 %v3025
        %v3498 = vunpack.c.l.s8.bf16 %v3026
        %v3499 = vunpack.c.l.s8.bf16 %v3027
        %v3500 = vunpack.c.l.s8.bf16 %v3028
        %v3501 = vunpack.c.l.s8.bf16 %v3029
        %v3502 = vunpack.c.l.s8.bf16 %v3030
        %v3503 = vunpack.c.l.s8.bf16 %v3031
        %v3504 = vunpack.c.l.s8.bf16 %v3032
        %v3505 = vunpack.c.l.s8.bf16 %v3033
        %v3506 = vunpack.c.h.s8.bf16 %v3026
        %v3507 = vunpack.c.h.s8.bf16 %v3027
        %v3508 = vunpack.c.h.s8.bf16 %v3028
        %v3509 = vunpack.c.h.s8.bf16 %v3029
        %v3510 = vunpack.c.h.s8.bf16 %v3030
        %v3511 = vunpack.c.h.s8.bf16 %v3031
        %v3512 = vunpack.c.h.s8.bf16 %v3032
        %v3513 = vunpack.c.h.s8.bf16 %v3033
        %v3514 = vunpack.c.l.s8.bf16 %v3034
        %v3515 = vunpack.c.l.s8.bf16 %v3035
        %v3516 = vunpack.c.l.s8.bf16 %v3036
        %v3517 = vunpack.c.l.s8.bf16 %v3037
        %v3518 = vunpack.c.l.s8.bf16 %v3038
        %v3519 = vunpack.c.l.s8.bf16 %v3039
        %v3520 = vunpack.c.l.s8.bf16 %v3040
        %v3521 = vunpack.c.l.s8.bf16 %v3041
        %v3522 = vunpack.c.h.s8.bf16 %v3034
        %v3523 = vunpack.c.h.s8.bf16 %v3035
        %v3524 = vunpack.c.h.s8.bf16 %v3036
        %v3525 = vunpack.c.h.s8.bf16 %v3037
        %v3526 = vunpack.c.h.s8.bf16 %v3038
        %v3527 = vunpack.c.h.s8.bf16 %v3039
        %v3528 = vunpack.c.h.s8.bf16 %v3040
        %v3529 = vunpack.c.h.s8.bf16 %v3041
        %v3530 = vunpack.c.l.s8.bf16 %v3042
        %v3531 = vunpack.c.l.s8.bf16 %v3043
        %v3532 = vunpack.c.l.s8.bf16 %v3044
        %v3533 = vunpack.c.l.s8.bf16 %v3045
        %v3534 = vunpack.c.l.s8.bf16 %v3046
        %v3535 = vunpack.c.l.s8.bf16 %v3047
        %v3536 = vunpack.c.l.s8.bf16 %v3048
        %v3537 = vunpack.c.l.s8.bf16 %v3049
        %v3538 = vunpack.c.h.s8.bf16 %v3042
        %v3539 = vunpack.c.h.s8.bf16 %v3043
        %v3540 = vunpack.c.h.s8.bf16 %v3044
        %v3541 = vunpack.c.h.s8.bf16 %v3045
        %v3542 = vunpack.c.h.s8.bf16 %v3046
        %v3543 = vunpack.c.h.s8.bf16 %v3047
        %v3544 = vunpack.c.h.s8.bf16 %v3048
        %v3545 = vunpack.c.h.s8.bf16 %v3049
        %v3546 = vunpack.c.l.s8.bf16 %v3050
        %v3547 = vunpack.c.l.s8.bf16 %v3051
        %v3548 = vunpack.c.l.s8.bf16 %v3052
        %v3549 = vunpack.c.l.s8.bf16 %v3053
        %v3550 = vunpack.c.l.s8.bf16 %v3054
        %v3551 = vunpack.c.l.s8.bf16 %v3055
        %v3552 = vunpack.c.l.s8.bf16 %v3056
        %v3553 = vunpack.c.l.s8.bf16 %v3057
        %v3554 = vunpack.c.h.s8.bf16 %v3050
        %v3555 = vunpack.c.h.s8.bf16 %v3051
        %v3556 = vunpack.c.h.s8.bf16 %v3052
        %v3557 = vunpack.c.h.s8.bf16 %v3053
        %v3558 = vunpack.c.h.s8.bf16 %v3054
        %v3559 = vunpack.c.h.s8.bf16 %v3055
        %v3560 = vunpack.c.h.s8.bf16 %v3056
        %v3561 = vunpack.c.h.s8.bf16 %v3057
        %v3562 = vunpack.c.l.s8.bf16 %v3058
        %v3563 = vunpack.c.l.s8.bf16 %v3059
        %v3564 = vunpack.c.l.s8.bf16 %v3060
        %v3565 = vunpack.c.l.s8.bf16 %v3061
        %v3566 = vunpack.c.l.s8.bf16 %v3062
        %v3567 = vunpack.c.l.s8.bf16 %v3063
        %v3568 = vunpack.c.l.s8.bf16 %v3064
        %v3569 = vunpack.c.l.s8.bf16 %v3065
        %v3570 = vunpack.c.h.s8.bf16 %v3058
        %v3571 = vunpack.c.h.s8.bf16 %v3059
        %v3572 = vunpack.c.h.s8.bf16 %v3060
        %v3573 = vunpack.c.h.s8.bf16 %v3061
        %v3574 = vunpack.c.h.s8.bf16 %v3062
        %v3575 = vunpack.c.h.s8.bf16 %v3063
        %v3576 = vunpack.c.h.s8.bf16 %v3064
        %v3577 = vunpack.c.h.s8.bf16 %v3065
        %3578 = vmatprep.subr.bf16.mxu0 %v3067
        %3579 = vmatpush1.bf16.msra.mxu0 %v3066
        %3580 = vmatprep.subr.bf16.mxu0 %v3075
        %3581 = vmatpush1.bf16.msra.mxu0 %v3074
        %3582 = vmatprep.subr.bf16.mxu0 %v3083
        %3583 = vmatpush1.bf16.msra.mxu0 %v3082
        %3584 = vmatprep.subr.bf16.mxu0 %v3091
        %3585 = vmatpush1.bf16.msra.mxu0 %v3090
        %3586 = vmatprep.subr.bf16.mxu0 %v3099
        %3587 = vmatpush1.bf16.msra.mxu0 %v3098
        %3588 = vmatprep.subr.bf16.mxu0 %v3107
        %3589 = vmatpush1.bf16.msra.mxu0 %v3106
        %3590 = vmatprep.subr.bf16.mxu0 %v3115
        %3591 = vmatpush1.bf16.msra.mxu0 %v3114
        %3592 = vmatprep.subr.bf16.mxu0 %v3123
        %3593 = vmatpush1.bf16.msra.mxu0 %v3122
        %3594 = vmatprep.subr.bf16.mxu0 %v3131
        %3595 = vmatpush1.bf16.msra.mxu0 %v3130
        %3596 = vmatprep.subr.bf16.mxu0 %v3139
        %3597 = vmatpush1.bf16.msra.mxu0 %v3138
        %3598 = vmatprep.subr.bf16.mxu0 %v3147
        %3599 = vmatpush1.bf16.msra.mxu0 %v3146
        %3600 = vmatprep.subr.bf16.mxu0 %v3155
        %3601 = vmatpush1.bf16.msra.mxu0 %v3154
        %3602 = vmatprep.subr.bf16.mxu0 %v3163
        %3603 = vmatpush1.bf16.msra.mxu0 %v3162
        %3604 = vmatprep.subr.bf16.mxu0 %v3171
        %3605 = vmatpush1.bf16.msra.mxu0 %v3170
        %3606 = vmatprep.subr.bf16.mxu0 %v3179
        %3607 = vmatpush1.bf16.msra.mxu0 %v3178
        %3608 = vmatprep.subr.bf16.mxu0 %v3187
        %3609 = vmatpush1.bf16.msra.mxu0 %v3186
        %3610 = vmatprep.mubr.bf16.mxu0 %v2803
        %3611 = vmatmul.mubr.bf16.gmra.mrb[0].mxu0 %v2802
        %v3612 = vpop.f32.mrb[0].mxu0
        %v3613 = vadd.f32 0.0, %v3612
        %v3614 = vpop.f32.mrb[0].mxu0
        %v3615 = vadd.f32 0.0, %v3614
        %v3616 = vpop.f32.mrb[0].mxu0
        %v3617 = vpop.f32.mrb[0].mxu0
        %3618 = vdwg.mxu0
        %3619 = vmatprep.subr.bf16.mxu0 %v3195
        %3620 = vmatpush1.bf16.msra.mxu0 %v3194
        %3621 = vmatprep.subr.bf16.mxu0 %v3203
        %3622 = vmatpush1.bf16.msra.mxu0 %v3202
        %3623 = vmatprep.subr.bf16.mxu0 %v3211
        %3624 = vmatpush1.bf16.msra.mxu0 %v3210
        %3625 = vmatprep.subr.bf16.mxu0 %v3219
        %3626 = vmatpush1.bf16.msra.mxu0 %v3218
        %3627 = vmatprep.subr.bf16.mxu0 %v3227
        %3628 = vmatpush1.bf16.msra.mxu0 %v3226
        %3629 = vmatprep.subr.bf16.mxu0 %v3235
        %3630 = vmatpush1.bf16.msra.mxu0 %v3234
        %3631 = vmatprep.subr.bf16.mxu0 %v3243
        %3632 = vmatpush1.bf16.msra.mxu0 %v3242
        %3633 = vmatprep.subr.bf16.mxu0 %v3251
        %3634 = vmatpush1.bf16.msra.mxu0 %v3250
        %3635 = vmatprep.subr.bf16.mxu0 %v3259
        %3636 = vmatpush1.bf16.msra.mxu0 %v3258
        %3637 = vmatprep.subr.bf16.mxu0 %v3267
        %3638 = vmatpush1.bf16.msra.mxu0 %v3266
        %3639 = vmatprep.subr.bf16.mxu0 %v3275
        %3640 = vmatpush1.bf16.msra.mxu0 %v3274
        %3641 = vmatprep.subr.bf16.mxu0 %v3283
        %3642 = vmatpush1.bf16.msra.mxu0 %v3282
        %3643 = vmatprep.subr.bf16.mxu0 %v3291
        %3644 = vmatpush1.bf16.msra.mxu0 %v3290
        %3645 = vmatprep.subr.bf16.mxu0 %v3299
        %3646 = vmatpush1.bf16.msra.mxu0 %v3298
        %3647 = vmatprep.subr.bf16.mxu0 %v3307
        %3648 = vmatpush1.bf16.msra.mxu0 %v3306
        %3649 = vmatprep.subr.bf16.mxu0 %v3315
        %3650 = vmatpush1.bf16.msra.mxu0 %v3314
        %3651 = vmatprep.mubr.bf16.mxu0 %v2805
        %3652 = vmatmul.mubr.bf16.gmra.mrb[0].mxu0 %v2804
        %v3653 = vpop.f32.mrb[0].mxu0
        %v3654 = vadd.f32 %v3613, %v3653
        %v3655 = vpop.f32.mrb[0].mxu0
        %v3656 = vadd.f32 %v3615, %v3655
        %v3657 = vpop.f32.mrb[0].mxu0
        %v3658 = vpop.f32.mrb[0].mxu0
        %3659 = vdwg.mxu0
        %3660 = vmatprep.subr.bf16.mxu0 %v3323
        %3661 = vmatpush1.bf16.msra.mxu0 %v3322
        %3662 = vmatprep.subr.bf16.mxu0 %v3331
        %3663 = vmatpush1.bf16.msra.mxu0 %v3330
        %3664 = vmatprep.subr.bf16.mxu0 %v3339
        %3665 = vmatpush1.bf16.msra.mxu0 %v3338
        %3666 = vmatprep.subr.bf16.mxu0 %v3347
        %3667 = vmatpush1.bf16.msra.mxu0 %v3346
        %3668 = vmatprep.subr.bf16.mxu0 %v3355
        %3669 = vmatpush1.bf16.msra.mxu0 %v3354
        %3670 = vmatprep.subr.bf16.mxu0 %v3363
        %3671 = vmatpush1.bf16.msra.mxu0 %v3362
        %3672 = vmatprep.subr.bf16.mxu0 %v3371
        %3673 = vmatpush1.bf16.msra.mxu0 %v3370
        %3674 = vmatprep.subr.bf16.mxu0 %v3379
        %3675 = vmatpush1.bf16.msra.mxu0 %v3378
        %3676 = vmatprep.subr.bf16.mxu0 %v3387
        %3677 = vmatpush1.bf16.msra.mxu0 %v3386
        %3678 = vmatprep.subr.bf16.mxu0 %v3395
        %3679 = vmatpush1.bf16.msra.mxu0 %v3394
        %3680 = vmatprep.subr.bf16.mxu0 %v3403
        %3681 = vmatpush1.bf16.msra.mxu0 %v3402
        %3682 = vmatprep.subr.bf16.mxu0 %v3411
        %3683 = vmatpush1.bf16.msra.mxu0 %v3410
        %3684 = vmatprep.subr.bf16.mxu0 %v3419
        %3685 = vmatpush1.bf16.msra.mxu0 %v3418
        %3686 = vmatprep.subr.bf16.mxu0 %v3427
        %3687 = vmatpush1.bf16.msra.mxu0 %v3426
        %3688 = vmatprep.subr.bf16.mxu0 %v3435
        %3689 = vmatpush1.bf16.msra.mxu0 %v3434
        %3690 = vmatprep.subr.bf16.mxu0 %v3443
        %3691 = vmatpush1.bf16.msra.mxu0 %v3442
        %3692 = vmatprep.mubr.bf16.mxu0 %v2807
        %3693 = vmatmul.mubr.bf16.gmra.mrb[0].mxu0 %v2806
        %v3694 = vpop.f32.mrb[0].mxu0
        %v3695 = vadd.f32 %v3654, %v3694
        %v3696 = vpop.f32.mrb[0].mxu0
        %v3697 = vadd.f32 %v3656, %v3696
        %v3698 = vpop.f32.mrb[0].mxu0
        %v3699 = vpop.f32.mrb[0].mxu0
        %3700 = vdwg.mxu0
        %3701 = vmatprep.subr.bf16.mxu0 %v3451
        %3702 = vmatpush1.bf16.msra.mxu0 %v3450
        %3703 = vmatprep.subr.bf16.mxu0 %v3459
        %3704 = vmatpush1.bf16.msra.mxu0 %v3458
        %3705 = vmatprep.subr.bf16.mxu0 %v3467
        %3706 = vmatpush1.bf16.msra.mxu0 %v3466
        %3707 = vmatprep.subr.bf16.mxu0 %v3475
        %3708 = vmatpush1.bf16.msra.mxu0 %v3474
        %3709 = vmatprep.subr.bf16.mxu0 %v3483
        %3710 = vmatpush1.bf16.msra.mxu0 %v3482
        %3711 = vmatprep.subr.bf16.mxu0 %v3491
        %3712 = vmatpush1.bf16.msra.mxu0 %v3490
        %3713 = vmatprep.subr.bf16.mxu0 %v3499
        %3714 = vmatpush1.bf16.msra.mxu0 %v3498
        %3715 = vmatprep.subr.bf16.mxu0 %v3507
        %3716 = vmatpush1.bf16.msra.mxu0 %v3506
        %3717 = vmatprep.subr.bf16.mxu0 %v3515
        %3718 = vmatpush1.bf16.msra.mxu0 %v3514
        %3719 = vmatprep.subr.bf16.mxu0 %v3523
        %3720 = vmatpush1.bf16.msra.mxu0 %v3522
        %3721 = vmatprep.subr.bf16.mxu0 %v3531
        %3722 = vmatpush1.bf16.msra.mxu0 %v3530
        %3723 = vmatprep.subr.bf16.mxu0 %v3539
        %3724 = vmatpush1.bf16.msra.mxu0 %v3538
        %3725 = vmatprep.subr.bf16.mxu0 %v3547
        %3726 = vmatpush1.bf16.msra.mxu0 %v3546
        %3727 = vmatprep.subr.bf16.mxu0 %v3555
        %3728 = vmatpush1.bf16.msra.mxu0 %v3554
        %3729 = vmatprep.subr.bf16.mxu0 %v3563
        %3730 = vmatpush1.bf16.msra.mxu0 %v3562
        %3731 = vmatprep.subr.bf16.mxu0 %v3571
        %3732 = vmatpush1.bf16.msra.mxu0 %v3570
        %3733 = vmatprep.mubr.bf16.mxu0 %v2809
        %3734 = vmatmul.mubr.bf16.gmra.mrb[0].mxu0 %v2808
        %v3735 = vpop.f32.mrb[0].mxu0
        %v3736 = vadd.f32 %v3695, %v3735
        %v3737 = vpop.f32.mrb[0].mxu0
        %v3738 = vadd.f32 %v3697, %v3737
        %v3739 = vpop.f32.mrb[0].mxu0
        %v3740 = vpop.f32.mrb[0].mxu0
        %3741 = vdwg.mxu0
        %3742 = vmatprep.subr.bf16.mxu0 %v3069
        %3743 = vmatpush1.bf16.msra.mxu0 %v3068
        %3744 = vmatprep.subr.bf16.mxu0 %v3077
        %3745 = vmatpush1.bf16.msra.mxu0 %v3076
        %3746 = vmatprep.subr.bf16.mxu0 %v3085
        %3747 = vmatpush1.bf16.msra.mxu0 %v3084
        %3748 = vmatprep.subr.bf16.mxu0 %v3093
        %3749 = vmatpush1.bf16.msra.mxu0 %v3092
        %3750 = vmatprep.subr.bf16.mxu0 %v3101
        %3751 = vmatpush1.bf16.msra.mxu0 %v3100
        %3752 = vmatprep.subr.bf16.mxu0 %v3109
        %3753 = vmatpush1.bf16.msra.mxu0 %v3108
        %3754 = vmatprep.subr.bf16.mxu0 %v3117
        %3755 = vmatpush1.bf16.msra.mxu0 %v3116
        %3756 = vmatprep.subr.bf16.mxu0 %v3125
        %3757 = vmatpush1.bf16.msra.mxu0 %v3124
        %3758 = vmatprep.subr.bf16.mxu0 %v3133
        %3759 = vmatpush1.bf16.msra.mxu0 %v3132
        %3760 = vmatprep.subr.bf16.mxu0 %v3141
        %3761 = vmatpush1.bf16.msra.mxu0 %v3140
        %3762 = vmatprep.subr.bf16.mxu0 %v3149
        %3763 = vmatpush1.bf16.msra.mxu0 %v3148
        %3764 = vmatprep.subr.bf16.mxu0 %v3157
        %3765 = vmatpush1.bf16.msra.mxu0 %v3156
        %3766 = vmatprep.subr.bf16.mxu0 %v3165
        %3767 = vmatpush1.bf16.msra.mxu0 %v3164
        %3768 = vmatprep.subr.bf16.mxu0 %v3173
        %3769 = vmatpush1.bf16.msra.mxu0 %v3172
        %3770 = vmatprep.subr.bf16.mxu0 %v3181
        %3771 = vmatpush1.bf16.msra.mxu0 %v3180
        %3772 = vmatprep.subr.bf16.mxu0 %v3189
        %3773 = vmatpush1.bf16.msra.mxu0 %v3188
        %3774 = vmatprep.mubr.bf16.mxu0 %v2803
        %3775 = vmatmul.mubr.bf16.gmra.mrb[0].mxu0 %v2802
        %v3776 = vpop.f32.mrb[0].mxu0
        %v3777 = vadd.f32 0.0, %v3776
        %v3778 = vpop.f32.mrb[0].mxu0
        %v3779 = vadd.f32 0.0, %v3778
        %v3780 = vpop.f32.mrb[0].mxu0
        %v3781 = vpop.f32.mrb[0].mxu0
        %3782 = vdwg.mxu0
        %3783 = vmatprep.subr.bf16.mxu0 %v3197
        %3784 = vmatpush1.bf16.msra.mxu0 %v3196
        %3785 = vmatprep.subr.bf16.mxu0 %v3205
        %3786 = vmatpush1.bf16.msra.mxu0 %v3204
        %3787 = vmatprep.subr.bf16.mxu0 %v3213
        %3788 = vmatpush1.bf16.msra.mxu0 %v3212
        %3789 = vmatprep.subr.bf16.mxu0 %v3221
        %3790 = vmatpush1.bf16.msra.mxu0 %v3220
        %3791 = vmatprep.subr.bf16.mxu0 %v3229
        %3792 = vmatpush1.bf16.msra.mxu0 %v3228
        %3793 = vmatprep.subr.bf16.mxu0 %v3237
        %3794 = vmatpush1.bf16.msra.mxu0 %v3236
        %3795 = vmatprep.subr.bf16.mxu0 %v3245
        %3796 = vmatpush1.bf16.msra.mxu0 %v3244
        %3797 = vmatprep.subr.bf16.mxu0 %v3253
        %3798 = vmatpush1.bf16.msra.mxu0 %v3252
        %3799 = vmatprep.subr.bf16.mxu0 %v3261
        %3800 = vmatpush1.bf16.msra.mxu0 %v3260
        %3801 = vmatprep.subr.bf16.mxu0 %v3269
        %3802 = vmatpush1.bf16.msra.mxu0 %v3268
        %3803 = vmatprep.subr.bf16.mxu0 %v3277
        %3804 = vmatpush1.bf16.msra.mxu0 %v3276
        %3805 = vmatprep.subr.bf16.mxu0 %v3285
        %3806 = vmatpush1.bf16.msra.mxu0 %v3284
        %3807 = vmatprep.subr.bf16.mxu0 %v3293
        %3808 = vmatpush1.bf16.msra.mxu0 %v3292
        %3809 = vmatprep.subr.bf16.mxu0 %v3301
        %3810 = vmatpush1.bf16.msra.mxu0 %v3300
        %3811 = vmatprep.subr.bf16.mxu0 %v3309
        %3812 = vmatpush1.bf16.msra.mxu0 %v3308
        %3813 = vmatprep.subr.bf16.mxu0 %v3317
        %3814 = vmatpush1.bf16.msra.mxu0 %v3316
        %3815 = vmatprep.mubr.bf16.mxu0 %v2805
        %3816 = vmatmul.mubr.bf16.gmra.mrb[0].mxu0 %v2804
        %v3817 = vpop.f32.mrb[0].mxu0
        %v3818 = vadd.f32 %v3777, %v3817
        %v3819 = vpop.f32.mrb[0].mxu0
        %v3820 = vadd.f32 %v3779, %v3819
        %v3821 = vpop.f32.mrb[0].mxu0
        %v3822 = vpop.f32.mrb[0].mxu0
        %3823 = vdwg.mxu0
        %3824 = vmatprep.subr.bf16.mxu0 %v3325
        %3825 = vmatpush1.bf16.msra.mxu0 %v3324
        %3826 = vmatprep.subr.bf16.mxu0 %v3333
        %3827 = vmatpush1.bf16.msra.mxu0 %v3332
        %3828 = vmatprep.subr.bf16.mxu0 %v3341
        %3829 = vmatpush1.bf16.msra.mxu0 %v3340
        %3830 = vmatprep.subr.bf16.mxu0 %v3349
        %3831 = vmatpush1.bf16.msra.mxu0 %v3348
        %3832 = vmatprep.subr.bf16.mxu0 %v3357
        %3833 = vmatpush1.bf16.msra.mxu0 %v3356
        %3834 = vmatprep.subr.bf16.mxu0 %v3365
        %3835 = vmatpush1.bf16.msra.mxu0 %v3364
        %3836 = vmatprep.subr.bf16.mxu0 %v3373
        %3837 = vmatpush1.bf16.msra.mxu0 %v3372
        %3838 = vmatprep.subr.bf16.mxu0 %v3381
        %3839 = vmatpush1.bf16.msra.mxu0 %v3380
        %3840 = vmatprep.subr.bf16.mxu0 %v3389
        %3841 = vmatpush1.bf16.msra.mxu0 %v3388
        %3842 = vmatprep.subr.bf16.mxu0 %v3397
        %3843 = vmatpush1.bf16.msra.mxu0 %v3396
        %3844 = vmatprep.subr.bf16.mxu0 %v3405
        %3845 = vmatpush1.bf16.msra.mxu0 %v3404
        %3846 = vmatprep.subr.bf16.mxu0 %v3413
        %3847 = vmatpush1.bf16.msra.mxu0 %v3412
        %3848 = vmatprep.subr.bf16.mxu0 %v3421
        %3849 = vmatpush1.bf16.msra.mxu0 %v3420
        %3850 = vmatprep.subr.bf16.mxu0 %v3429
        %3851 = vmatpush1.bf16.msra.mxu0 %v3428
        %3852 = vmatprep.subr.bf16.mxu0 %v3437
        %3853 = vmatpush1.bf16.msra.mxu0 %v3436
        %3854 = vmatprep.subr.bf16.mxu0 %v3445
        %3855 = vmatpush1.bf16.msra.mxu0 %v3444
        %3856 = vmatprep.mubr.bf16.mxu0 %v2807
        %3857 = vmatmul.mubr.bf16.gmra.mrb[0].mxu0 %v2806
        %v3858 = vpop.f32.mrb[0].mxu0
        %v3859 = vadd.f32 %v3818, %v3858
        %v3860 = vpop.f32.mrb[0].mxu0
        %v3861 = vadd.f32 %v3820, %v3860
        %v3862 = vpop.f32.mrb[0].mxu0
        %v3863 = vpop.f32.mrb[0].mxu0
        %3864 = vdwg.mxu0
        %3865 = vmatprep.subr.bf16.mxu0 %v3453
        %3866 = vmatpush1.bf16.msra.mxu0 %v3452
        %3867 = vmatprep.subr.bf16.mxu0 %v3461
        %3868 = vmatpush1.bf16.msra.mxu0 %v3460
        %3869 = vmatprep.subr.bf16.mxu0 %v3469
        %3870 = vmatpush1.bf16.msra.mxu0 %v3468
        %3871 = vmatprep.subr.bf16.mxu0 %v3477
        %3872 = vmatpush1.bf16.msra.mxu0 %v3476
        %3873 = vmatprep.subr.bf16.mxu0 %v3485
        %3874 = vmatpush1.bf16.msra.mxu0 %v3484
        %3875 = vmatprep.subr.bf16.mxu0 %v3493
        %3876 = vmatpush1.bf16.msra.mxu0 %v3492
        %3877 = vmatprep.subr.bf16.mxu0 %v3501
        %3878 = vmatpush1.bf16.msra.mxu0 %v3500
        %3879 = vmatprep.subr.bf16.mxu0 %v3509
        %3880 = vmatpush1.bf16.msra.mxu0 %v3508
        %3881 = vmatprep.subr.bf16.mxu0 %v3517
        %3882 = vmatpush1.bf16.msra.mxu0 %v3516
        %3883 = vmatprep.subr.bf16.mxu0 %v3525
        %3884 = vmatpush1.bf16.msra.mxu0 %v3524
        %3885 = vmatprep.subr.bf16.mxu0 %v3533
        %3886 = vmatpush1.bf16.msra.mxu0 %v3532
        %3887 = vmatprep.subr.bf16.mxu0 %v3541
        %3888 = vmatpush1.bf16.msra.mxu0 %v3540
        %3889 = vmatprep.subr.bf16.mxu0 %v3549
        %3890 = vmatpush1.bf16.msra.mxu0 %v3548
        %3891 = vmatprep.subr.bf16.mxu0 %v3557
        %3892 = vmatpush1.bf16.msra.mxu0 %v3556
        %3893 = vmatprep.subr.bf16.mxu0 %v3565
        %3894 = vmatpush1.bf16.msra.mxu0 %v3564
        %3895 = vmatprep.subr.bf16.mxu0 %v3573
        %3896 = vmatpush1.bf16.msra.mxu0 %v3572
        %3897 = vmatprep.mubr.bf16.mxu0 %v2809
        %3898 = vmatmul.mubr.bf16.gmra.mrb[0].mxu0 %v2808
        %v3899 = vpop.f32.mrb[0].mxu0
        %v3900 = vadd.f32 %v3859, %v3899
        %v3901 = vpop.f32.mrb[0].mxu0
        %v3902 = vadd.f32 %v3861, %v3901
        %v3903 = vpop.f32.mrb[0].mxu0
        %v3904 = vpop.f32.mrb[0].mxu0
        %3905 = vdwg.mxu0
        %3906 = vmatprep.subr.bf16.mxu0 %v3071
        %3907 = vmatpush1.bf16.msra.mxu0 %v3070
        %3908 = vmatprep.subr.bf16.mxu0 %v3079
        %3909 = vmatpush1.bf16.msra.mxu0 %v3078
        %3910 = vmatprep.subr.bf16.mxu0 %v3087
        %3911 = vmatpush1.bf16.msra.mxu0 %v3086
        %3912 = vmatprep.subr.bf16.mxu0 %v3095
        %3913 = vmatpush1.bf16.msra.mxu0 %v3094
        %3914 = vmatprep.subr.bf16.mxu0 %v3103
        %3915 = vmatpush1.bf16.msra.mxu0 %v3102
        %3916 = vmatprep.subr.bf16.mxu0 %v3111
        %3917 = vmatpush1.bf16.msra.mxu0 %v3110
        %3918 = vmatprep.subr.bf16.mxu0 %v3119
        %3919 = vmatpush1.bf16.msra.mxu0 %v3118
        %3920 = vmatprep.subr.bf16.mxu0 %v3127
        %3921 = vmatpush1.bf16.msra.mxu0 %v3126
        %3922 = vmatprep.subr.bf16.mxu0 %v3135
        %3923 = vmatpush1.bf16.msra.mxu0 %v3134
        %3924 = vmatprep.subr.bf16.mxu0 %v3143
        %3925 = vmatpush1.bf16.msra.mxu0 %v3142
        %3926 = vmatprep.subr.bf16.mxu0 %v3151
        %3927 = vmatpush1.bf16.msra.mxu0 %v3150
        %3928 = vmatprep.subr.bf16.mxu0 %v3159
        %3929 = vmatpush1.bf16.msra.mxu0 %v3158
        %3930 = vmatprep.subr.bf16.mxu0 %v3167
        %3931 = vmatpush1.bf16.msra.mxu0 %v3166
        %3932 = vmatprep.subr.bf16.mxu0 %v3175
        %3933 = vmatpush1.bf16.msra.mxu0 %v3174
        %3934 = vmatprep.subr.bf16.mxu0 %v3183
        %3935 = vmatpush1.bf16.msra.mxu0 %v3182
        %3936 = vmatprep.subr.bf16.mxu0 %v3191
        %3937 = vmatpush1.bf16.msra.mxu0 %v3190
        %3938 = vmatprep.mubr.bf16.mxu0 %v2803
        %3939 = vmatmul.mubr.bf16.gmra.mrb[0].mxu0 %v2802
        %v3940 = vpop.f32.mrb[0].mxu0
        %v3941 = vadd.f32 0.0, %v3940
        %v3942 = vpop.f32.mrb[0].mxu0
        %v3943 = vadd.f32 0.0, %v3942
        %v3944 = vpop.f32.mrb[0].mxu0
        %v3945 = vpop.f32.mrb[0].mxu0
        %3946 = vdwg.mxu0
        %3947 = vmatprep.subr.bf16.mxu0 %v3199
        %3948 = vmatpush1.bf16.msra.mxu0 %v3198
        %3949 = vmatprep.subr.bf16.mxu0 %v3207
        %3950 = vmatpush1.bf16.msra.mxu0 %v3206
        %3951 = vmatprep.subr.bf16.mxu0 %v3215
        %3952 = vmatpush1.bf16.msra.mxu0 %v3214
        %3953 = vmatprep.subr.bf16.mxu0 %v3223
        %3954 = vmatpush1.bf16.msra.mxu0 %v3222
        %3955 = vmatprep.subr.bf16.mxu0 %v3231
        %3956 = vmatpush1.bf16.msra.mxu0 %v3230
        %3957 = vmatprep.subr.bf16.mxu0 %v3239
        %3958 = vmatpush1.bf16.msra.mxu0 %v3238
        %3959 = vmatprep.subr.bf16.mxu0 %v3247
        %3960 = vmatpush1.bf16.msra.mxu0 %v3246
        %3961 = vmatprep.subr.bf16.mxu0 %v3255
        %3962 = vmatpush1.bf16.msra.mxu0 %v3254
        %3963 = vmatprep.subr.bf16.mxu0 %v3263
        %3964 = vmatpush1.bf16.msra.mxu0 %v3262
        %3965 = vmatprep.subr.bf16.mxu0 %v3271
        %3966 = vmatpush1.bf16.msra.mxu0 %v3270
        %3967 = vmatprep.subr.bf16.mxu0 %v3279
        %3968 = vmatpush1.bf16.msra.mxu0 %v3278
        %3969 = vmatprep.subr.bf16.mxu0 %v3287
        %3970 = vmatpush1.bf16.msra.mxu0 %v3286
        %3971 = vmatprep.subr.bf16.mxu0 %v3295
        %3972 = vmatpush1.bf16.msra.mxu0 %v3294
        %3973 = vmatprep.subr.bf16.mxu0 %v3303
        %3974 = vmatpush1.bf16.msra.mxu0 %v3302
        %3975 = vmatprep.subr.bf16.mxu0 %v3311
        %3976 = vmatpush1.bf16.msra.mxu0 %v3310
        %3977 = vmatprep.subr.bf16.mxu0 %v3319
        %3978 = vmatpush1.bf16.msra.mxu0 %v3318
        %3979 = vmatprep.mubr.bf16.mxu0 %v2805
        %3980 = vmatmul.mubr.bf16.gmra.mrb[0].mxu0 %v2804
        %v3981 = vpop.f32.mrb[0].mxu0
        %v3982 = vadd.f32 %v3941, %v3981
        %v3983 = vpop.f32.mrb[0].mxu0
        %v3984 = vadd.f32 %v3943, %v3983
        %v3985 = vpop.f32.mrb[0].mxu0
        %v3986 = vpop.f32.mrb[0].mxu0
        %3987 = vdwg.mxu0
        %3988 = vmatprep.subr.bf16.mxu0 %v3327
        %3989 = vmatpush1.bf16.msra.mxu0 %v3326
        %3990 = vmatprep.subr.bf16.mxu0 %v3335
        %3991 = vmatpush1.bf16.msra.mxu0 %v3334
        %3992 = vmatprep.subr.bf16.mxu0 %v3343
        %3993 = vmatpush1.bf16.msra.mxu0 %v3342
        %3994 = vmatprep.subr.bf16.mxu0 %v3351
        %3995 = vmatpush1.bf16.msra.mxu0 %v3350
        %3996 = vmatprep.subr.bf16.mxu0 %v3359
        %3997 = vmatpush1.bf16.msra.mxu0 %v3358
        %3998 = vmatprep.subr.bf16.mxu0 %v3367
        %3999 = vmatpush1.bf16.msra.mxu0 %v3366
        %4000 = vmatprep.subr.bf16.mxu0 %v3375
        %4001 = vmatpush1.bf16.msra.mxu0 %v3374
        %4002 = vmatprep.subr.bf16.mxu0 %v3383
        %4003 = vmatpush1.bf16.msra.mxu0 %v3382
        %4004 = vmatprep.subr.bf16.mxu0 %v3391
        %4005 = vmatpush1.bf16.msra.mxu0 %v3390
        %4006 = vmatprep.subr.bf16.mxu0 %v3399
        %4007 = vmatpush1.bf16.msra.mxu0 %v3398
        %4008 = vmatprep.subr.bf16.mxu0 %v3407
        %4009 = vmatpush1.bf16.msra.mxu0 %v3406
        %4010 = vmatprep.subr.bf16.mxu0 %v3415
        %4011 = vmatpush1.bf16.msra.mxu0 %v3414
        %4012 = vmatprep.subr.bf16.mxu0 %v3423
        %4013 = vmatpush1.bf16.msra.mxu0 %v3422
        %4014 = vmatprep.subr.bf16.mxu0 %v3431
        %4015 = vmatpush1.bf16.msra.mxu0 %v3430
        %4016 = vmatprep.subr.bf16.mxu0 %v3439
        %4017 = vmatpush1.bf16.msra.mxu0 %v3438
        %4018 = vmatprep.subr.bf16.mxu0 %v3447
        %4019 = vmatpush1.bf16.msra.mxu0 %v3446
        %4020 = vmatprep.mubr.bf16.mxu0 %v2807
        %4021 = vmatmul.mubr.bf16.gmra.mrb[0].mxu0 %v2806
        %v4022 = vpop.f32.mrb[0].mxu0
        %v4023 = vadd.f32 %v3982, %v4022
        %v4024 = vpop.f32.mrb[0].mxu0
        %v4025 = vadd.f32 %v3984, %v4024
        %v4026 = vpop.f32.mrb[0].mxu0
        %v4027 = vpop.f32.mrb[0].mxu0
        %4028 = vdwg.mxu0
        %4029 = vmatprep.subr.bf16.mxu0 %v3455
        %4030 = vmatpush1.bf16.msra.mxu0 %v3454
        %4031 = vmatprep.subr.bf16.mxu0 %v3463
        %4032 = vmatpush1.bf16.msra.mxu0 %v3462
        %4033 = vmatprep.subr.bf16.mxu0 %v3471
        %4034 = vmatpush1.bf16.msra.mxu0 %v3470
        %4035 = vmatprep.subr.bf16.mxu0 %v3479
        %4036 = vmatpush1.bf16.msra.mxu0 %v3478
        %4037 = vmatprep.subr.bf16.mxu0 %v3487
        %4038 = vmatpush1.bf16.msra.mxu0 %v3486
        %4039 = vmatprep.subr.bf16.mxu0 %v3495
        %4040 = vmatpush1.bf16.msra.mxu0 %v3494
        %4041 = vmatprep.subr.bf16.mxu0 %v3503
        %4042 = vmatpush1.bf16.msra.mxu0 %v3502
        %4043 = vmatprep.subr.bf16.mxu0 %v3511
        %4044 = vmatpush1.bf16.msra.mxu0 %v3510
        %4045 = vmatprep.subr.bf16.mxu0 %v3519
        %4046 = vmatpush1.bf16.msra.mxu0 %v3518
        %4047 = vmatprep.subr.bf16.mxu0 %v3527
        %4048 = vmatpush1.bf16.msra.mxu0 %v3526
        %4049 = vmatprep.subr.bf16.mxu0 %v3535
        %4050 = vmatpush1.bf16.msra.mxu0 %v3534
        %4051 = vmatprep.subr.bf16.mxu0 %v3543
        %4052 = vmatpush1.bf16.msra.mxu0 %v3542
        %4053 = vmatprep.subr.bf16.mxu0 %v3551
        %4054 = vmatpush1.bf16.msra.mxu0 %v3550
        %4055 = vmatprep.subr.bf16.mxu0 %v3559
        %4056 = vmatpush1.bf16.msra.mxu0 %v3558
        %4057 = vmatprep.subr.bf16.mxu0 %v3567
        %4058 = vmatpush1.bf16.msra.mxu0 %v3566
        %4059 = vmatprep.subr.bf16.mxu0 %v3575
        %4060 = vmatpush1.bf16.msra.mxu0 %v3574
        %4061 = vmatprep.mubr.bf16.mxu0 %v2809
        %4062 = vmatmul.mubr.bf16.gmra.mrb[0].mxu0 %v2808
        %v4063 = vpop.f32.mrb[0].mxu0
        %v4064 = vadd.f32 %v4023, %v4063
        %v4065 = vpop.f32.mrb[0].mxu0
        %v4066 = vadd.f32 %v4025, %v4065
        %v4067 = vpop.f32.mrb[0].mxu0
        %v4068 = vpop.f32.mrb[0].mxu0
        %4069 = vdwg.mxu0
        %4070 = vmatprep.subr.bf16.mxu0 %v3073
        %4071 = vmatpush1.bf16.msra.mxu0 %v3072
        %4072 = vmatprep.subr.bf16.mxu0 %v3081
        %4073 = vmatpush1.bf16.msra.mxu0 %v3080
        %4074 = vmatprep.subr.bf16.mxu0 %v3089
        %4075 = vmatpush1.bf16.msra.mxu0 %v3088
        %4076 = vmatprep.subr.bf16.mxu0 %v3097
        %4077 = vmatpush1.bf16.msra.mxu0 %v3096
        %4078 = vmatprep.subr.bf16.mxu0 %v3105
        %4079 = vmatpush1.bf16.msra.mxu0 %v3104
        %4080 = vmatprep.subr.bf16.mxu0 %v3113
        %4081 = vmatpush1.bf16.msra.mxu0 %v3112
        %4082 = vmatprep.subr.bf16.mxu0 %v3121
        %4083 = vmatpush1.bf16.msra.mxu0 %v3120
        %4084 = vmatprep.subr.bf16.mxu0 %v3129
        %4085 = vmatpush1.bf16.msra.mxu0 %v3128
        %4086 = vmatprep.subr.bf16.mxu0 %v3137
        %4087 = vmatpush1.bf16.msra.mxu0 %v3136
        %4088 = vmatprep.subr.bf16.mxu0 %v3145
        %4089 = vmatpush1.bf16.msra.mxu0 %v3144
        %4090 = vmatprep.subr.bf16.mxu0 %v3153
        %4091 = vmatpush1.bf16.msra.mxu0 %v3152
        %4092 = vmatprep.subr.bf16.mxu0 %v3161
        %4093 = vmatpush1.bf16.msra.mxu0 %v3160
        %4094 = vmatprep.subr.bf16.mxu0 %v3169
        %4095 = vmatpush1.bf16.msra.mxu0 %v3168
        %4096 = vmatprep.subr.bf16.mxu0 %v3177
        %4097 = vmatpush1.bf16.msra.mxu0 %v3176
        %4098 = vmatprep.subr.bf16.mxu0 %v3185
        %4099 = vmatpush1.bf16.msra.mxu0 %v3184
        %4100 = vmatprep.subr.bf16.mxu0 %v3193
        %4101 = vmatpush1.bf16.msra.mxu0 %v3192
        %4102 = vmatprep.mubr.bf16.mxu0 %v2803
        %4103 = vmatmul.mubr.bf16.gmra.mrb[0].mxu0 %v2802
        %v4104 = vpop.f32.mrb[0].mxu0
        %v4105 = vadd.f32 0.0, %v4104
        %v4106 = vpop.f32.mrb[0].mxu0
        %v4107 = vadd.f32 0.0, %v4106
        %v4108 = vpop.f32.mrb[0].mxu0
        %v4109 = vpop.f32.mrb[0].mxu0
        %4110 = vdwg.mxu0
        %4111 = vmatprep.subr.bf16.mxu0 %v3201
        %4112 = vmatpush1.bf16.msra.mxu0 %v3200
        %4113 = vmatprep.subr.bf16.mxu0 %v3209
        %4114 = vmatpush1.bf16.msra.mxu0 %v3208
        %4115 = vmatprep.subr.bf16.mxu0 %v3217
        %4116 = vmatpush1.bf16.msra.mxu0 %v3216
        %4117 = vmatprep.subr.bf16.mxu0 %v3225
        %4118 = vmatpush1.bf16.msra.mxu0 %v3224
        %4119 = vmatprep.subr.bf16.mxu0 %v3233
        %4120 = vmatpush1.bf16.msra.mxu0 %v3232
        %4121 = vmatprep.subr.bf16.mxu0 %v3241
        %4122 = vmatpush1.bf16.msra.mxu0 %v3240
        %4123 = vmatprep.subr.bf16.mxu0 %v3249
        %4124 = vmatpush1.bf16.msra.mxu0 %v3248
        %4125 = vmatprep.subr.bf16.mxu0 %v3257
        %4126 = vmatpush1.bf16.msra.mxu0 %v3256
        %4127 = vmatprep.subr.bf16.mxu0 %v3265
        %4128 = vmatpush1.bf16.msra.mxu0 %v3264
        %4129 = vmatprep.subr.bf16.mxu0 %v3273
        %4130 = vmatpush1.bf16.msra.mxu0 %v3272
        %4131 = vmatprep.subr.bf16.mxu0 %v3281
        %4132 = vmatpush1.bf16.msra.mxu0 %v3280
        %4133 = vmatprep.subr.bf16.mxu0 %v3289
        %4134 = vmatpush1.bf16.msra.mxu0 %v3288
        %4135 = vmatprep.subr.bf16.mxu0 %v3297
        %4136 = vmatpush1.bf16.msra.mxu0 %v3296
        %4137 = vmatprep.subr.bf16.mxu0 %v3305
        %4138 = vmatpush1.bf16.msra.mxu0 %v3304
        %4139 = vmatprep.subr.bf16.mxu0 %v3313
        %4140 = vmatpush1.bf16.msra.mxu0 %v3312
        %4141 = vmatprep.subr.bf16.mxu0 %v3321
        %4142 = vmatpush1.bf16.msra.mxu0 %v3320
        %4143 = vmatprep.mubr.bf16.mxu0 %v2805
        %4144 = vmatmul.mubr.bf16.gmra.mrb[0].mxu0 %v2804
        %v4145 = vpop.f32.mrb[0].mxu0
        %v4146 = vadd.f32 %v4105, %v4145
        %v4147 = vpop.f32.mrb[0].mxu0
        %v4148 = vadd.f32 %v4107, %v4147
        %v4149 = vpop.f32.mrb[0].mxu0
        %v4150 = vpop.f32.mrb[0].mxu0
        %4151 = vdwg.mxu0
        %4152 = vmatprep.subr.bf16.mxu0 %v3329
        %4153 = vmatpush1.bf16.msra.mxu0 %v3328
        %4154 = vmatprep.subr.bf16.mxu0 %v3337
        %4155 = vmatpush1.bf16.msra.mxu0 %v3336
        %4156 = vmatprep.subr.bf16.mxu0 %v3345
        %4157 = vmatpush1.bf16.msra.mxu0 %v3344
        %4158 = vmatprep.subr.bf16.mxu0 %v3353
        %4159 = vmatpush1.bf16.msra.mxu0 %v3352
        %4160 = vmatprep.subr.bf16.mxu0 %v3361
        %4161 = vmatpush1.bf16.msra.mxu0 %v3360
        %4162 = vmatprep.subr.bf16.mxu0 %v3369
        %4163 = vmatpush1.bf16.msra.mxu0 %v3368
        %4164 = vmatprep.subr.bf16.mxu0 %v3377
        %4165 = vmatpush1.bf16.msra.mxu0 %v3376
        %4166 = vmatprep.subr.bf16.mxu0 %v3385
        %4167 = vmatpush1.bf16.msra.mxu0 %v3384
        %4168 = vmatprep.subr.bf16.mxu0 %v3393
        %4169 = vmatpush1.bf16.msra.mxu0 %v3392
        %4170 = vmatprep.subr.bf16.mxu0 %v3401
        %4171 = vmatpush1.bf16.msra.mxu0 %v3400
        %4172 = vmatprep.subr.bf16.mxu0 %v3409
        %4173 = vmatpush1.bf16.msra.mxu0 %v3408
        %4174 = vmatprep.subr.bf16.mxu0 %v3417
        %4175 = vmatpush1.bf16.msra.mxu0 %v3416
        %4176 = vmatprep.subr.bf16.mxu0 %v3425
        %4177 = vmatpush1.bf16.msra.mxu0 %v3424
        %4178 = vmatprep.subr.bf16.mxu0 %v3433
        %4179 = vmatpush1.bf16.msra.mxu0 %v3432
        %4180 = vmatprep.subr.bf16.mxu0 %v3441
        %4181 = vmatpush1.bf16.msra.mxu0 %v3440
        %4182 = vmatprep.subr.bf16.mxu0 %v3449
        %4183 = vmatpush1.bf16.msra.mxu0 %v3448
        %4184 = vmatprep.mubr.bf16.mxu0 %v2807
        %4185 = vmatmul.mubr.bf16.gmra.mrb[0].mxu0 %v2806
        %v4186 = vpop.f32.mrb[0].mxu0
        %v4187 = vadd.f32 %v4146, %v4186
        %v4188 = vpop.f32.mrb[0].mxu0
        %v4189 = vadd.f32 %v4148, %v4188
        %v4190 = vpop.f32.mrb[0].mxu0
        %v4191 = vpop.f32.mrb[0].mxu0
        %4192 = vdwg.mxu0
        %4193 = vmatprep.subr.bf16.mxu0 %v3457
        %4194 = vmatpush1.bf16.msra.mxu0 %v3456
        %4195 = vmatprep.subr.bf16.mxu0 %v3465
        %4196 = vmatpush1.bf16.msra.mxu0 %v3464
        %4197 = vmatprep.subr.bf16.mxu0 %v3473
        %4198 = vmatpush1.bf16.msra.mxu0 %v3472
        %4199 = vmatprep.subr.bf16.mxu0 %v3481
        %4200 = vmatpush1.bf16.msra.mxu0 %v3480
        %4201 = vmatprep.subr.bf16.mxu0 %v3489
        %4202 = vmatpush1.bf16.msra.mxu0 %v3488
        %4203 = vmatprep.subr.bf16.mxu0 %v3497
        %4204 = vmatpush1.bf16.msra.mxu0 %v3496
        %4205 = vmatprep.subr.bf16.mxu0 %v3505
        %4206 = vmatpush1.bf16.msra.mxu0 %v3504
        %4207 = vmatprep.subr.bf16.mxu0 %v3513
        %4208 = vmatpush1.bf16.msra.mxu0 %v3512
        %4209 = vmatprep.subr.bf16.mxu0 %v3521
        %4210 = vmatpush1.bf16.msra.mxu0 %v3520
        %4211 = vmatprep.subr.bf16.mxu0 %v3529
        %4212 = vmatpush1.bf16.msra.mxu0 %v3528
        %4213 = vmatprep.subr.bf16.mxu0 %v3537
        %4214 = vmatpush1.bf16.msra.mxu0 %v3536
        %4215 = vmatprep.subr.bf16.mxu0 %v3545
        %4216 = vmatpush1.bf16.msra.mxu0 %v3544
        %4217 = vmatprep.subr.bf16.mxu0 %v3553
        %4218 = vmatpush1.bf16.msra.mxu0 %v3552
        %4219 = vmatprep.subr.bf16.mxu0 %v3561
        %4220 = vmatpush1.bf16.msra.mxu0 %v3560
        %4221 = vmatprep.subr.bf16.mxu0 %v3569
        %4222 = vmatpush1.bf16.msra.mxu0 %v3568
        %4223 = vmatprep.subr.bf16.mxu0 %v3577
        %4224 = vmatpush1.bf16.msra.mxu0 %v3576
        %4225 = vmatprep.mubr.bf16.mxu0 %v2809
        %4226 = vmatmul.mubr.bf16.gmra.mrb[0].mxu0 %v2808
        %v4227 = vpop.f32.mrb[0].mxu0
        %v4228 = vadd.f32 %v4187, %v4227
        %v4229 = vpop.f32.mrb[0].mxu0
        %v4230 = vadd.f32 %v4189, %v4229
        %v4231 = vpop.f32.mrb[0].mxu0
        %v4232 = vpop.f32.mrb[0].mxu0
        %4233 = vdwg.mxu0
        %v4235 = vlaneseq
        %v4236 = vshrl.u32 %v4235, 7
        %v4237 = vsub.s32 0, %v4236
        %v4238 = vrot.slane %v1261, %v4237
        %v4239 = vlaneseq
        %v4240 = vshrl.u32 %v4239, 7
        %v4241 = vsub.s32 1, %v4240
        %v4242 = vrot.slane %v1261, %v4241
        %v4243 = vlaneseq
        %v4244 = vshrl.u32 %v4243, 7
        %v4245 = vsub.s32 2, %v4244
        %v4246 = vrot.slane %v1261, %v4245
        %v4247 = vlaneseq
        %v4248 = vshrl.u32 %v4247, 7
        %v4249 = vsub.s32 3, %v4248
        %v4250 = vrot.slane %v1261, %v4249
        %v4251 = vlaneseq
        %v4252 = vshrl.u32 %v4251, 7
        %v4253 = vsub.s32 4, %v4252
        %v4254 = vrot.slane %v1261, %v4253
        %v4255 = vlaneseq
        %v4256 = vshrl.u32 %v4255, 7
        %v4257 = vsub.s32 5, %v4256
        %v4258 = vrot.slane %v1261, %v4257
        %v4259 = vlaneseq
        %v4260 = vshrl.u32 %v4259, 7
        %v4261 = vsub.s32 6, %v4260
        %v4262 = vrot.slane %v1261, %v4261
        %v4263 = vlaneseq
        %v4264 = vshrl.u32 %v4263, 7
        %v4265 = vsub.s32 7, %v4264
        %v4266 = vrot.slane %v1261, %v4265
        %v4275 = vmul.f32 %v3736, %v4238
        %v4276 = vmul.f32 %v3738, %v4242
        %v4277 = vmul.f32 %v3900, %v4246
        %v4278 = vmul.f32 %v3902, %v4250
        %v4279 = vmul.f32 %v4064, %v4254
        %v4280 = vmul.f32 %v4066, %v4258
        %v4281 = vmul.f32 %v4228, %v4262
        %v4282 = vmul.f32 %v4230, %v4266
        %v4284 = vlaneseq
        %v4285 = vshrl.u32 %v4284, 7
        %v4286 = vsub.s32 0, %v4285
        %v4287 = vrot.slane %v1263, %v4286
        %v4288 = vlaneseq
        %v4289 = vshrl.u32 %v4288, 7
        %v4290 = vsub.s32 1, %v4289
        %v4291 = vrot.slane %v1263, %v4290
        %v4292 = vlaneseq
        %v4293 = vshrl.u32 %v4292, 7
        %v4294 = vsub.s32 2, %v4293
        %v4295 = vrot.slane %v1263, %v4294
        %v4296 = vlaneseq
        %v4297 = vshrl.u32 %v4296, 7
        %v4298 = vsub.s32 3, %v4297
        %v4299 = vrot.slane %v1263, %v4298
        %v4300 = vlaneseq
        %v4301 = vshrl.u32 %v4300, 7
        %v4302 = vsub.s32 4, %v4301
        %v4303 = vrot.slane %v1263, %v4302
        %v4304 = vlaneseq
        %v4305 = vshrl.u32 %v4304, 7
        %v4306 = vsub.s32 5, %v4305
        %v4307 = vrot.slane %v1263, %v4306
        %v4308 = vlaneseq
        %v4309 = vshrl.u32 %v4308, 7
        %v4310 = vsub.s32 6, %v4309
        %v4311 = vrot.slane %v1263, %v4310
        %v4312 = vlaneseq
        %v4313 = vshrl.u32 %v4312, 7
        %v4314 = vsub.s32 7, %v4313
        %v4315 = vrot.slane %v1263, %v4314
        %v4324 = vadd.f32 %v4275, %v4287
        %v4325 = vadd.f32 %v4276, %v4291
        %v4326 = vadd.f32 %v4277, %v4295
        %v4327 = vadd.f32 %v4278, %v4299
        %v4328 = vadd.f32 %v4279, %v4303
        %v4329 = vadd.f32 %v4280, %v4307
        %v4330 = vadd.f32 %v4281, %v4311
        %v4331 = vadd.f32 %v4282, %v4315
        %v4332 = vadd.f32 %v4324, %v1241
        %v4333 = vadd.f32 %v4325, %v1242
        %v4334 = vadd.f32 %v4326, %v1243
        %v4335 = vadd.f32 %v4327, %v1244
        %v4336 = vadd.f32 %v4328, %v1245
        %v4337 = vadd.f32 %v4329, %v1246
        %v4338 = vadd.f32 %v4330, %v1247
        %v4339 = vadd.f32 %v4331, %v1248
        %v4340 = vmax.f32 %v4332, 0.0
        %v4341 = vmax.f32 %v4333, 0.0
        %v4342 = vmax.f32 %v4334, 0.0
        %v4343 = vmax.f32 %v4335, 0.0
        %v4344 = vmax.f32 %v4336, 0.0
        %v4345 = vmax.f32 %v4337, 0.0
        %v4346 = vmax.f32 %v4338, 0.0
        %v4347 = vmax.f32 %v4339, 0.0
        %4348 = vst [vmem:[#allocation2] sm:$0xff] %v4340
        %4349 = vst [vmem:[#allocation2 + $0x8] sm:$0xff] %v4341
        %4350 = vst [vmem:[#allocation2 + $0x10] sm:$0xff] %v4342
        %4351 = vst [vmem:[#allocation2 + $0x18] sm:$0xff] %v4343
        %4352 = vst [vmem:[#allocation2 + $0x20] sm:$0xff] %v4344
        %4353 = vst [vmem:[#allocation2 + $0x28] sm:$0xff] %v4345
        %4354 = vst [vmem:[#allocation2 + $0x30] sm:$0xff] %v4346
        %4355 = vst [vmem:[#allocation2 + $0x38] sm:$0xff] %v4347
        %p4356 = scmp.eq.s32.totalorder %s34, 1
        // Predicated region
        $region129: #{tpu_custom_call.1} parent=71 // pred_check
          %p4357 = pneg %p4356
        $region130: #{tpu_custom_call.1} parent=71 // pred_check_branch
          %4359 = sbr.rel (%p4357) target = $region132
        $region131: #{tpu_custom_call.1} parent=71 // pred_region
          %v4360 = vpack.c.bf16 %v4340, %v4340
          %v4361 = vpack.c.bf16 %v4341, %v4341
          %v4362 = vpack.c.bf16 %v4342, %v4342
          %v4363 = vpack.c.bf16 %v4343, %v4343
          %v4364 = vpack.c.bf16 %v4344, %v4344
          %v4365 = vpack.c.bf16 %v4345, %v4345
          %v4366 = vpack.c.bf16 %v4346, %v4346
          %v4367 = vpack.c.bf16 %v4347, %v4347
          %v4368 = vld [vmem:[#allocation18] sm:$0xff]
          %v4369 = vld [vmem:[#allocation18 + $0x8] sm:$0xff]
          %v4370 = vld [vmem:[#allocation18 + $0x10] sm:$0xff]
          %v4371 = vld [vmem:[#allocation18 + $0x18] sm:$0xff]
          %v4372 = vld [vmem:[#allocation18 + $0x20] sm:$0xff]
          %v4373 = vld [vmem:[#allocation18 + $0x28] sm:$0xff]
          %v4374 = vld [vmem:[#allocation18 + $0x30] sm:$0xff]
          %v4375 = vld [vmem:[#allocation18 + $0x38] sm:$0xff]
          %v4376 = vld [vmem:[#allocation18 + $0x40] sm:$0xff]
          %v4377 = vld [vmem:[#allocation18 + $0x48] sm:$0xff]
          %v4378 = vld [vmem:[#allocation18 + $0x50] sm:$0xff]
          %v4379 = vld [vmem:[#allocation18 + $0x58] sm:$0xff]
          %v4380 = vld [vmem:[#allocation18 + $0x60] sm:$0xff]
          %v4381 = vld [vmem:[#allocation18 + $0x68] sm:$0xff]
          %v4382 = vld [vmem:[#allocation18 + $0x70] sm:$0xff]
          %v4383 = vld [vmem:[#allocation18 + $0x78] sm:$0xff]
          %v4384 = vld [vmem:[#allocation18 + $0x80] sm:$0xff]
          %v4385 = vld [vmem:[#allocation18 + $0x88] sm:$0xff]
          %v4386 = vld [vmem:[#allocation18 + $0x90] sm:$0xff]
          %v4387 = vld [vmem:[#allocation18 + $0x98] sm:$0xff]
          %v4388 = vld [vmem:[#allocation18 + $0xa0] sm:$0xff]
          %v4389 = vld [vmem:[#allocation18 + $0xa8] sm:$0xff]
          %v4390 = vld [vmem:[#allocation18 + $0xb0] sm:$0xff]
          %v4391 = vld [vmem:[#allocation18 + $0xb8] sm:$0xff]
          %v4392 = vld [vmem:[#allocation18 + $0xc0] sm:$0xff]
          %v4393 = vld [vmem:[#allocation18 + $0xc8] sm:$0xff]
          %v4394 = vld [vmem:[#allocation18 + $0xd0] sm:$0xff]
          %v4395 = vld [vmem:[#allocation18 + $0xd8] sm:$0xff]
          %v4396 = vld [vmem:[#allocation18 + $0xe0] sm:$0xff]
          %v4397 = vld [vmem:[#allocation18 + $0xe8] sm:$0xff]
          %v4398 = vld [vmem:[#allocation18 + $0xf0] sm:$0xff]
          %v4399 = vld [vmem:[#allocation18 + $0xf8] sm:$0xff]
          %v4400 = vld [vmem:[#allocation18 + $0x100] sm:$0xff]
          %v4401 = vld [vmem:[#allocation18 + $0x108] sm:$0xff]
          %v4402 = vld [vmem:[#allocation18 + $0x110] sm:$0xff]
          %v4403 = vld [vmem:[#allocation18 + $0x118] sm:$0xff]
          %v4404 = vld [vmem:[#allocation18 + $0x120] sm:$0xff]
          %v4405 = vld [vmem:[#allocation18 + $0x128] sm:$0xff]
          %v4406 = vld [vmem:[#allocation18 + $0x130] sm:$0xff]
          %v4407 = vld [vmem:[#allocation18 + $0x138] sm:$0xff]
          %v4408 = vld [vmem:[#allocation18 + $0x140] sm:$0xff]
          %v4409 = vld [vmem:[#allocation18 + $0x148] sm:$0xff]
          %v4410 = vld [vmem:[#allocation18 + $0x150] sm:$0xff]
          %v4411 = vld [vmem:[#allocation18 + $0x158] sm:$0xff]
          %v4412 = vld [vmem:[#allocation18 + $0x160] sm:$0xff]
          %v4413 = vld [vmem:[#allocation18 + $0x168] sm:$0xff]
          %v4414 = vld [vmem:[#allocation18 + $0x170] sm:$0xff]
          %v4415 = vld [vmem:[#allocation18 + $0x178] sm:$0xff]
          %v4416 = vld [vmem:[#allocation18 + $0x180] sm:$0xff]
          %v4417 = vld [vmem:[#allocation18 + $0x188] sm:$0xff]
          %v4418 = vld [vmem:[#allocation18 + $0x190] sm:$0xff]
          %v4419 = vld [vmem:[#allocation18 + $0x198] sm:$0xff]
          %v4420 = vld [vmem:[#allocation18 + $0x1a0] sm:$0xff]
          %v4421 = vld [vmem:[#allocation18 + $0x1a8] sm:$0xff]
          %v4422 = vld [vmem:[#allocation18 + $0x1b0] sm:$0xff]
          %v4423 = vld [vmem:[#allocation18 + $0x1b8] sm:$0xff]
          %v4424 = vld [vmem:[#allocation18 + $0x1c0] sm:$0xff]
          %v4425 = vld [vmem:[#allocation18 + $0x1c8] sm:$0xff]
          %v4426 = vld [vmem:[#allocation18 + $0x1d0] sm:$0xff]
          %v4427 = vld [vmem:[#allocation18 + $0x1d8] sm:$0xff]
          %v4428 = vld [vmem:[#allocation18 + $0x1e0] sm:$0xff]
          %v4429 = vld [vmem:[#allocation18 + $0x1e8] sm:$0xff]
          %v4430 = vld [vmem:[#allocation18 + $0x1f0] sm:$0xff]
          %v4431 = vld [vmem:[#allocation18 + $0x1f8] sm:$0xff]
          %v4432 = vld [vmem:[#allocation18 + $0x200] sm:$0xff]
          %v4433 = vld [vmem:[#allocation18 + $0x208] sm:$0xff]
          %v4434 = vld [vmem:[#allocation18 + $0x210] sm:$0xff]
          %v4435 = vld [vmem:[#allocation18 + $0x218] sm:$0xff]
          %v4436 = vld [vmem:[#allocation18 + $0x220] sm:$0xff]
          %v4437 = vld [vmem:[#allocation18 + $0x228] sm:$0xff]
          %v4438 = vld [vmem:[#allocation18 + $0x230] sm:$0xff]
          %v4439 = vld [vmem:[#allocation18 + $0x238] sm:$0xff]
          %v4440 = vld [vmem:[#allocation18 + $0x240] sm:$0xff]
          %v4441 = vld [vmem:[#allocation18 + $0x248] sm:$0xff]
          %v4442 = vld [vmem:[#allocation18 + $0x250] sm:$0xff]
          %v4443 = vld [vmem:[#allocation18 + $0x258] sm:$0xff]
          %v4444 = vld [vmem:[#allocation18 + $0x260] sm:$0xff]
          %v4445 = vld [vmem:[#allocation18 + $0x268] sm:$0xff]
          %v4446 = vld [vmem:[#allocation18 + $0x270] sm:$0xff]
          %v4447 = vld [vmem:[#allocation18 + $0x278] sm:$0xff]
          %v4448 = vld [vmem:[#allocation18 + $0x280] sm:$0xff]
          %v4449 = vld [vmem:[#allocation18 + $0x288] sm:$0xff]
          %v4450 = vld [vmem:[#allocation18 + $0x290] sm:$0xff]
          %v4451 = vld [vmem:[#allocation18 + $0x298] sm:$0xff]
          %v4452 = vld [vmem:[#allocation18 + $0x2a0] sm:$0xff]
          %v4453 = vld [vmem:[#allocation18 + $0x2a8] sm:$0xff]
          %v4454 = vld [vmem:[#allocation18 + $0x2b0] sm:$0xff]
          %v4455 = vld [vmem:[#allocation18 + $0x2b8] sm:$0xff]
          %v4456 = vld [vmem:[#allocation18 + $0x2c0] sm:$0xff]
          %v4457 = vld [vmem:[#allocation18 + $0x2c8] sm:$0xff]
          %v4458 = vld [vmem:[#allocation18 + $0x2d0] sm:$0xff]
          %v4459 = vld [vmem:[#allocation18 + $0x2d8] sm:$0xff]
          %v4460 = vld [vmem:[#allocation18 + $0x2e0] sm:$0xff]
          %v4461 = vld [vmem:[#allocation18 + $0x2e8] sm:$0xff]
          %v4462 = vld [vmem:[#allocation18 + $0x2f0] sm:$0xff]
          %v4463 = vld [vmem:[#allocation18 + $0x2f8] sm:$0xff]
          %v4464 = vld [vmem:[#allocation18 + $0x300] sm:$0xff]
          %v4465 = vld [vmem:[#allocation18 + $0x308] sm:$0xff]
          %v4466 = vld [vmem:[#allocation18 + $0x310] sm:$0xff]
          %v4467 = vld [vmem:[#allocation18 + $0x318] sm:$0xff]
          %v4468 = vld [vmem:[#allocation18 + $0x320] sm:$0xff]
          %v4469 = vld [vmem:[#allocation18 + $0x328] sm:$0xff]
          %v4470 = vld [vmem:[#allocation18 + $0x330] sm:$0xff]
          %v4471 = vld [vmem:[#allocation18 + $0x338] sm:$0xff]
          %v4472 = vld [vmem:[#allocation18 + $0x340] sm:$0xff]
          %v4473 = vld [vmem:[#allocation18 + $0x348] sm:$0xff]
          %v4474 = vld [vmem:[#allocation18 + $0x350] sm:$0xff]
          %v4475 = vld [vmem:[#allocation18 + $0x358] sm:$0xff]
          %v4476 = vld [vmem:[#allocation18 + $0x360] sm:$0xff]
          %v4477 = vld [vmem:[#allocation18 + $0x368] sm:$0xff]
          %v4478 = vld [vmem:[#allocation18 + $0x370] sm:$0xff]
          %v4479 = vld [vmem:[#allocation18 + $0x378] sm:$0xff]
          %v4480 = vld [vmem:[#allocation18 + $0x380] sm:$0xff]
          %v4481 = vld [vmem:[#allocation18 + $0x388] sm:$0xff]
          %v4482 = vld [vmem:[#allocation18 + $0x390] sm:$0xff]
          %v4483 = vld [vmem:[#allocation18 + $0x398] sm:$0xff]
          %v4484 = vld [vmem:[#allocation18 + $0x3a0] sm:$0xff]
          %v4485 = vld [vmem:[#allocation18 + $0x3a8] sm:$0xff]
          %v4486 = vld [vmem:[#allocation18 + $0x3b0] sm:$0xff]
          %v4487 = vld [vmem:[#allocation18 + $0x3b8] sm:$0xff]
          %v4488 = vld [vmem:[#allocation18 + $0x3c0] sm:$0xff]
          %v4489 = vld [vmem:[#allocation18 + $0x3c8] sm:$0xff]
          %v4490 = vld [vmem:[#allocation18 + $0x3d0] sm:$0xff]
          %v4491 = vld [vmem:[#allocation18 + $0x3d8] sm:$0xff]
          %v4492 = vld [vmem:[#allocation18 + $0x3e0] sm:$0xff]
          %v4493 = vld [vmem:[#allocation18 + $0x3e8] sm:$0xff]
          %v4494 = vld [vmem:[#allocation18 + $0x3f0] sm:$0xff]
          %v4495 = vld [vmem:[#allocation18 + $0x3f8] sm:$0xff]
          %v4496 = vld [vmem:[#allocation20] sm:$0x3]
          %v4498 = vlaneseq
          %v4499 = vshrl.u32 %v4498, 7
          %v4500 = vsub.s32 0, %v4499
          %v4501 = vrot.slane %v4496, %v4500
          %v4502 = vlaneseq
          %v4503 = vshrl.u32 %v4502, 7
          %v4504 = vsub.s32 1, %v4503
          %v4505 = vrot.slane %v4496, %v4504
          %v4636 = vunpack.c.l.b16 %v4368
          %v4637 = vunpack.c.h.b16 %v4368
          %v4638 = vunpack.c.l.b16 %v4369
          %v4639 = vunpack.c.h.b16 %v4369
          %v4640 = vunpack.c.l.b16 %v4370
          %v4641 = vunpack.c.h.b16 %v4370
          %v4642 = vunpack.c.l.b16 %v4371
          %v4643 = vunpack.c.h.b16 %v4371
          %v4644 = vunpack.c.l.b16 %v4372
          %v4645 = vunpack.c.h.b16 %v4372
          %v4646 = vunpack.c.l.b16 %v4373
          %v4647 = vunpack.c.h.b16 %v4373
          %v4648 = vunpack.c.l.b16 %v4374
          %v4649 = vunpack.c.h.b16 %v4374
          %v4650 = vunpack.c.l.b16 %v4375
          %v4651 = vunpack.c.h.b16 %v4375
          %v4652 = vunpack.c.l.b16 %v4376
          %v4653 = vunpack.c.h.b16 %v4376
          %v4654 = vunpack.c.l.b16 %v4377
          %v4655 = vunpack.c.h.b16 %v4377
          %v4656 = vunpack.c.l.b16 %v4378
          %v4657 = vunpack.c.h.b16 %v4378
          %v4658 = vunpack.c.l.b16 %v4379
          %v4659 = vunpack.c.h.b16 %v4379
          %v4660 = vunpack.c.l.b16 %v4380
          %v4661 = vunpack.c.h.b16 %v4380
          %v4662 = vunpack.c.l.b16 %v4381
          %v4663 = vunpack.c.h.b16 %v4381
          %v4664 = vunpack.c.l.b16 %v4382
          %v4665 = vunpack.c.h.b16 %v4382
          %v4666 = vunpack.c.l.b16 %v4383
          %v4667 = vunpack.c.h.b16 %v4383
          %v4668 = vunpack.c.l.b16 %v4384
          %v4669 = vunpack.c.h.b16 %v4384
          %v4670 = vunpack.c.l.b16 %v4385
          %v4671 = vunpack.c.h.b16 %v4385
          %v4672 = vunpack.c.l.b16 %v4386
          %v4673 = vunpack.c.h.b16 %v4386
          %v4674 = vunpack.c.l.b16 %v4387
          %v4675 = vunpack.c.h.b16 %v4387
          %v4676 = vunpack.c.l.b16 %v4388
          %v4677 = vunpack.c.h.b16 %v4388
          %v4678 = vunpack.c.l.b16 %v4389
          %v4679 = vunpack.c.h.b16 %v4389
          %v4680 = vunpack.c.l.b16 %v4390
          %v4681 = vunpack.c.h.b16 %v4390
          %v4682 = vunpack.c.l.b16 %v4391
          %v4683 = vunpack.c.h.b16 %v4391
          %v4684 = vunpack.c.l.b16 %v4392
          %v4685 = vunpack.c.h.b16 %v4392
          %v4686 = vunpack.c.l.b16 %v4393
          %v4687 = vunpack.c.h.b16 %v4393
          %v4688 = vunpack.c.l.b16 %v4394
          %v4689 = vunpack.c.h.b16 %v4394
          %v4690 = vunpack.c.l.b16 %v4395
          %v4691 = vunpack.c.h.b16 %v4395
          %v4692 = vunpack.c.l.b16 %v4396
          %v4693 = vunpack.c.h.b16 %v4396
          %v4694 = vunpack.c.l.b16 %v4397
          %v4695 = vunpack.c.h.b16 %v4397
          %v4696 = vunpack.c.l.b16 %v4398
          %v4697 = vunpack.c.h.b16 %v4398
          %v4698 = vunpack.c.l.b16 %v4399
          %v4699 = vunpack.c.h.b16 %v4399
          %v4700 = vunpack.c.l.b16 %v4400
          %v4701 = vunpack.c.h.b16 %v4400
          %v4702 = vunpack.c.l.b16 %v4401
          %v4703 = vunpack.c.h.b16 %v4401
          %v4704 = vunpack.c.l.b16 %v4402
          %v4705 = vunpack.c.h.b16 %v4402
          %v4706 = vunpack.c.l.b16 %v4403
          %v4707 = vunpack.c.h.b16 %v4403
          %v4708 = vunpack.c.l.b16 %v4404
          %v4709 = vunpack.c.h.b16 %v4404
          %v4710 = vunpack.c.l.b16 %v4405
          %v4711 = vunpack.c.h.b16 %v4405
          %v4712 = vunpack.c.l.b16 %v4406
          %v4713 = vunpack.c.h.b16 %v4406
          %v4714 = vunpack.c.l.b16 %v4407
          %v4715 = vunpack.c.h.b16 %v4407
          %v4716 = vunpack.c.l.b16 %v4408
          %v4717 = vunpack.c.h.b16 %v4408
          %v4718 = vunpack.c.l.b16 %v4409
          %v4719 = vunpack.c.h.b16 %v4409
          %v4720 = vunpack.c.l.b16 %v4410
          %v4721 = vunpack.c.h.b16 %v4410
          %v4722 = vunpack.c.l.b16 %v4411
          %v4723 = vunpack.c.h.b16 %v4411
          %v4724 = vunpack.c.l.b16 %v4412
          %v4725 = vunpack.c.h.b16 %v4412
          %v4726 = vunpack.c.l.b16 %v4413
          %v4727 = vunpack.c.h.b16 %v4413
          %v4728 = vunpack.c.l.b16 %v4414
          %v4729 = vunpack.c.h.b16 %v4414
          %v4730 = vunpack.c.l.b16 %v4415
          %v4731 = vunpack.c.h.b16 %v4415
          %v4732 = vunpack.c.l.b16 %v4416
          %v4733 = vunpack.c.h.b16 %v4416
          %v4734 = vunpack.c.l.b16 %v4417
          %v4735 = vunpack.c.h.b16 %v4417
          %v4736 = vunpack.c.l.b16 %v4418
          %v4737 = vunpack.c.h.b16 %v4418
          %v4738 = vunpack.c.l.b16 %v4419
          %v4739 = vunpack.c.h.b16 %v4419
          %v4740 = vunpack.c.l.b16 %v4420
          %v4741 = vunpack.c.h.b16 %v4420
          %v4742 = vunpack.c.l.b16 %v4421
          %v4743 = vunpack.c.h.b16 %v4421
          %v4744 = vunpack.c.l.b16 %v4422
          %v4745 = vunpack.c.h.b16 %v4422
          %v4746 = vunpack.c.l.b16 %v4423
          %v4747 = vunpack.c.h.b16 %v4423
          %v4748 = vunpack.c.l.b16 %v4424
          %v4749 = vunpack.c.h.b16 %v4424
          %v4750 = vunpack.c.l.b16 %v4425
          %v4751 = vunpack.c.h.b16 %v4425
          %v4752 = vunpack.c.l.b16 %v4426
          %v4753 = vunpack.c.h.b16 %v4426
          %v4754 = vunpack.c.l.b16 %v4427
          %v4755 = vunpack.c.h.b16 %v4427
          %v4756 = vunpack.c.l.b16 %v4428
          %v4757 = vunpack.c.h.b16 %v4428
          %v4758 = vunpack.c.l.b16 %v4429
          %v4759 = vunpack.c.h.b16 %v4429
          %v4760 = vunpack.c.l.b16 %v4430
          %v4761 = vunpack.c.h.b16 %v4430
          %v4762 = vunpack.c.l.b16 %v4431
          %v4763 = vunpack.c.h.b16 %v4431
          %v4764 = vunpack.c.l.b16 %v4432
          %v4765 = vunpack.c.h.b16 %v4432
          %v4766 = vunpack.c.l.b16 %v4433
          %v4767 = vunpack.c.h.b16 %v4433
          %v4768 = vunpack.c.l.b16 %v4434
          %v4769 = vunpack.c.h.b16 %v4434
          %v4770 = vunpack.c.l.b16 %v4435
          %v4771 = vunpack.c.h.b16 %v4435
          %v4772 = vunpack.c.l.b16 %v4436
          %v4773 = vunpack.c.h.b16 %v4436
          %v4774 = vunpack.c.l.b16 %v4437
          %v4775 = vunpack.c.h.b16 %v4437
          %v4776 = vunpack.c.l.b16 %v4438
          %v4777 = vunpack.c.h.b16 %v4438
          %v4778 = vunpack.c.l.b16 %v4439
          %v4779 = vunpack.c.h.b16 %v4439
          %v4780 = vunpack.c.l.b16 %v4440
          %v4781 = vunpack.c.h.b16 %v4440
          %v4782 = vunpack.c.l.b16 %v4441
          %v4783 = vunpack.c.h.b16 %v4441
          %v4784 = vunpack.c.l.b16 %v4442
          %v4785 = vunpack.c.h.b16 %v4442
          %v4786 = vunpack.c.l.b16 %v4443
          %v4787 = vunpack.c.h.b16 %v4443
          %v4788 = vunpack.c.l.b16 %v4444
          %v4789 = vunpack.c.h.b16 %v4444
          %v4790 = vunpack.c.l.b16 %v4445
          %v4791 = vunpack.c.h.b16 %v4445
          %v4792 = vunpack.c.l.b16 %v4446
          %v4793 = vunpack.c.h.b16 %v4446
          %v4794 = vunpack.c.l.b16 %v4447
          %v4795 = vunpack.c.h.b16 %v4447
          %v4796 = vunpack.c.l.b16 %v4448
          %v4797 = vunpack.c.h.b16 %v4448
          %v4798 = vunpack.c.l.b16 %v4449
          %v4799 = vunpack.c.h.b16 %v4449
          %v4800 = vunpack.c.l.b16 %v4450
          %v4801 = vunpack.c.h.b16 %v4450
          %v4802 = vunpack.c.l.b16 %v4451
          %v4803 = vunpack.c.h.b16 %v4451
          %v4804 = vunpack.c.l.b16 %v4452
          %v4805 = vunpack.c.h.b16 %v4452
          %v4806 = vunpack.c.l.b16 %v4453
          %v4807 = vunpack.c.h.b16 %v4453
          %v4808 = vunpack.c.l.b16 %v4454
          %v4809 = vunpack.c.h.b16 %v4454
          %v4810 = vunpack.c.l.b16 %v4455
          %v4811 = vunpack.c.h.b16 %v4455
          %v4812 = vunpack.c.l.b16 %v4456
          %v4813 = vunpack.c.h.b16 %v4456
          %v4814 = vunpack.c.l.b16 %v4457
          %v4815 = vunpack.c.h.b16 %v4457
          %v4816 = vunpack.c.l.b16 %v4458
          %v4817 = vunpack.c.h.b16 %v4458
          %v4818 = vunpack.c.l.b16 %v4459
          %v4819 = vunpack.c.h.b16 %v4459
          %v4820 = vunpack.c.l.b16 %v4460
          %v4821 = vunpack.c.h.b16 %v4460
          %v4822 = vunpack.c.l.b16 %v4461
          %v4823 = vunpack.c.h.b16 %v4461
          %v4824 = vunpack.c.l.b16 %v4462
          %v4825 = vunpack.c.h.b16 %v4462
          %v4826 = vunpack.c.l.b16 %v4463
          %v4827 = vunpack.c.h.b16 %v4463
          %v4828 = vunpack.c.l.b16 %v4464
          %v4829 = vunpack.c.h.b16 %v4464
          %v4830 = vunpack.c.l.b16 %v4465
          %v4831 = vunpack.c.h.b16 %v4465
          %v4832 = vunpack.c.l.b16 %v4466
          %v4833 = vunpack.c.h.b16 %v4466
          %v4834 = vunpack.c.l.b16 %v4467
          %v4835 = vunpack.c.h.b16 %v4467
          %v4836 = vunpack.c.l.b16 %v4468
          %v4837 = vunpack.c.h.b16 %v4468
          %v4838 = vunpack.c.l.b16 %v4469
          %v4839 = vunpack.c.h.b16 %v4469
          %v4840 = vunpack.c.l.b16 %v4470
          %v4841 = vunpack.c.h.b16 %v4470
          %v4842 = vunpack.c.l.b16 %v4471
          %v4843 = vunpack.c.h.b16 %v4471
          %v4844 = vunpack.c.l.b16 %v4472
          %v4845 = vunpack.c.h.b16 %v4472
          %v4846 = vunpack.c.l.b16 %v4473
          %v4847 = vunpack.c.h.b16 %v4473
          %v4848 = vunpack.c.l.b16 %v4474
          %v4849 = vunpack.c.h.b16 %v4474
          %v4850 = vunpack.c.l.b16 %v4475
          %v4851 = vunpack.c.h.b16 %v4475
          %v4852 = vunpack.c.l.b16 %v4476
          %v4853 = vunpack.c.h.b16 %v4476
          %v4854 = vunpack.c.l.b16 %v4477
          %v4855 = vunpack.c.h.b16 %v4477
          %v4856 = vunpack.c.l.b16 %v4478
          %v4857 = vunpack.c.h.b16 %v4478
          %v4858 = vunpack.c.l.b16 %v4479
          %v4859 = vunpack.c.h.b16 %v4479
          %v4860 = vunpack.c.l.b16 %v4480
          %v4861 = vunpack.c.h.b16 %v4480
          %v4862 = vunpack.c.l.b16 %v4481
          %v4863 = vunpack.c.h.b16 %v4481
          %v4864 = vunpack.c.l.b16 %v4482
          %v4865 = vunpack.c.h.b16 %v4482
          %v4866 = vunpack.c.l.b16 %v4483
          %v4867 = vunpack.c.h.b16 %v4483
          %v4868 = vunpack.c.l.b16 %v4484
          %v4869 = vunpack.c.h.b16 %v4484
          %v4870 = vunpack.c.l.b16 %v4485
          %v4871 = vunpack.c.h.b16 %v4485
          %v4872 = vunpack.c.l.b16 %v4486
          %v4873 = vunpack.c.h.b16 %v4486
          %v4874 = vunpack.c.l.b16 %v4487
          %v4875 = vunpack.c.h.b16 %v4487
          %v4876 = vunpack.c.l.b16 %v4488
          %v4877 = vunpack.c.h.b16 %v4488
          %v4878 = vunpack.c.l.b16 %v4489
          %v4879 = vunpack.c.h.b16 %v4489
          %v4880 = vunpack.c.l.b16 %v4490
          %v4881 = vunpack.c.h.b16 %v4490
          %v4882 = vunpack.c.l.b16 %v4491
          %v4883 = vunpack.c.h.b16 %v4491
          %v4884 = vunpack.c.l.b16 %v4492
          %v4885 = vunpack.c.h.b16 %v4492
          %v4886 = vunpack.c.l.b16 %v4493
          %v4887 = vunpack.c.h.b16 %v4493
          %v4888 = vunpack.c.l.b16 %v4494
          %v4889 = vunpack.c.h.b16 %v4494
          %v4890 = vunpack.c.l.b16 %v4495
          %v4891 = vunpack.c.h.b16 %v4495
          %v4892 = vpack.c.b16 %v4638, %v4636
          %v4893 = vpack.c.b16 %v4639, %v4637
          %v4894 = vpack.c.b16 %v4642, %v4640
          %v4895 = vpack.c.b16 %v4643, %v4641
          %v4896 = vpack.c.b16 %v4646, %v4644
          %v4897 = vpack.c.b16 %v4647, %v4645
          %v4898 = vpack.c.b16 %v4650, %v4648
          %v4899 = vpack.c.b16 %v4651, %v4649
          %v4900 = vpack.c.b16 %v4654, %v4652
          %v4901 = vpack.c.b16 %v4655, %v4653
          %v4902 = vpack.c.b16 %v4658, %v4656
          %v4903 = vpack.c.b16 %v4659, %v4657
          %v4904 = vpack.c.b16 %v4662, %v4660
          %v4905 = vpack.c.b16 %v4663, %v4661
          %v4906 = vpack.c.b16 %v4666, %v4664
          %v4907 = vpack.c.b16 %v4667, %v4665
          %v4908 = vpack.c.b16 %v4670, %v4668
          %v4909 = vpack.c.b16 %v4671, %v4669
          %v4910 = vpack.c.b16 %v4674, %v4672
          %v4911 = vpack.c.b16 %v4675, %v4673
          %v4912 = vpack.c.b16 %v4678, %v4676
          %v4913 = vpack.c.b16 %v4679, %v4677
          %v4914 = vpack.c.b16 %v4682, %v4680
          %v4915 = vpack.c.b16 %v4683, %v4681
          %v4916 = vpack.c.b16 %v4686, %v4684
          %v4917 = vpack.c.b16 %v4687, %v4685
          %v4918 = vpack.c.b16 %v4690, %v4688
          %v4919 = vpack.c.b16 %v4691, %v4689
          %v4920 = vpack.c.b16 %v4694, %v4692
          %v4921 = vpack.c.b16 %v4695, %v4693
          %v4922 = vpack.c.b16 %v4698, %v4696
          %v4923 = vpack.c.b16 %v4699, %v4697
          %v4924 = vpack.c.b16 %v4702, %v4700
          %v4925 = vpack.c.b16 %v4703, %v4701
          %v4926 = vpack.c.b16 %v4706, %v4704
          %v4927 = vpack.c.b16 %v4707, %v4705
          %v4928 = vpack.c.b16 %v4710, %v4708
          %v4929 = vpack.c.b16 %v4711, %v4709
          %v4930 = vpack.c.b16 %v4714, %v4712
          %v4931 = vpack.c.b16 %v4715, %v4713
          %v4932 = vpack.c.b16 %v4718, %v4716
          %v4933 = vpack.c.b16 %v4719, %v4717
          %v4934 = vpack.c.b16 %v4722, %v4720
          %v4935 = vpack.c.b16 %v4723, %v4721
          %v4936 = vpack.c.b16 %v4726, %v4724
          %v4937 = vpack.c.b16 %v4727, %v4725
          %v4938 = vpack.c.b16 %v4730, %v4728
          %v4939 = vpack.c.b16 %v4731, %v4729
          %v4940 = vpack.c.b16 %v4734, %v4732
          %v4941 = vpack.c.b16 %v4735, %v4733
          %v4942 = vpack.c.b16 %v4738, %v4736
          %v4943 = vpack.c.b16 %v4739, %v4737
          %v4944 = vpack.c.b16 %v4742, %v4740
          %v4945 = vpack.c.b16 %v4743, %v4741
          %v4946 = vpack.c.b16 %v4746, %v4744
          %v4947 = vpack.c.b16 %v4747, %v4745
          %v4948 = vpack.c.b16 %v4750, %v4748
          %v4949 = vpack.c.b16 %v4751, %v4749
          %v4950 = vpack.c.b16 %v4754, %v4752
          %v4951 = vpack.c.b16 %v4755, %v4753
          %v4952 = vpack.c.b16 %v4758, %v4756
          %v4953 = vpack.c.b16 %v4759, %v4757
          %v4954 = vpack.c.b16 %v4762, %v4760
          %v4955 = vpack.c.b16 %v4763, %v4761
          %v4956 = vpack.c.b16 %v4766, %v4764
          %v4957 = vpack.c.b16 %v4767, %v4765
          %v4958 = vpack.c.b16 %v4770, %v4768
          %v4959 = vpack.c.b16 %v4771, %v4769
          %v4960 = vpack.c.b16 %v4774, %v4772
          %v4961 = vpack.c.b16 %v4775, %v4773
          %v4962 = vpack.c.b16 %v4778, %v4776
          %v4963 = vpack.c.b16 %v4779, %v4777
          %v4964 = vpack.c.b16 %v4782, %v4780
          %v4965 = vpack.c.b16 %v4783, %v4781
          %v4966 = vpack.c.b16 %v4786, %v4784
          %v4967 = vpack.c.b16 %v4787, %v4785
          %v4968 = vpack.c.b16 %v4790, %v4788
          %v4969 = vpack.c.b16 %v4791, %v4789
          %v4970 = vpack.c.b16 %v4794, %v4792
          %v4971 = vpack.c.b16 %v4795, %v4793
          %v4972 = vpack.c.b16 %v4798, %v4796
          %v4973 = vpack.c.b16 %v4799, %v4797
          %v4974 = vpack.c.b16 %v4802, %v4800
          %v4975 = vpack.c.b16 %v4803, %v4801
          %v4976 = vpack.c.b16 %v4806, %v4804
          %v4977 = vpack.c.b16 %v4807, %v4805
          %v4978 = vpack.c.b16 %v4810, %v4808
          %v4979 = vpack.c.b16 %v4811, %v4809
          %v4980 = vpack.c.b16 %v4814, %v4812
          %v4981 = vpack.c.b16 %v4815, %v4813
          %v4982 = vpack.c.b16 %v4818, %v4816
          %v4983 = vpack.c.b16 %v4819, %v4817
          %v4984 = vpack.c.b16 %v4822, %v4820
          %v4985 = vpack.c.b16 %v4823, %v4821
          %v4986 = vpack.c.b16 %v4826, %v4824
          %v4987 = vpack.c.b16 %v4827, %v4825
          %v4988 = vpack.c.b16 %v4830, %v4828
          %v4989 = vpack.c.b16 %v4831, %v4829
          %v4990 = vpack.c.b16 %v4834, %v4832
          %v4991 = vpack.c.b16 %v4835, %v4833
          %v4992 = vpack.c.b16 %v4838, %v4836
          %v4993 = vpack.c.b16 %v4839, %v4837
          %v4994 = vpack.c.b16 %v4842, %v4840
          %v4995 = vpack.c.b16 %v4843, %v4841
          %v4996 = vpack.c.b16 %v4846, %v4844
          %v4997 = vpack.c.b16 %v4847, %v4845
          %v4998 = vpack.c.b16 %v4850, %v4848
          %v4999 = vpack.c.b16 %v4851, %v4849
          %v5000 = vpack.c.b16 %v4854, %v4852
          %v5001 = vpack.c.b16 %v4855, %v4853
          %v5002 = vpack.c.b16 %v4858, %v4856
          %v5003 = vpack.c.b16 %v4859, %v4857
          %v5004 = vpack.c.b16 %v4862, %v4860
          %v5005 = vpack.c.b16 %v4863, %v4861
          %v5006 = vpack.c.b16 %v4866, %v4864
          %v5007 = vpack.c.b16 %v4867, %v4865
          %v5008 = vpack.c.b16 %v4870, %v4868
          %v5009 = vpack.c.b16 %v4871, %v4869
          %v5010 = vpack.c.b16 %v4874, %v4872
          %v5011 = vpack.c.b16 %v4875, %v4873
          %v5012 = vpack.c.b16 %v4878, %v4876
          %v5013 = vpack.c.b16 %v4879, %v4877
          %v5014 = vpack.c.b16 %v4882, %v4880
          %v5015 = vpack.c.b16 %v4883, %v4881
          %v5016 = vpack.c.b16 %v4886, %v4884
          %v5017 = vpack.c.b16 %v4887, %v4885
          %v5018 = vpack.c.b16 %v4890, %v4888
          %v5019 = vpack.c.b16 %v4891, %v4889
          %5148 = vmatprep.subr.bf16.mxu0 %v4893
          %5149 = vmatpush1.bf16.msra.mxu0 %v4892
          %5150 = vmatprep.subr.bf16.mxu0 %v4895
          %5151 = vmatpush1.bf16.msra.mxu0 %v4894
          %5152 = vmatprep.subr.bf16.mxu0 %v4897
          %5153 = vmatpush1.bf16.msra.mxu0 %v4896
          %5154 = vmatprep.subr.bf16.mxu0 %v4899
          %5155 = vmatpush1.bf16.msra.mxu0 %v4898
          %5156 = vmatprep.subr.bf16.mxu0 %v4901
          %5157 = vmatpush1.bf16.msra.mxu0 %v4900
          %5158 = vmatprep.subr.bf16.mxu0 %v4903
          %5159 = vmatpush1.bf16.msra.mxu0 %v4902
          %5160 = vmatprep.subr.bf16.mxu0 %v4905
          %5161 = vmatpush1.bf16.msra.mxu0 %v4904
          %5162 = vmatprep.subr.bf16.mxu0 %v4907
          %5163 = vmatpush1.bf16.msra.mxu0 %v4906
          %5164 = vmatprep.subr.bf16.mxu0 %v4909
          %5165 = vmatpush1.bf16.msra.mxu0 %v4908
          %5166 = vmatprep.subr.bf16.mxu0 %v4911
          %5167 = vmatpush1.bf16.msra.mxu0 %v4910
          %5168 = vmatprep.subr.bf16.mxu0 %v4913
          %5169 = vmatpush1.bf16.msra.mxu0 %v4912
          %5170 = vmatprep.subr.bf16.mxu0 %v4915
          %5171 = vmatpush1.bf16.msra.mxu0 %v4914
          %5172 = vmatprep.subr.bf16.mxu0 %v4917
          %5173 = vmatpush1.bf16.msra.mxu0 %v4916
          %5174 = vmatprep.subr.bf16.mxu0 %v4919
          %5175 = vmatpush1.bf16.msra.mxu0 %v4918
          %5176 = vmatprep.subr.bf16.mxu0 %v4921
          %5177 = vmatpush1.bf16.msra.mxu0 %v4920
          %5178 = vmatprep.subr.bf16.mxu0 %v4923
          %5179 = vmatpush1.bf16.msra.mxu0 %v4922
          %5180 = vmatprep.mubr.bf16.mxu0 %v4361
          %5181 = vmatmul.mubr.bf16.gmra.mrb[0].mxu0 %v4360
          %v5182 = vpop.f32.mrb[0].mxu0
          %v5183 = vadd.f32 %v4501, %v5182
          %v5184 = vpop.f32.mrb[0].mxu0
          %v5185 = vadd.f32 %v4505, %v5184
          %v5186 = vpop.f32.mrb[0].mxu0
          %v5187 = vpop.f32.mrb[0].mxu0
          %5188 = vdwg.mxu0
          %5189 = vmatprep.subr.bf16.mxu0 %v4925
          %5190 = vmatpush1.bf16.msra.mxu0 %v4924
          %5191 = vmatprep.subr.bf16.mxu0 %v4927
          %5192 = vmatpush1.bf16.msra.mxu0 %v4926
          %5193 = vmatprep.subr.bf16.mxu0 %v4929
          %5194 = vmatpush1.bf16.msra.mxu0 %v4928
          %5195 = vmatprep.subr.bf16.mxu0 %v4931
          %5196 = vmatpush1.bf16.msra.mxu0 %v4930
          %5197 = vmatprep.subr.bf16.mxu0 %v4933
          %5198 = vmatpush1.bf16.msra.mxu0 %v4932
          %5199 = vmatprep.subr.bf16.mxu0 %v4935
          %5200 = vmatpush1.bf16.msra.mxu0 %v4934
          %5201 = vmatprep.subr.bf16.mxu0 %v4937
          %5202 = vmatpush1.bf16.msra.mxu0 %v4936
          %5203 = vmatprep.subr.bf16.mxu0 %v4939
          %5204 = vmatpush1.bf16.msra.mxu0 %v4938
          %5205 = vmatprep.subr.bf16.mxu0 %v4941
          %5206 = vmatpush1.bf16.msra.mxu0 %v4940
          %5207 = vmatprep.subr.bf16.mxu0 %v4943
          %5208 = vmatpush1.bf16.msra.mxu0 %v4942
          %5209 = vmatprep.subr.bf16.mxu0 %v4945
          %5210 = vmatpush1.bf16.msra.mxu0 %v4944
          %5211 = vmatprep.subr.bf16.mxu0 %v4947
          %5212 = vmatpush1.bf16.msra.mxu0 %v4946
          %5213 = vmatprep.subr.bf16.mxu0 %v4949
          %5214 = vmatpush1.bf16.msra.mxu0 %v4948
          %5215 = vmatprep.subr.bf16.mxu0 %v4951
          %5216 = vmatpush1.bf16.msra.mxu0 %v4950
          %5217 = vmatprep.subr.bf16.mxu0 %v4953
          %5218 = vmatpush1.bf16.msra.mxu0 %v4952
          %5219 = vmatprep.subr.bf16.mxu0 %v4955
          %5220 = vmatpush1.bf16.msra.mxu0 %v4954
          %5221 = vmatprep.mubr.bf16.mxu0 %v4363
          %5222 = vmatmul.mubr.bf16.gmra.mrb[0].mxu0 %v4362
          %v5223 = vpop.f32.mrb[0].mxu0
          %v5224 = vadd.f32 %v5183, %v5223
          %v5225 = vpop.f32.mrb[0].mxu0
          %v5226 = vadd.f32 %v5185, %v5225
          %v5227 = vpop.f32.mrb[0].mxu0
          %v5228 = vpop.f32.mrb[0].mxu0
          %5229 = vdwg.mxu0
          %5230 = vmatprep.subr.bf16.mxu0 %v4957
          %5231 = vmatpush1.bf16.msra.mxu0 %v4956
          %5232 = vmatprep.subr.bf16.mxu0 %v4959
          %5233 = vmatpush1.bf16.msra.mxu0 %v4958
          %5234 = vmatprep.subr.bf16.mxu0 %v4961
          %5235 = vmatpush1.bf16.msra.mxu0 %v4960
          %5236 = vmatprep.subr.bf16.mxu0 %v4963
          %5237 = vmatpush1.bf16.msra.mxu0 %v4962
          %5238 = vmatprep.subr.bf16.mxu0 %v4965
          %5239 = vmatpush1.bf16.msra.mxu0 %v4964
          %5240 = vmatprep.subr.bf16.mxu0 %v4967
          %5241 = vmatpush1.bf16.msra.mxu0 %v4966
          %5242 = vmatprep.subr.bf16.mxu0 %v4969
          %5243 = vmatpush1.bf16.msra.mxu0 %v4968
          %5244 = vmatprep.subr.bf16.mxu0 %v4971
          %5245 = vmatpush1.bf16.msra.mxu0 %v4970
          %5246 = vmatprep.subr.bf16.mxu0 %v4973
          %5247 = vmatpush1.bf16.msra.mxu0 %v4972
          %5248 = vmatprep.subr.bf16.mxu0 %v4975
          %5249 = vmatpush1.bf16.msra.mxu0 %v4974
          %5250 = vmatprep.subr.bf16.mxu0 %v4977
          %5251 = vmatpush1.bf16.msra.mxu0 %v4976
          %5252 = vmatprep.subr.bf16.mxu0 %v4979
          %5253 = vmatpush1.bf16.msra.mxu0 %v4978
          %5254 = vmatprep.subr.bf16.mxu0 %v4981
          %5255 = vmatpush1.bf16.msra.mxu0 %v4980
          %5256 = vmatprep.subr.bf16.mxu0 %v4983
          %5257 = vmatpush1.bf16.msra.mxu0 %v4982
          %5258 = vmatprep.subr.bf16.mxu0 %v4985
          %5259 = vmatpush1.bf16.msra.mxu0 %v4984
          %5260 = vmatprep.subr.bf16.mxu0 %v4987
          %5261 = vmatpush1.bf16.msra.mxu0 %v4986
          %5262 = vmatprep.mubr.bf16.mxu0 %v4365
          %5263 = vmatmul.mubr.bf16.gmra.mrb[0].mxu0 %v4364
          %v5264 = vpop.f32.mrb[0].mxu0
          %v5265 = vadd.f32 %v5224, %v5264
          %v5266 = vpop.f32.mrb[0].mxu0
          %v5267 = vadd.f32 %v5226, %v5266
          %v5268 = vpop.f32.mrb[0].mxu0
          %v5269 = vpop.f32.mrb[0].mxu0
          %5270 = vdwg.mxu0
          %5271 = vmatprep.subr.bf16.mxu0 %v4989
          %5272 = vmatpush1.bf16.msra.mxu0 %v4988
          %5273 = vmatprep.subr.bf16.mxu0 %v4991
          %5274 = vmatpush1.bf16.msra.mxu0 %v4990
          %5275 = vmatprep.subr.bf16.mxu0 %v4993
          %5276 = vmatpush1.bf16.msra.mxu0 %v4992
          %5277 = vmatprep.subr.bf16.mxu0 %v4995
          %5278 = vmatpush1.bf16.msra.mxu0 %v4994
          %5279 = vmatprep.subr.bf16.mxu0 %v4997
          %5280 = vmatpush1.bf16.msra.mxu0 %v4996
          %5281 = vmatprep.subr.bf16.mxu0 %v4999
          %5282 = vmatpush1.bf16.msra.mxu0 %v4998
          %5283 = vmatprep.subr.bf16.mxu0 %v5001
          %5284 = vmatpush1.bf16.msra.mxu0 %v5000
          %5285 = vmatprep.subr.bf16.mxu0 %v5003
          %5286 = vmatpush1.bf16.msra.mxu0 %v5002
          %5287 = vmatprep.subr.bf16.mxu0 %v5005
          %5288 = vmatpush1.bf16.msra.mxu0 %v5004
          %5289 = vmatprep.subr.bf16.mxu0 %v5007
          %5290 = vmatpush1.bf16.msra.mxu0 %v5006
          %5291 = vmatprep.subr.bf16.mxu0 %v5009
          %5292 = vmatpush1.bf16.msra.mxu0 %v5008
          %5293 = vmatprep.subr.bf16.mxu0 %v5011
          %5294 = vmatpush1.bf16.msra.mxu0 %v5010
          %5295 = vmatprep.subr.bf16.mxu0 %v5013
          %5296 = vmatpush1.bf16.msra.mxu0 %v5012
          %5297 = vmatprep.subr.bf16.mxu0 %v5015
          %5298 = vmatpush1.bf16.msra.mxu0 %v5014
          %5299 = vmatprep.subr.bf16.mxu0 %v5017
          %5300 = vmatpush1.bf16.msra.mxu0 %v5016
          %5301 = vmatprep.subr.bf16.mxu0 %v5019
          %5302 = vmatpush1.bf16.msra.mxu0 %v5018
          %5303 = vmatprep.mubr.bf16.mxu0 %v4367
          %5304 = vmatmul.mubr.bf16.gmra.mrb[0].mxu0 %v4366
          %v5305 = vpop.f32.mrb[0].mxu0
          %v5306 = vadd.f32 %v5265, %v5305
          %v5307 = vpop.f32.mrb[0].mxu0
          %v5308 = vadd.f32 %v5267, %v5307
          %v5309 = vpop.f32.mrb[0].mxu0
          %v5310 = vpop.f32.mrb[0].mxu0
          %5311 = vdwg.mxu0
          %v5312 = vmax.f32 %v5306, 0.0
          %v5313 = vmax.f32 %v5308, 0.0
          %v5314 = vpack.c.bf16 %v5312, %v5312
          %v5315 = vpack.c.bf16 %v5313, %v5313
          %v5316 = vld [vmem:[#allocation21] sm:$0xf]
          %v5317 = vld [vmem:[#allocation21 + $0x4] sm:$0xf]
          %v5318 = vld [vmem:[#allocation21 + $0x8] sm:$0xf]
          %v5319 = vld [vmem:[#allocation21 + $0xc] sm:$0xf]
          %v5320 = vld [vmem:[#allocation21 + $0x10] sm:$0xf]
          %v5321 = vld [vmem:[#allocation21 + $0x14] sm:$0xf]
          %v5322 = vld [vmem:[#allocation21 + $0x18] sm:$0xf]
          %v5323 = vld [vmem:[#allocation21 + $0x1c] sm:$0xf]
          %v5324 = vld [vmem:[#allocation21 + $0x20] sm:$0xf]
          %v5325 = vld [vmem:[#allocation21 + $0x24] sm:$0xf]
          %v5326 = vld [vmem:[#allocation21 + $0x28] sm:$0xf]
          %v5327 = vld [vmem:[#allocation21 + $0x2c] sm:$0xf]
          %v5328 = vld [vmem:[#allocation21 + $0x30] sm:$0xf]
          %v5329 = vld [vmem:[#allocation21 + $0x34] sm:$0xf]
          %v5330 = vld [vmem:[#allocation21 + $0x38] sm:$0xf]
          %v5331 = vld [vmem:[#allocation21 + $0x3c] sm:$0xf]
          %v5332 = vld [vmem:[#allocation21 + $0x40] sm:$0xf]
          %v5333 = vld [vmem:[#allocation21 + $0x44] sm:$0xf]
          %v5334 = vld [vmem:[#allocation21 + $0x48] sm:$0xf]
          %v5335 = vld [vmem:[#allocation21 + $0x4c] sm:$0xf]
          %v5336 = vld [vmem:[#allocation21 + $0x50] sm:$0xf]
          %v5337 = vld [vmem:[#allocation21 + $0x54] sm:$0xf]
          %v5338 = vld [vmem:[#allocation21 + $0x58] sm:$0xf]
          %v5339 = vld [vmem:[#allocation21 + $0x5c] sm:$0xf]
          %v5340 = vld [vmem:[#allocation21 + $0x60] sm:$0xf]
          %v5341 = vld [vmem:[#allocation21 + $0x64] sm:$0xf]
          %v5342 = vld [vmem:[#allocation21 + $0x68] sm:$0xf]
          %v5343 = vld [vmem:[#allocation21 + $0x6c] sm:$0xf]
          %v5344 = vld [vmem:[#allocation21 + $0x70] sm:$0xf]
          %v5345 = vld [vmem:[#allocation21 + $0x74] sm:$0xf]
          %v5346 = vld [vmem:[#allocation21 + $0x78] sm:$0xf]
          %v5347 = vld [vmem:[#allocation21 + $0x7c] sm:$0xf]
          %v5348 = vld [vmem:[#allocation23] sm:$0x1]
          %v5350 = vlaneseq
          %v5351 = vshrl.u32 %v5350, 7
          %v5352 = vsub.s32 0, %v5351
          %v5353 = vrot.slane %v5348, %v5352
          %v5387 = vunpack.c.l.b16 %v5316
          %v5388 = vunpack.c.l.b16 %v5317
          %v5389 = vunpack.c.l.b16 %v5318
          %v5390 = vunpack.c.l.b16 %v5319
          %v5391 = vunpack.c.l.b16 %v5320
          %v5392 = vunpack.c.l.b16 %v5321
          %v5393 = vunpack.c.l.b16 %v5322
          %v5394 = vunpack.c.l.b16 %v5323
          %v5395 = vunpack.c.l.b16 %v5324
          %v5396 = vunpack.c.l.b16 %v5325
          %v5397 = vunpack.c.l.b16 %v5326
          %v5398 = vunpack.c.l.b16 %v5327
          %v5399 = vunpack.c.l.b16 %v5328
          %v5400 = vunpack.c.l.b16 %v5329
          %v5401 = vunpack.c.l.b16 %v5330
          %v5402 = vunpack.c.l.b16 %v5331
          %v5403 = vunpack.c.l.b16 %v5332
          %v5404 = vunpack.c.l.b16 %v5333
          %v5405 = vunpack.c.l.b16 %v5334
          %v5406 = vunpack.c.l.b16 %v5335
          %v5407 = vunpack.c.l.b16 %v5336
          %v5408 = vunpack.c.l.b16 %v5337
          %v5409 = vunpack.c.l.b16 %v5338
          %v5410 = vunpack.c.l.b16 %v5339
          %v5411 = vunpack.c.l.b16 %v5340
          %v5412 = vunpack.c.l.b16 %v5341
          %v5413 = vunpack.c.l.b16 %v5342
          %v5414 = vunpack.c.l.b16 %v5343
          %v5415 = vunpack.c.l.b16 %v5344
          %v5416 = vunpack.c.l.b16 %v5345
          %v5417 = vunpack.c.l.b16 %v5346
          %v5418 = vunpack.c.l.b16 %v5347
          %v5419 = vpack.c.b16 %v5388, %v5387
          %v5420 = vpack.c.b16 %v5390, %v5389
          %v5421 = vpack.c.b16 %v5392, %v5391
          %v5422 = vpack.c.b16 %v5394, %v5393
          %v5423 = vpack.c.b16 %v5396, %v5395
          %v5424 = vpack.c.b16 %v5398, %v5397
          %v5425 = vpack.c.b16 %v5400, %v5399
          %v5426 = vpack.c.b16 %v5402, %v5401
          %v5427 = vpack.c.b16 %v5404, %v5403
          %v5428 = vpack.c.b16 %v5406, %v5405
          %v5429 = vpack.c.b16 %v5408, %v5407
          %v5430 = vpack.c.b16 %v5410, %v5409
          %v5431 = vpack.c.b16 %v5412, %v5411
          %v5432 = vpack.c.b16 %v5414, %v5413
          %v5433 = vpack.c.b16 %v5416, %v5415
          %v5434 = vpack.c.b16 %v5418, %v5417
          %5451 = vmatprep.subr.bf16.mxu0 0
          %5452 = vmatpush1.bf16.msra.mxu0 %v5419
          %5453 = vmatprep.subr.bf16.mxu0 0
          %5454 = vmatpush1.bf16.msra.mxu0 %v5420
          %5455 = vmatprep.subr.bf16.mxu0 0
          %5456 = vmatpush1.bf16.msra.mxu0 %v5421
          %5457 = vmatprep.subr.bf16.mxu0 0
          %5458 = vmatpush1.bf16.msra.mxu0 %v5422
          %5459 = vmatprep.subr.bf16.mxu0 0
          %5460 = vmatpush1.bf16.msra.mxu0 %v5423
          %5461 = vmatprep.subr.bf16.mxu0 0
          %5462 = vmatpush1.bf16.msra.mxu0 %v5424
          %5463 = vmatprep.subr.bf16.mxu0 0
          %5464 = vmatpush1.bf16.msra.mxu0 %v5425
          %5465 = vmatprep.subr.bf16.mxu0 0
          %5466 = vmatpush1.bf16.msra.mxu0 %v5426
          %5467 = vmatprep.subr.bf16.mxu0 0
          %5468 = vmatpush1.bf16.msra.mxu0 %v5427
          %5469 = vmatprep.subr.bf16.mxu0 0
          %5470 = vmatpush1.bf16.msra.mxu0 %v5428
          %5471 = vmatprep.subr.bf16.mxu0 0
          %5472 = vmatpush1.bf16.msra.mxu0 %v5429
          %5473 = vmatprep.subr.bf16.mxu0 0
          %5474 = vmatpush1.bf16.msra.mxu0 %v5430
          %5475 = vmatprep.subr.bf16.mxu0 0
          %5476 = vmatpush1.bf16.msra.mxu0 %v5431
          %5477 = vmatprep.subr.bf16.mxu0 0
          %5478 = vmatpush1.bf16.msra.mxu0 %v5432
          %5479 = vmatprep.subr.bf16.mxu0 0
          %5480 = vmatpush1.bf16.msra.mxu0 %v5433
          %5481 = vmatprep.subr.bf16.mxu0 0
          %5482 = vmatpush1.bf16.msra.mxu0 %v5434
          %5483 = vmatprep.mubr.bf16.mxu0 %v5315
          %5484 = vmatmul.mubr.bf16.gmra.mrb[0].mxu0 %v5314
          %v5485 = vpop.f32.mrb[0].mxu0
          %v5486 = vadd.f32 %v5353, %v5485
          %v5487 = vpop.f32.mrb[0].mxu0
          %v5488 = vpop.f32.mrb[0].mxu0
          %v5489 = vpop.f32.mrb[0].mxu0
          %5490 = vdwg.mxu0
          %5491 = vst [vmem:[#allocation24] sm:$0xff] %v5486
        $region132: #{tpu_custom_call.1} parent=71 // pred_fallthru
          _
        // Predicated region
        $region133: #{tpu_custom_call.1} parent=71 // pred_check
          %p5492 = pneg %p330
        $region134: #{tpu_custom_call.1} parent=71 // pred_check_branch
          %5494 = sbr.rel (%p5492) target = $region136
        $region135: #{tpu_custom_call.1} parent=71 // pred_region
          %s5496 = ssub.s32 128, 128
          %5497 = vsyncadd [#allocation5], %s5496
          %s5499 = sshll.u32 [#allocation24], 4
          %s5500 = int_to_ptr.vmem [resolvable:$true] %s5499
          %5502 = dma.vmem_to_hbm [thread:$0]  %s5500, 128, %s13, [#allocation5]
        $region136: #{tpu_custom_call.1} parent=71 // pred_fallthru
          _
        // Predicated region
        $region137: #{tpu_custom_call.1} parent=71 // pred_check
          %p5503 = pneg %p330
        $region138: #{tpu_custom_call.1} parent=71 // pred_check_branch
          %5505 = sbr.rel (%p5503) target = $region140
        $region139: #{tpu_custom_call.1} parent=71 // pred_region
          %5506 = dma.done [#allocation5], 128
        $region140: #{tpu_custom_call.1} parent=71 // pred_fallthru
          _
      $region72: #{tpu_custom_call.1} parent=5 // pred_fallthru
        _
      %p5507 = scmp.le.s32.totalorder 2, %s29
      // Predicated region
      $region141: #{tpu_custom_call.1} parent=5 // pred_check
        %p5508 = pneg %p5507
      $region142: #{tpu_custom_call.1} parent=5 // pred_check_branch
        %5510 = sbr.rel (%p5508) target = $region144
      $region143: #{tpu_custom_call.1} parent=5 // pred_region
        %s5511 = ssub.s32 %s29, 2
      $region144: #{tpu_custom_call.1} parent=5 // pred_fallthru
        _
    $region6: #{tpu_custom_call.1} parent=1 // loop_footer
      %s33 = sadd.s32 1, %s29
    $region7: #{tpu_custom_call.1} parent=1 // loop_footer_branch
      %28 = sbr.rel target = $region3
    $region8: #{tpu_custom_call.1} parent=1 // loop_exit
      _
    %5512 = vsyncpa [#allocation4], 1
    %s5513 = scalar_lea.sflag [#allocation4], 1
    %5514 = vsyncpa %s5513, 1
    %5515 = vsyncpa [#allocation7], 1
    %5516 = vsyncpa [#allocation10], 1
    %s5517 = scalar_lea.sflag [#allocation10], 1
    %5518 = vsyncpa %s5517, 1
    %5519 = vsyncpa [#allocation13], 1
    %5520 = vsyncpa [#allocation16], 1
    %5521 = vsyncpa [#allocation19], 1
    %5522 = vsyncpa [#allocation22], 1
    %5523 = vsyncpa [#allocation5], 1
    %s5524 = scalar_lea.sflag [#allocation5], 1
    %5525 = vsyncpa %s5524, 1

</llo_original>
